<compile_context>
chip_gen: v7x
topology: tpu7x:2x2x1
jax: 0.10.0
libtpu: 0.0.40
codegen_flags: <defaults>
</compile_context>

<pallas_src>
import functools

import jax
import jax.numpy as jnp
from jax import lax
from jax.experimental import pallas as pl
from jax.experimental.pallas import tpu as pltpu

_EPS = 1e-5

# Tile targets are kept small so the tiny unit-test shapes still exercise
# multi-step grids; for production Inception sizes raise these to 512-2048 rows
# (still far under v7x's 64 MiB VMEM for double-buffered bf16 blocks).
_M_TILE_TARGET = 256
_ROW_TILE_TARGET_ROWS = 128


# ------------------------------- tile pickers --------------------------------

def _pick_m_tile(M, target):
    """Largest multiple-of-8 tile <= target that divides M (else the full M)."""
    t = min(M, target)
    t -= t % 8
    while t >= 8:
        if M % t == 0:
            return t
        t -= 8
    return M


def _pick_row_tile(H, W, target_rows):
    """H-rows per grid step: largest divisor of H giving <= target_rows output rows."""
    th = max(1, min(H, max(1, target_rows // max(W, 1))))
    while th > 1 and H % th:
        th -= 1
    if th != H and (th * W) % 8 != 0:   # keep the output block sublane-aligned
        th = H
    return th


# ----------------------------- Pallas kernels -------------------------------

def _conv1x1_fused_kernel(x_ref, w_ref, b_ref, scale_ref, shift_ref,
                          o1_ref, o2_ref, o3_ref, o4_ref):
    # x: (TM, Cin) bf16   w: (Cin, Call) bf16   b/scale/shift: (1, Call) f32
    # One MXU matmul covers all four 1x1 branches (x read once, Call-wide result).
    y = jnp.dot(x_ref[...], w_ref[...], preferred_element_type=jnp.float32)
    y = jnp.maximum(y + b_ref[...], 0.0)            # conv bias + ReLU (module order)
    y = y * scale_ref[...] + shift_ref[...]         # BN (eval-mode affine), f32 epilogue
    c1 = o1_ref.shape[-1]
    c2 = o2_ref.shape[-1]
    c3 = o3_ref.shape[-1]
    o1_ref[...] = y[:, :c1].astype(o1_ref.dtype)                    # branch1 (final, f32)
    o2_ref[...] = y[:, c1:c1 + c2].astype(o2_ref.dtype)             # 3x1 reduce act (bf16)
    o3_ref[...] = y[:, c1 + c2:c1 + c2 + c3].astype(o3_ref.dtype)   # 5x1 reduce act (bf16)
    o4_ref[...] = y[:, c1 + c2 + c3:].astype(o4_ref.dtype)          # 7x1 reduce act (bf16)


def conv1x1_fused_relu_bn(x_nhwc, branch_params, tm_target=_M_TILE_TARGET):
    """Runs the four 1x1 BasicConv2d branches as a single fused, M-tiled matmul kernel.

    Returns (branch1_f32, reduce2_bf16, reduce3_bf16, reduce4_bf16), each NHWC.
    """
    N, H, W, Cin = x_nhwc.shape
    M = N * H * W
    couts = [int(p["w"].shape[2]) for p in branch_params]
    Call = sum(couts)

    w_all = jnp.concatenate([p["w"][0] for p in branch_params],
                            axis=1).astype(jnp.bfloat16)            # (Cin, Call)
    b_all = jnp.concatenate([p["b"] for p in branch_params]).reshape(1, Call)
    s_all = jnp.concatenate([p["scale"] for p in branch_params]).reshape(1, Call)
    t_all = jnp.concatenate([p["shift"] for p in branch_params]).reshape(1, Call)

    x2 = x_nhwc.reshape(M, Cin).astype(jnp.bfloat16)
    tm = _pick_m_tile(M, tm_target)

    out_dtypes = (jnp.float32, jnp.bfloat16, jnp.bfloat16, jnp.bfloat16)
    outs = pl.pallas_call(
        _conv1x1_fused_kernel,
        out_shape=tuple(jax.ShapeDtypeStruct((M, c), d)
                        for c, d in zip(couts, out_dtypes)),
        grid=(M // tm,),
        in_specs=[
            pl.BlockSpec((tm, Cin), lambda i: (i, 0)),
            pl.BlockSpec((Cin, Call), lambda i: (0, 0)),
            pl.BlockSpec((1, Call), lambda i: (0, 0)),
            pl.BlockSpec((1, Call), lambda i: (0, 0)),
            pl.BlockSpec((1, Call), lambda i: (0, 0)),
        ],
        out_specs=tuple(pl.BlockSpec((tm, c), lambda i: (i, 0)) for c in couts),
        compiler_params=pltpu.CompilerParams(dimension_semantics=("parallel",)),
    )(x2, w_all, b_all, s_all, t_all)
    return tuple(o.reshape(N, H, W, c) for o, c in zip(outs, couts))


def _convk1_relu_bn_kernel(x_ref, w_ref, b_ref, scale_ref, shift_ref, o_ref,
                           *, K, W, rows):
    # x_ref: (Hp*W, Cmid) bf16 -- per-batch element, zero-padded over H, flattened
    # w_ref: (K, Cmid, Cout) bf16     b/scale/shift: (1, Cout) f32
    # o_ref: (rows, Cout) f32 -- one H-row tile of one batch element
    Cout = o_ref.shape[-1]
    r = pl.program_id(1)
    base = pl.multiple_of(r * rows, W)          # first padded row of this tile
    acc = jnp.zeros((rows, Cout), jnp.float32)
    # TODO(synk): the K taps could be folded into a single (rows, K*Cmid) im2col
    # matmul for higher MXU row utilisation; kept as K accumulated bf16 dots to
    # avoid building the interleaved buffer in VMEM (Cmid is small here).
    for dh in range(K):                         # static unrolled taps of the (K,1) conv
        start = pl.multiple_of(base + dh * W, W)
        xs = x_ref[pl.ds(start, rows), :]       # pure row-offset slice, no reshape/copy
        acc = acc + jnp.dot(xs, w_ref[dh], preferred_element_type=jnp.float32)
    y = jnp.maximum(acc + b_ref[...], 0.0)              # conv bias + ReLU
    o_ref[...] = y * scale_ref[...] + shift_ref[...]    # BN affine, f32 epilogue


def convk1_relu_bn(x_nhwc, w, b, scale, shift, K,
                   target_rows=_ROW_TILE_TARGET_ROWS):
    """(K,1) conv (H padding (K-1)//2) + bias + ReLU + BN affine, bf16 in / f32 out."""
    N, H, W, Cmid = x_nhwc.shape
    Cout = int(w.shape[2])
    pad = (K - 1) // 2
    # TODO(synk): the H halo is materialized with jnp.pad (one extra pass over the
    # small bf16 reduce activation); an in-kernel pl.when halo would remove it.
    x_pad = jnp.pad(x_nhwc.astype(jnp.bfloat16),
                    ((0, 0), (pad, pad), (0, 0), (0, 0)))
    Hp = H + 2 * pad
    x_flat = x_pad.reshape(N, Hp * W, Cmid)

    TH = _pick_row_tile(H, W, target_rows)
    R = H // TH
    rows = TH * W

    kern = functools.partial(_convk1_relu_bn_kernel, K=K, W=W, rows=rows)
    out = pl.pallas_call(
        kern,
        out_shape=jax.ShapeDtypeStruct((N, H * W, Cout), jnp.float32),
        grid=(N, R),
        in_specs=[
            # full padded per-batch block; constant along r -> fetched once per n
            pl.BlockSpec((None, Hp * W, Cmid), lambda n, r: (n, 0, 0)),
            pl.BlockSpec((K, Cmid, Cout), lambda n, r: (0, 0, 0)),
            pl.BlockSpec((1, Cout), lambda n, r: (0, 0)),
            pl.BlockSpec((1, Cout), lambda n, r: (0, 0)),
            pl.BlockSpec((1, Cout), lambda n, r: (0, 0)),
        ],
        out_specs=pl.BlockSpec((None, rows, Cout), lambda n, r: (n, r, 0)),
        compiler_params=pltpu.CompilerParams(
            dimension_semantics=("parallel", "parallel")),
    )(x_flat, w.astype(jnp.bfloat16), b.reshape(1, Cout),
      scale.reshape(1, Cout), shift.reshape(1, Cout))
    return out.reshape(N, H, W, Cout)


# --------------------------- parameters / wrapper ----------------------------

def init_basic_conv(key, cin, cout, K):
    """Deterministic parameters for one BasicConv2d (conv + relu + bn, eval mode)."""
    kw, kb, kg, kbe, km, kv = jax.random.split(key, 6)
    w = 0.1 * jax.random.normal(kw, (K, cin, cout), jnp.float32)    # (kh, Cin, Cout), kw=1
    b = 0.1 * jax.random.normal(kb, (cout,), jnp.float32)
    gamma = 1.0 + 0.1 * jax.random.normal(kg, (cout,), jnp.float32)
    beta = 0.1 * jax.random.normal(kbe, (cout,), jnp.float32)
    running_mean = 0.1 * jax.random.normal(km, (cout,), jnp.float32)
    running_var = 1.0 + 0.1 * jax.random.uniform(kv, (cout,), jnp.float32)
    scale = gamma / jnp.sqrt(running_var + _EPS)
    shift = beta - running_mean * scale
    return dict(w=w, b=b, scale=scale, shift=shift)


def init_inception(key, in_channels, ch1x1, ch3x3red, ch3x3, ch5x5red, ch5x5,
                   ch7x7red, ch7x7):
    ks = jax.random.split(key, 7)
    return dict(
        b1=init_basic_conv(ks[0], in_channels, ch1x1, 1),
        b2a=init_basic_conv(ks[1], in_channels, ch3x3red, 1),
        b2b=init_basic_conv(ks[2], ch3x3red, ch3x3, 3),
        b3a=init_basic_conv(ks[3], in_channels, ch5x5red, 1),
        b3b=init_basic_conv(ks[4], ch5x5red, ch5x5, 5),
        b4a=init_basic_conv(ks[5], in_channels, ch7x7red, 1),
        b4b=init_basic_conv(ks[6], ch7x7red, ch7x7, 7),
    )


def inception_forward(x_nchw, params):
    """Pallas implementation of Inception.forward. Input/Output are NCHW, f32."""
    x = jnp.transpose(x_nchw, (0, 2, 3, 1)).astype(jnp.float32)   # -> NHWC

    # One fused matmul for branch1's 1x1 and the three reduce 1x1 convs.
    b1, r2, r3, r4 = conv1x1_fused_relu_bn(
        x, [params["b1"], params["b2a"], params["b3a"], params["b4a"]])

    b2 = convk1_relu_bn(r2, params["b2b"]["w"], params["b2b"]["b"],
                        params["b2b"]["scale"], params["b2b"]["shift"], 3)
    b3 = convk1_relu_bn(r3, params["b3b"]["w"], params["b3b"]["b"],
                        params["b3b"]["scale"], params["b3b"]["shift"], 5)
    b4 = convk1_relu_bn(r4, params["b4b"]["w"], params["b4b"]["b"],
                        params["b4b"]["scale"], params["b4b"]["shift"], 7)

    # TODO(synk): this concat could be removed by having each kernel write its
    # channel slice of one (N,H,W,Ctot) buffer via input_output_aliases.
    out = jnp.concatenate([b1, b2, b3, b4], axis=-1)              # cat on channels
    return jnp.transpose(out, (0, 3, 1, 2))                       # -> NCHW


# ------------------------------ pure-JAX reference ---------------------------

def _basic_ref(x_nhwc, p, K):
    w4 = p["w"][:, None, :, :]                                    # (K,1,Cin,Cout) HWIO
    pad = (K - 1) // 2
    y = lax.conv_general_dilated(
        x_nhwc, w4, window_strides=(1, 1), padding=((pad, pad), (0, 0)),
        dimension_numbers=("NHWC", "HWIO", "NHWC"),
        precision=lax.Precision.HIGHEST)
    y = jnp.maximum(y + p["b"], 0.0)
    return y * p["scale"] + p["shift"]


def inception_ref(x_nchw, params):
    x = jnp.transpose(x_nchw, (0, 2, 3, 1)).astype(jnp.float32)
    b1 = _basic_ref(x, params["b1"], 1)
    b2 = _basic_ref(_basic_ref(x, params["b2a"], 1), params["b2b"], 3)
    b3 = _basic_ref(_basic_ref(x, params["b3a"], 1), params["b3b"], 5)
    b4 = _basic_ref(_basic_ref(x, params["b4a"], 1), params["b4b"], 7)
    out = jnp.concatenate([b1, b2, b3, b4], axis=-1)
    return jnp.transpose(out, (0, 3, 1, 2))


# ---------------------------------- main -------------------------------------

if __name__ == "__main__":
    key = jax.random.PRNGKey(0)
    kx, kp = jax.random.split(key)

    # Small shapes: N=2, Cin=4, H=W=16 ; Inception(4, 8, 4, 8, 4, 8, 4, 8)
    x = jax.random.normal(kx, (2, 4, 16, 16), jnp.float32)        # NCHW like PyTorch
    params = init_inception(kp, 4, 8, 4, 8, 4, 8, 4, 8)

    fwd = jax.jit(inception_forward)
    out = jax.block_until_ready(fwd(x, params))
    assert out.shape == (2, 8 + 8 + 8 + 8, 16, 16), out.shape

    ref = jax.block_until_ready(inception_ref(x, params))
    max_err = float(jnp.max(jnp.abs(out - ref)))
    assert jnp.allclose(out, ref, atol=3e-2, rtol=3e-2), max_err

    print("KERNEL_OK")
</pallas_src>

<mosaic_0001>
module attributes {stable_mosaic.version = 11 : i64} {
  func.func @_conv1x1_fused_kernel(%arg0: i32, %arg1: memref<256x4xbf16, #tpu.memory_space<vmem>>, %arg2: memref<4x20xbf16, #tpu.memory_space<vmem>>, %arg3: memref<1x20xf32, #tpu.memory_space<vmem>>, %arg4: memref<1x20xf32, #tpu.memory_space<vmem>>, %arg5: memref<1x20xf32, #tpu.memory_space<vmem>>, %arg6: memref<256x8xf32, #tpu.memory_space<vmem>>, %arg7: memref<256x4xbf16, #tpu.memory_space<vmem>>, %arg8: memref<256x4xbf16, #tpu.memory_space<vmem>>, %arg9: memref<256x4xbf16, #tpu.memory_space<vmem>>) attributes {dimension_semantics = [#tpu.dimension_semantics<parallel>], iteration_bounds = array<i64: 2>, scalar_prefetch = 0 : i64, scratch_operands = 0 : i64, tpu.core_type = #tpu.core_type<tc>, window_params = [{transform_indices = @transform_0, window_bounds = array<i64: 256, 4>}, {pipeline_mode = #tpu.pipeline_mode<synchronous>, transform_indices = @transform_1, window_bounds = array<i64: 4, 20>}, {pipeline_mode = #tpu.pipeline_mode<synchronous>, transform_indices = @transform_2, window_bounds = array<i64: 1, 20>}, {pipeline_mode = #tpu.pipeline_mode<synchronous>, transform_indices = @transform_3, window_bounds = array<i64: 1, 20>}, {pipeline_mode = #tpu.pipeline_mode<synchronous>, transform_indices = @transform_4, window_bounds = array<i64: 1, 20>}, {transform_indices = @transform_5, window_bounds = array<i64: 256, 8>}, {transform_indices = @transform_6, window_bounds = array<i64: 256, 4>}, {transform_indices = @transform_7, window_bounds = array<i64: 256, 4>}, {transform_indices = @transform_8, window_bounds = array<i64: 256, 4>}]} {
    %c0 = arith.constant 0 : index
    %c0_0 = arith.constant 0 : index
    %0 = vector.load %arg1[%c0, %c0_0] : memref<256x4xbf16, #tpu.memory_space<vmem>>, vector<256x4xbf16>
    %c0_1 = arith.constant 0 : index
    %c0_2 = arith.constant 0 : index
    %1 = vector.load %arg2[%c0_1, %c0_2] : memref<4x20xbf16, #tpu.memory_space<vmem>>, vector<4x20xbf16>
    %cst = arith.constant dense<0.000000e+00> : vector<256x20xf32>
    %2 = tpu.matmul %0, %1, %cst {dimension_numbers = #tpu.dot_dimension_numbers<[1], [0], [0], [1], [0, 0, 1, 1], [], []>} : vector<256x4xbf16>, vector<4x20xbf16>, vector<256x20xf32> -> vector<256x20xf32>
    %c0_3 = arith.constant 0 : index
    %c0_4 = arith.constant 0 : index
    %3 = vector.load %arg3[%c0_3, %c0_4] : memref<1x20xf32, #tpu.memory_space<vmem>>, vector<1x20xf32>
    %4 = vector.broadcast %3 : vector<1x20xf32> to vector<256x20xf32>
    %5 = arith.addf %2, %4 : vector<256x20xf32>
    %cst_5 = arith.constant 0.000000e+00 : f32
    %6 = vector.broadcast %cst_5 : f32 to vector<256x20xf32>
    %7 = arith.maximumf %5, %6 : vector<256x20xf32>
    %c0_6 = arith.constant 0 : index
    %c0_7 = arith.constant 0 : index
    %8 = vector.load %arg4[%c0_6, %c0_7] : memref<1x20xf32, #tpu.memory_space<vmem>>, vector<1x20xf32>
    %9 = vector.broadcast %8 : vector<1x20xf32> to vector<256x20xf32>
    %10 = arith.mulf %7, %9 : vector<256x20xf32>
    %c0_8 = arith.constant 0 : index
    %c0_9 = arith.constant 0 : index
    %11 = vector.load %arg5[%c0_8, %c0_9] : memref<1x20xf32, #tpu.memory_space<vmem>>, vector<1x20xf32>
    %12 = vector.broadcast %11 : vector<1x20xf32> to vector<256x20xf32>
    %13 = arith.addf %10, %12 : vector<256x20xf32>
    %14 = vector.extract_strided_slice %13 {offsets = [0, 0], sizes = [256, 8], strides = [1, 1]} : vector<256x20xf32> to vector<256x8xf32>
    %c0_10 = arith.constant 0 : index
    %c0_11 = arith.constant 0 : index
    %15 = vector.load %arg6[%c0_10, %c0_11] : memref<256x8xf32, #tpu.memory_space<vmem>>, vector<256x8xf32>
    tpu.vector_store %arg6[%c0_10, %c0_11], %14 {strides = array<i32>} : memref<256x8xf32, #tpu.memory_space<vmem>>, vector<256x8xf32>,
    %16 = vector.extract_strided_slice %13 {offsets = [0, 8], sizes = [256, 4], strides = [1, 1]} : vector<256x20xf32> to vector<256x4xf32>
    %17 = arith.truncf %16 : vector<256x4xf32> to vector<256x4xbf16>
    %c0_12 = arith.constant 0 : index
    %c0_13 = arith.constant 0 : index
    %18 = vector.load %arg7[%c0_12, %c0_13] : memref<256x4xbf16, #tpu.memory_space<vmem>>, vector<256x4xbf16>
    tpu.vector_store %arg7[%c0_12, %c0_13], %17 {strides = array<i32>} : memref<256x4xbf16, #tpu.memory_space<vmem>>, vector<256x4xbf16>,
    %19 = vector.extract_strided_slice %13 {offsets = [0, 12], sizes = [256, 4], strides = [1, 1]} : vector<256x20xf32> to vector<256x4xf32>
    %20 = arith.truncf %19 : vector<256x4xf32> to vector<256x4xbf16>
    %c0_14 = arith.constant 0 : index
    %c0_15 = arith.constant 0 : index
    %21 = vector.load %arg8[%c0_14, %c0_15] : memref<256x4xbf16, #tpu.memory_space<vmem>>, vector<256x4xbf16>
    tpu.vector_store %arg8[%c0_14, %c0_15], %20 {strides = array<i32>} : memref<256x4xbf16, #tpu.memory_space<vmem>>, vector<256x4xbf16>,
    %22 = vector.extract_strided_slice %13 {offsets = [0, 16], sizes = [256, 4], strides = [1, 1]} : vector<256x20xf32> to vector<256x4xf32>
    %23 = arith.truncf %22 : vector<256x4xf32> to vector<256x4xbf16>
    %c0_16 = arith.constant 0 : index
    %c0_17 = arith.constant 0 : index
    %24 = vector.load %arg9[%c0_16, %c0_17] : memref<256x4xbf16, #tpu.memory_space<vmem>>, vector<256x4xbf16>
    tpu.vector_store %arg9[%c0_16, %c0_17], %23 {strides = array<i32>} : memref<256x4xbf16, #tpu.memory_space<vmem>>, vector<256x4xbf16>,
    return
  }
  func.func @transform_0(%arg0: i32) -> (i32, i32) {
    %c0_i32 = arith.constant 0 : i32
    %c0_i32_0 = arith.constant 0 : i32
    return %arg0, %c0_i32 : i32, i32
  }
  func.func @transform_1(%arg0: i32) -> (i32, i32) {
    %c0_i32 = arith.constant 0 : i32
    %c0_i32_0 = arith.constant 0 : i32
    %c0_i32_1 = arith.constant 0 : i32
    return %c0_i32, %c0_i32_0 : i32, i32
  }
  func.func @transform_2(%arg0: i32) -> (i32, i32) {
    %c0_i32 = arith.constant 0 : i32
    %c0_i32_0 = arith.constant 0 : i32
    %c0_i32_1 = arith.constant 0 : i32
    return %c0_i32, %c0_i32_0 : i32, i32
  }
  func.func @transform_3(%arg0: i32) -> (i32, i32) {
    %c0_i32 = arith.constant 0 : i32
    %c0_i32_0 = arith.constant 0 : i32
    %c0_i32_1 = arith.constant 0 : i32
    return %c0_i32, %c0_i32_0 : i32, i32
  }
  func.func @transform_4(%arg0: i32) -> (i32, i32) {
    %c0_i32 = arith.constant 0 : i32
    %c0_i32_0 = arith.constant 0 : i32
    %c0_i32_1 = arith.constant 0 : i32
    return %c0_i32, %c0_i32_0 : i32, i32
  }
  func.func @transform_5(%arg0: i32) -> (i32, i32) {
    %c0_i32 = arith.constant 0 : i32
    %c0_i32_0 = arith.constant 0 : i32
    return %arg0, %c0_i32 : i32, i32
  }
  func.func @transform_6(%arg0: i32) -> (i32, i32) {
    %c0_i32 = arith.constant 0 : i32
    %c0_i32_0 = arith.constant 0 : i32
    return %arg0, %c0_i32 : i32, i32
  }
  func.func @transform_7(%arg0: i32) -> (i32, i32) {
    %c0_i32 = arith.constant 0 : i32
    %c0_i32_0 = arith.constant 0 : i32
    return %arg0, %c0_i32 : i32, i32
  }
  func.func @transform_8(%arg0: i32) -> (i32, i32) {
    %c0_i32 = arith.constant 0 : i32
    %c0_i32_0 = arith.constant 0 : i32
    return %arg0, %c0_i32 : i32, i32
  }
}

module attributes {stable_mosaic.version = 11 : i64} {
  func.func @_convk1_relu_bn_kernel(%arg0: i32, %arg1: i32, %arg2: memref<1x288x4xbf16, #tpu.memory_space<vmem>>, %arg3: memref<3x4x8xbf16, #tpu.memory_space<vmem>>, %arg4: memref<1x8xf32, #tpu.memory_space<vmem>>, %arg5: memref<1x8xf32, #tpu.memory_space<vmem>>, %arg6: memref<1x8xf32, #tpu.memory_space<vmem>>, %arg7: memref<1x128x8xf32, #tpu.memory_space<vmem>>) attributes {dimension_semantics = [#tpu.dimension_semantics<parallel>, #tpu.dimension_semantics<parallel>], iteration_bounds = array<i64: 2, 2>, scalar_prefetch = 0 : i64, scratch_operands = 0 : i64, tpu.core_type = #tpu.core_type<tc>, window_params = [{transform_indices = @transform_0, window_bounds = array<i64: 1, 288, 4>}, {pipeline_mode = #tpu.pipeline_mode<synchronous>, transform_indices = @transform_1, window_bounds = array<i64: 3, 4, 8>}, {pipeline_mode = #tpu.pipeline_mode<synchronous>, transform_indices = @transform_2, window_bounds = array<i64: 1, 8>}, {pipeline_mode = #tpu.pipeline_mode<synchronous>, transform_indices = @transform_3, window_bounds = array<i64: 1, 8>}, {pipeline_mode = #tpu.pipeline_mode<synchronous>, transform_indices = @transform_4, window_bounds = array<i64: 1, 8>}, {transform_indices = @transform_5, window_bounds = array<i64: 1, 128, 8>}]} {
    %c128_i32 = arith.constant 128 : i32
    %0 = arith.muli %arg1, %c128_i32 : i32
    %1 = tpu.assume_multiple %0, 16 : i32
    %cst = arith.constant 0.000000e+00 : f32
    %2 = vector.broadcast %cst : f32 to vector<128x8xf32>
    %c0_i32 = arith.constant 0 : i32
    %3 = arith.addi %1, %c0_i32 : i32
    %4 = tpu.assume_multiple %3, 16 : i32
    %c0 = arith.constant 0 : index
    %5 = arith.index_cast %4 : i32 to index
    %c0_0 = arith.constant 0 : index
    %6 = vector.load %arg2[%c0, %5, %c0_0] : memref<1x288x4xbf16, #tpu.memory_space<vmem>>, vector<1x128x4xbf16>
    %7 = vector.shape_cast %6 : vector<1x128x4xbf16> to vector<128x4xbf16>
    %c0_1 = arith.constant 0 : index
    %c0_2 = arith.constant 0 : index
    %c0_3 = arith.constant 0 : index
    %8 = vector.load %arg3[%c0_1, %c0_2, %c0_3] : memref<3x4x8xbf16, #tpu.memory_space<vmem>>, vector<1x4x8xbf16>
    %9 = vector.shape_cast %8 : vector<1x4x8xbf16> to vector<4x8xbf16>
    %cst_4 = arith.constant dense<0.000000e+00> : vector<128x8xf32>
    %10 = tpu.matmul %7, %9, %cst_4 {dimension_numbers = #tpu.dot_dimension_numbers<[1], [0], [0], [1], [0, 0, 1, 1], [], []>} : vector<128x4xbf16>, vector<4x8xbf16>, vector<128x8xf32> -> vector<128x8xf32>
    %11 = arith.addf %2, %10 : vector<128x8xf32>
    %c16_i32 = arith.constant 16 : i32
    %12 = arith.addi %1, %c16_i32 : i32
    %13 = tpu.assume_multiple %12, 16 : i32
    %c0_5 = arith.constant 0 : index
    %14 = arith.index_cast %13 : i32 to index
    %c0_6 = arith.constant 0 : index
    %15 = vector.load %arg2[%c0_5, %14, %c0_6] : memref<1x288x4xbf16, #tpu.memory_space<vmem>>, vector<1x128x4xbf16>
    %16 = vector.shape_cast %15 : vector<1x128x4xbf16> to vector<128x4xbf16>
    %c1 = arith.constant 1 : index
    %c0_7 = arith.constant 0 : index
    %c0_8 = arith.constant 0 : index
    %17 = vector.load %arg3[%c1, %c0_7, %c0_8] : memref<3x4x8xbf16, #tpu.memory_space<vmem>>, vector<1x4x8xbf16>
    %18 = vector.shape_cast %17 : vector<1x4x8xbf16> to vector<4x8xbf16>
    %cst_9 = arith.constant dense<0.000000e+00> : vector<128x8xf32>
    %19 = tpu.matmul %16, %18, %cst_9 {dimension_numbers = #tpu.dot_dimension_numbers<[1], [0], [0], [1], [0, 0, 1, 1], [], []>} : vector<128x4xbf16>, vector<4x8xbf16>, vector<128x8xf32> -> vector<128x8xf32>
    %20 = arith.addf %11, %19 : vector<128x8xf32>
    %c32_i32 = arith.constant 32 : i32
    %21 = arith.addi %1, %c32_i32 : i32
    %22 = tpu.assume_multiple %21, 16 : i32
    %c0_10 = arith.constant 0 : index
    %23 = arith.index_cast %22 : i32 to index
    %c0_11 = arith.constant 0 : index
    %24 = vector.load %arg2[%c0_10, %23, %c0_11] : memref<1x288x4xbf16, #tpu.memory_space<vmem>>, vector<1x128x4xbf16>
    %25 = vector.shape_cast %24 : vector<1x128x4xbf16> to vector<128x4xbf16>
    %c2 = arith.constant 2 : index
    %c0_12 = arith.constant 0 : index
    %c0_13 = arith.constant 0 : index
    %26 = vector.load %arg3[%c2, %c0_12, %c0_13] : memref<3x4x8xbf16, #tpu.memory_space<vmem>>, vector<1x4x8xbf16>
    %27 = vector.shape_cast %26 : vector<1x4x8xbf16> to vector<4x8xbf16>
    %cst_14 = arith.constant dense<0.000000e+00> : vector<128x8xf32>
    %28 = tpu.matmul %25, %27, %cst_14 {dimension_numbers = #tpu.dot_dimension_numbers<[1], [0], [0], [1], [0, 0, 1, 1], [], []>} : vector<128x4xbf16>, vector<4x8xbf16>, vector<128x8xf32> -> vector<128x8xf32>
    %29 = arith.addf %20, %28 : vector<128x8xf32>
    %c0_15 = arith.constant 0 : index
    %c0_16 = arith.constant 0 : index
    %30 = vector.load %arg4[%c0_15, %c0_16] : memref<1x8xf32, #tpu.memory_space<vmem>>, vector<1x8xf32>
    %31 = vector.broadcast %30 : vector<1x8xf32> to vector<128x8xf32>
    %32 = arith.addf %29, %31 : vector<128x8xf32>
    %cst_17 = arith.constant 0.000000e+00 : f32
    %33 = vector.broadcast %cst_17 : f32 to vector<128x8xf32>
    %34 = arith.maximumf %32, %33 : vector<128x8xf32>
    %c0_18 = arith.constant 0 : index
    %c0_19 = arith.constant 0 : index
    %35 = vector.load %arg5[%c0_18, %c0_19] : memref<1x8xf32, #tpu.memory_space<vmem>>, vector<1x8xf32>
    %36 = vector.broadcast %35 : vector<1x8xf32> to vector<128x8xf32>
    %37 = arith.mulf %34, %36 : vector<128x8xf32>
    %c0_20 = arith.constant 0 : index
    %c0_21 = arith.constant 0 : index
    %38 = vector.load %arg6[%c0_20, %c0_21] : memref<1x8xf32, #tpu.memory_space<vmem>>, vector<1x8xf32>
    %39 = vector.broadcast %38 : vector<1x8xf32> to vector<128x8xf32>
    %40 = arith.addf %37, %39 : vector<128x8xf32>
    %c0_22 = arith.constant 0 : index
    %c0_23 = arith.constant 0 : index
    %c0_24 = arith.constant 0 : index
    %41 = vector.load %arg7[%c0_22, %c0_23, %c0_24] : memref<1x128x8xf32, #tpu.memory_space<vmem>>, vector<1x128x8xf32>
    %42 = vector.shape_cast %41 : vector<1x128x8xf32> to vector<128x8xf32>
    %43 = vector.shape_cast %40 : vector<128x8xf32> to vector<1x128x8xf32>
    tpu.vector_store %arg7[%c0_22, %c0_23, %c0_24], %43 {strides = array<i32>} : memref<1x128x8xf32, #tpu.memory_space<vmem>>, vector<1x128x8xf32>,
    return
  }
  func.func @transform_0(%arg0: i32, %arg1: i32) -> (i32, i32, i32) {
    %c0_i32 = arith.constant 0 : i32
    %c0_i32_0 = arith.constant 0 : i32
    %c0_i32_1 = arith.constant 0 : i32
    return %arg0, %c0_i32, %c0_i32_0 : i32, i32, i32
  }
  func.func @transform_1(%arg0: i32, %arg1: i32) -> (i32, i32, i32) {
    %c0_i32 = arith.constant 0 : i32
    %c0_i32_0 = arith.constant 0 : i32
    %c0_i32_1 = arith.constant 0 : i32
    %c0_i32_2 = arith.constant 0 : i32
    return %c0_i32, %c0_i32_0, %c0_i32_1 : i32, i32, i32
  }
  func.func @transform_2(%arg0: i32, %arg1: i32) -> (i32, i32) {
    %c0_i32 = arith.constant 0 : i32
    %c0_i32_0 = arith.constant 0 : i32
    %c0_i32_1 = arith.constant 0 : i32
    return %c0_i32, %c0_i32_0 : i32, i32
  }
  func.func @transform_3(%arg0: i32, %arg1: i32) -> (i32, i32) {
    %c0_i32 = arith.constant 0 : i32
    %c0_i32_0 = arith.constant 0 : i32
    %c0_i32_1 = arith.constant 0 : i32
    return %c0_i32, %c0_i32_0 : i32, i32
  }
  func.func @transform_4(%arg0: i32, %arg1: i32) -> (i32, i32) {
    %c0_i32 = arith.constant 0 : i32
    %c0_i32_0 = arith.constant 0 : i32
    %c0_i32_1 = arith.constant 0 : i32
    return %c0_i32, %c0_i32_0 : i32, i32
  }
  func.func @transform_5(%arg0: i32, %arg1: i32) -> (i32, i32, i32) {
    %c0_i32 = arith.constant 0 : i32
    %c0_i32_0 = arith.constant 0 : i32
    return %arg0, %arg1, %c0_i32 : i32, i32, i32
  }
}

module attributes {stable_mosaic.version = 11 : i64} {
  func.func @_convk1_relu_bn_kernel(%arg0: i32, %arg1: i32, %arg2: memref<1x352x4xbf16, #tpu.memory_space<vmem>>, %arg3: memref<7x4x8xbf16, #tpu.memory_space<vmem>>, %arg4: memref<1x8xf32, #tpu.memory_space<vmem>>, %arg5: memref<1x8xf32, #tpu.memory_space<vmem>>, %arg6: memref<1x8xf32, #tpu.memory_space<vmem>>, %arg7: memref<1x128x8xf32, #tpu.memory_space<vmem>>) attributes {dimension_semantics = [#tpu.dimension_semantics<parallel>, #tpu.dimension_semantics<parallel>], iteration_bounds = array<i64: 2, 2>, scalar_prefetch = 0 : i64, scratch_operands = 0 : i64, tpu.core_type = #tpu.core_type<tc>, window_params = [{transform_indices = @transform_0, window_bounds = array<i64: 1, 352, 4>}, {pipeline_mode = #tpu.pipeline_mode<synchronous>, transform_indices = @transform_1, window_bounds = array<i64: 7, 4, 8>}, {pipeline_mode = #tpu.pipeline_mode<synchronous>, transform_indices = @transform_2, window_bounds = array<i64: 1, 8>}, {pipeline_mode = #tpu.pipeline_mode<synchronous>, transform_indices = @transform_3, window_bounds = array<i64: 1, 8>}, {pipeline_mode = #tpu.pipeline_mode<synchronous>, transform_indices = @transform_4, window_bounds = array<i64: 1, 8>}, {transform_indices = @transform_5, window_bounds = array<i64: 1, 128, 8>}]} {
    %c128_i32 = arith.constant 128 : i32
    %0 = arith.muli %arg1, %c128_i32 : i32
    %1 = tpu.assume_multiple %0, 16 : i32
    %cst = arith.constant 0.000000e+00 : f32
    %2 = vector.broadcast %cst : f32 to vector<128x8xf32>
    %c0_i32 = arith.constant 0 : i32
    %3 = arith.addi %1, %c0_i32 : i32
    %4 = tpu.assume_multiple %3, 16 : i32
    %c0 = arith.constant 0 : index
    %5 = arith.index_cast %4 : i32 to index
    %c0_0 = arith.constant 0 : index
    %6 = vector.load %arg2[%c0, %5, %c0_0] : memref<1x352x4xbf16, #tpu.memory_space<vmem>>, vector<1x128x4xbf16>
    %7 = vector.shape_cast %6 : vector<1x128x4xbf16> to vector<128x4xbf16>
    %c0_1 = arith.constant 0 : index
    %c0_2 = arith.constant 0 : index
    %c0_3 = arith.constant 0 : index
    %8 = vector.load %arg3[%c0_1, %c0_2, %c0_3] : memref<7x4x8xbf16, #tpu.memory_space<vmem>>, vector<1x4x8xbf16>
    %9 = vector.shape_cast %8 : vector<1x4x8xbf16> to vector<4x8xbf16>
    %cst_4 = arith.constant dense<0.000000e+00> : vector<128x8xf32>
    %10 = tpu.matmul %7, %9, %cst_4 {dimension_numbers = #tpu.dot_dimension_numbers<[1], [0], [0], [1], [0, 0, 1, 1], [], []>} : vector<128x4xbf16>, vector<4x8xbf16>, vector<128x8xf32> -> vector<128x8xf32>
    %11 = arith.addf %2, %10 : vector<128x8xf32>
    %c16_i32 = arith.constant 16 : i32
    %12 = arith.addi %1, %c16_i32 : i32
    %13 = tpu.assume_multiple %12, 16 : i32
    %c0_5 = arith.constant 0 : index
    %14 = arith.index_cast %13 : i32 to index
    %c0_6 = arith.constant 0 : index
    %15 = vector.load %arg2[%c0_5, %14, %c0_6] : memref<1x352x4xbf16, #tpu.memory_space<vmem>>, vector<1x128x4xbf16>
    %16 = vector.shape_cast %15 : vector<1x128x4xbf16> to vector<128x4xbf16>
    %c1 = arith.constant 1 : index
    %c0_7 = arith.constant 0 : index
    %c0_8 = arith.constant 0 : index
    %17 = vector.load %arg3[%c1, %c0_7, %c0_8] : memref<7x4x8xbf16, #tpu.memory_space<vmem>>, vector<1x4x8xbf16>
    %18 = vector.shape_cast %17 : vector<1x4x8xbf16> to vector<4x8xbf16>
    %cst_9 = arith.constant dense<0.000000e+00> : vector<128x8xf32>
    %19 = tpu.matmul %16, %18, %cst_9 {dimension_numbers = #tpu.dot_dimension_numbers<[1], [0], [0], [1], [0, 0, 1, 1], [], []>} : vector<128x4xbf16>, vector<4x8xbf16>, vector<128x8xf32> -> vector<128x8xf32>
    %20 = arith.addf %11, %19 : vector<128x8xf32>
    %c32_i32 = arith.constant 32 : i32
    %21 = arith.addi %1, %c32_i32 : i32
    %22 = tpu.assume_multiple %21, 16 : i32
    %c0_10 = arith.constant 0 : index
    %23 = arith.index_cast %22 : i32 to index
    %c0_11 = arith.constant 0 : index
    %24 = vector.load %arg2[%c0_10, %23, %c0_11] : memref<1x352x4xbf16, #tpu.memory_space<vmem>>, vector<1x128x4xbf16>
    %25 = vector.shape_cast %24 : vector<1x128x4xbf16> to vector<128x4xbf16>
    %c2 = arith.constant 2 : index
    %c0_12 = arith.constant 0 : index
    %c0_13 = arith.constant 0 : index
    %26 = vector.load %arg3[%c2, %c0_12, %c0_13] : memref<7x4x8xbf16, #tpu.memory_space<vmem>>, vector<1x4x8xbf16>
    %27 = vector.shape_cast %26 : vector<1x4x8xbf16> to vector<4x8xbf16>
    %cst_14 = arith.constant dense<0.000000e+00> : vector<128x8xf32>
    %28 = tpu.matmul %25, %27, %cst_14 {dimension_numbers = #tpu.dot_dimension_numbers<[1], [0], [0], [1], [0, 0, 1, 1], [], []>} : vector<128x4xbf16>, vector<4x8xbf16>, vector<128x8xf32> -> vector<128x8xf32>
    %29 = arith.addf %20, %28 : vector<128x8xf32>
    %c48_i32 = arith.constant 48 : i32
    %30 = arith.addi %1, %c48_i32 : i32
    %31 = tpu.assume_multiple %30, 16 : i32
    %c0_15 = arith.constant 0 : index
    %32 = arith.index_cast %31 : i32 to index
    %c0_16 = arith.constant 0 : index
    %33 = vector.load %arg2[%c0_15, %32, %c0_16] : memref<1x352x4xbf16, #tpu.memory_space<vmem>>, vector<1x128x4xbf16>
    %34 = vector.shape_cast %33 : vector<1x128x4xbf16> to vector<128x4xbf16>
    %c3 = arith.constant 3 : index
    %c0_17 = arith.constant 0 : index
    %c0_18 = arith.constant 0 : index
    %35 = vector.load %arg3[%c3, %c0_17, %c0_18] : memref<7x4x8xbf16, #tpu.memory_space<vmem>>, vector<1x4x8xbf16>
    %36 = vector.shape_cast %35 : vector<1x4x8xbf16> to vector<4x8xbf16>
    %cst_19 = arith.constant dense<0.000000e+00> : vector<128x8xf32>
    %37 = tpu.matmul %34, %36, %cst_19 {dimension_numbers = #tpu.dot_dimension_numbers<[1], [0], [0], [1], [0, 0, 1, 1], [], []>} : vector<128x4xbf16>, vector<4x8xbf16>, vector<128x8xf32> -> vector<128x8xf32>
    %38 = arith.addf %29, %37 : vector<128x8xf32>
    %c64_i32 = arith.constant 64 : i32
    %39 = arith.addi %1, %c64_i32 : i32
    %40 = tpu.assume_multiple %39, 16 : i32
    %c0_20 = arith.constant 0 : index
    %41 = arith.index_cast %40 : i32 to index
    %c0_21 = arith.constant 0 : index
    %42 = vector.load %arg2[%c0_20, %41, %c0_21] : memref<1x352x4xbf16, #tpu.memory_space<vmem>>, vector<1x128x4xbf16>
    %43 = vector.shape_cast %42 : vector<1x128x4xbf16> to vector<128x4xbf16>
    %c4 = arith.constant 4 : index
    %c0_22 = arith.constant 0 : index
    %c0_23 = arith.constant 0 : index
    %44 = vector.load %arg3[%c4, %c0_22, %c0_23] : memref<7x4x8xbf16, #tpu.memory_space<vmem>>, vector<1x4x8xbf16>
    %45 = vector.shape_cast %44 : vector<1x4x8xbf16> to vector<4x8xbf16>
    %cst_24 = arith.constant dense<0.000000e+00> : vector<128x8xf32>
    %46 = tpu.matmul %43, %45, %cst_24 {dimension_numbers = #tpu.dot_dimension_numbers<[1], [0], [0], [1], [0, 0, 1, 1], [], []>} : vector<128x4xbf16>, vector<4x8xbf16>, vector<128x8xf32> -> vector<128x8xf32>
    %47 = arith.addf %38, %46 : vector<128x8xf32>
    %c80_i32 = arith.constant 80 : i32
    %48 = arith.addi %1, %c80_i32 : i32
    %49 = tpu.assume_multiple %48, 16 : i32
    %c0_25 = arith.constant 0 : index
    %50 = arith.index_cast %49 : i32 to index
    %c0_26 = arith.constant 0 : index
    %51 = vector.load %arg2[%c0_25, %50, %c0_26] : memref<1x352x4xbf16, #tpu.memory_space<vmem>>, vector<1x128x4xbf16>
    %52 = vector.shape_cast %51 : vector<1x128x4xbf16> to vector<128x4xbf16>
    %c5 = arith.constant 5 : index
    %c0_27 = arith.constant 0 : index
    %c0_28 = arith.constant 0 : index
    %53 = vector.load %arg3[%c5, %c0_27, %c0_28] : memref<7x4x8xbf16, #tpu.memory_space<vmem>>, vector<1x4x8xbf16>
    %54 = vector.shape_cast %53 : vector<1x4x8xbf16> to vector<4x8xbf16>
    %cst_29 = arith.constant dense<0.000000e+00> : vector<128x8xf32>
    %55 = tpu.matmul %52, %54, %cst_29 {dimension_numbers = #tpu.dot_dimension_numbers<[1], [0], [0], [1], [0, 0, 1, 1], [], []>} : vector<128x4xbf16>, vector<4x8xbf16>, vector<128x8xf32> -> vector<128x8xf32>
    %56 = arith.addf %47, %55 : vector<128x8xf32>
    %c96_i32 = arith.constant 96 : i32
    %57 = arith.addi %1, %c96_i32 : i32
    %58 = tpu.assume_multiple %57, 16 : i32
    %c0_30 = arith.constant 0 : index
    %59 = arith.index_cast %58 : i32 to index
    %c0_31 = arith.constant 0 : index
    %60 = vector.load %arg2[%c0_30, %59, %c0_31] : memref<1x352x4xbf16, #tpu.memory_space<vmem>>, vector<1x128x4xbf16>
    %61 = vector.shape_cast %60 : vector<1x128x4xbf16> to vector<128x4xbf16>
    %c6 = arith.constant 6 : index
    %c0_32 = arith.constant 0 : index
    %c0_33 = arith.constant 0 : index
    %62 = vector.load %arg3[%c6, %c0_32, %c0_33] : memref<7x4x8xbf16, #tpu.memory_space<vmem>>, vector<1x4x8xbf16>
    %63 = vector.shape_cast %62 : vector<1x4x8xbf16> to vector<4x8xbf16>
    %cst_34 = arith.constant dense<0.000000e+00> : vector<128x8xf32>
    %64 = tpu.matmul %61, %63, %cst_34 {dimension_numbers = #tpu.dot_dimension_numbers<[1], [0], [0], [1], [0, 0, 1, 1], [], []>} : vector<128x4xbf16>, vector<4x8xbf16>, vector<128x8xf32> -> vector<128x8xf32>
    %65 = arith.addf %56, %64 : vector<128x8xf32>
    %c0_35 = arith.constant 0 : index
    %c0_36 = arith.constant 0 : index
    %66 = vector.load %arg4[%c0_35, %c0_36] : memref<1x8xf32, #tpu.memory_space<vmem>>, vector<1x8xf32>
    %67 = vector.broadcast %66 : vector<1x8xf32> to vector<128x8xf32>
    %68 = arith.addf %65, %67 : vector<128x8xf32>
    %cst_37 = arith.constant 0.000000e+00 : f32
    %69 = vector.broadcast %cst_37 : f32 to vector<128x8xf32>
    %70 = arith.maximumf %68, %69 : vector<128x8xf32>
    %c0_38 = arith.constant 0 : index
    %c0_39 = arith.constant 0 : index
    %71 = vector.load %arg5[%c0_38, %c0_39] : memref<1x8xf32, #tpu.memory_space<vmem>>, vector<1x8xf32>
    %72 = vector.broadcast %71 : vector<1x8xf32> to vector<128x8xf32>
    %73 = arith.mulf %70, %72 : vector<128x8xf32>
    %c0_40 = arith.constant 0 : index
    %c0_41 = arith.constant 0 : index
    %74 = vector.load %arg6[%c0_40, %c0_41] : memref<1x8xf32, #tpu.memory_space<vmem>>, vector<1x8xf32>
    %75 = vector.broadcast %74 : vector<1x8xf32> to vector<128x8xf32>
    %76 = arith.addf %73, %75 : vector<128x8xf32>
    %c0_42 = arith.constant 0 : index
    %c0_43 = arith.constant 0 : index
    %c0_44 = arith.constant 0 : index
    %77 = vector.load %arg7[%c0_42, %c0_43, %c0_44] : memref<1x128x8xf32, #tpu.memory_space<vmem>>, vector<1x128x8xf32>
    %78 = vector.shape_cast %77 : vector<1x128x8xf32> to vector<128x8xf32>
    %79 = vector.shape_cast %76 : vector<128x8xf32> to vector<1x128x8xf32>
    tpu.vector_store %arg7[%c0_42, %c0_43, %c0_44], %79 {strides = array<i32>} : memref<1x128x8xf32, #tpu.memory_space<vmem>>, vector<1x128x8xf32>,
    return
  }
  func.func @transform_0(%arg0: i32, %arg1: i32) -> (i32, i32, i32) {
    %c0_i32 = arith.constant 0 : i32
    %c0_i32_0 = arith.constant 0 : i32
    %c0_i32_1 = arith.constant 0 : i32
    return %arg0, %c0_i32, %c0_i32_0 : i32, i32, i32
  }
  func.func @transform_1(%arg0: i32, %arg1: i32) -> (i32, i32, i32) {
    %c0_i32 = arith.constant 0 : i32
    %c0_i32_0 = arith.constant 0 : i32
    %c0_i32_1 = arith.constant 0 : i32
    %c0_i32_2 = arith.constant 0 : i32
    return %c0_i32, %c0_i32_0, %c0_i32_1 : i32, i32, i32
  }
  func.func @transform_2(%arg0: i32, %arg1: i32) -> (i32, i32) {
    %c0_i32 = arith.constant 0 : i32
    %c0_i32_0 = arith.constant 0 : i32
    %c0_i32_1 = arith.constant 0 : i32
    return %c0_i32, %c0_i32_0 : i32, i32
  }
  func.func @transform_3(%arg0: i32, %arg1: i32) -> (i32, i32) {
    %c0_i32 = arith.constant 0 : i32
    %c0_i32_0 = arith.constant 0 : i32
    %c0_i32_1 = arith.constant 0 : i32
    return %c0_i32, %c0_i32_0 : i32, i32
  }
  func.func @transform_4(%arg0: i32, %arg1: i32) -> (i32, i32) {
    %c0_i32 = arith.constant 0 : i32
    %c0_i32_0 = arith.constant 0 : i32
    %c0_i32_1 = arith.constant 0 : i32
    return %c0_i32, %c0_i32_0 : i32, i32
  }
  func.func @transform_5(%arg0: i32, %arg1: i32) -> (i32, i32, i32) {
    %c0_i32 = arith.constant 0 : i32
    %c0_i32_0 = arith.constant 0 : i32
    return %arg0, %arg1, %c0_i32 : i32, i32, i32
  }
}

module attributes {stable_mosaic.version = 11 : i64} {
  func.func @_convk1_relu_bn_kernel(%arg0: i32, %arg1: i32, %arg2: memref<1x320x4xbf16, #tpu.memory_space<vmem>>, %arg3: memref<5x4x8xbf16, #tpu.memory_space<vmem>>, %arg4: memref<1x8xf32, #tpu.memory_space<vmem>>, %arg5: memref<1x8xf32, #tpu.memory_space<vmem>>, %arg6: memref<1x8xf32, #tpu.memory_space<vmem>>, %arg7: memref<1x128x8xf32, #tpu.memory_space<vmem>>) attributes {dimension_semantics = [#tpu.dimension_semantics<parallel>, #tpu.dimension_semantics<parallel>], iteration_bounds = array<i64: 2, 2>, scalar_prefetch = 0 : i64, scratch_operands = 0 : i64, tpu.core_type = #tpu.core_type<tc>, window_params = [{transform_indices = @transform_0, window_bounds = array<i64: 1, 320, 4>}, {pipeline_mode = #tpu.pipeline_mode<synchronous>, transform_indices = @transform_1, window_bounds = array<i64: 5, 4, 8>}, {pipeline_mode = #tpu.pipeline_mode<synchronous>, transform_indices = @transform_2, window_bounds = array<i64: 1, 8>}, {pipeline_mode = #tpu.pipeline_mode<synchronous>, transform_indices = @transform_3, window_bounds = array<i64: 1, 8>}, {pipeline_mode = #tpu.pipeline_mode<synchronous>, transform_indices = @transform_4, window_bounds = array<i64: 1, 8>}, {transform_indices = @transform_5, window_bounds = array<i64: 1, 128, 8>}]} {
    %c128_i32 = arith.constant 128 : i32
    %0 = arith.muli %arg1, %c128_i32 : i32
    %1 = tpu.assume_multiple %0, 16 : i32
    %cst = arith.constant 0.000000e+00 : f32
    %2 = vector.broadcast %cst : f32 to vector<128x8xf32>
    %c0_i32 = arith.constant 0 : i32
    %3 = arith.addi %1, %c0_i32 : i32
    %4 = tpu.assume_multiple %3, 16 : i32
    %c0 = arith.constant 0 : index
    %5 = arith.index_cast %4 : i32 to index
    %c0_0 = arith.constant 0 : index
    %6 = vector.load %arg2[%c0, %5, %c0_0] : memref<1x320x4xbf16, #tpu.memory_space<vmem>>, vector<1x128x4xbf16>
    %7 = vector.shape_cast %6 : vector<1x128x4xbf16> to vector<128x4xbf16>
    %c0_1 = arith.constant 0 : index
    %c0_2 = arith.constant 0 : index
    %c0_3 = arith.constant 0 : index
    %8 = vector.load %arg3[%c0_1, %c0_2, %c0_3] : memref<5x4x8xbf16, #tpu.memory_space<vmem>>, vector<1x4x8xbf16>
    %9 = vector.shape_cast %8 : vector<1x4x8xbf16> to vector<4x8xbf16>
    %cst_4 = arith.constant dense<0.000000e+00> : vector<128x8xf32>
    %10 = tpu.matmul %7, %9, %cst_4 {dimension_numbers = #tpu.dot_dimension_numbers<[1], [0], [0], [1], [0, 0, 1, 1], [], []>} : vector<128x4xbf16>, vector<4x8xbf16>, vector<128x8xf32> -> vector<128x8xf32>
    %11 = arith.addf %2, %10 : vector<128x8xf32>
    %c16_i32 = arith.constant 16 : i32
    %12 = arith.addi %1, %c16_i32 : i32
    %13 = tpu.assume_multiple %12, 16 : i32
    %c0_5 = arith.constant 0 : index
    %14 = arith.index_cast %13 : i32 to index
    %c0_6 = arith.constant 0 : index
    %15 = vector.load %arg2[%c0_5, %14, %c0_6] : memref<1x320x4xbf16, #tpu.memory_space<vmem>>, vector<1x128x4xbf16>
    %16 = vector.shape_cast %15 : vector<1x128x4xbf16> to vector<128x4xbf16>
    %c1 = arith.constant 1 : index
    %c0_7 = arith.constant 0 : index
    %c0_8 = arith.constant 0 : index
    %17 = vector.load %arg3[%c1, %c0_7, %c0_8] : memref<5x4x8xbf16, #tpu.memory_space<vmem>>, vector<1x4x8xbf16>
    %18 = vector.shape_cast %17 : vector<1x4x8xbf16> to vector<4x8xbf16>
    %cst_9 = arith.constant dense<0.000000e+00> : vector<128x8xf32>
    %19 = tpu.matmul %16, %18, %cst_9 {dimension_numbers = #tpu.dot_dimension_numbers<[1], [0], [0], [1], [0, 0, 1, 1], [], []>} : vector<128x4xbf16>, vector<4x8xbf16>, vector<128x8xf32> -> vector<128x8xf32>
    %20 = arith.addf %11, %19 : vector<128x8xf32>
    %c32_i32 = arith.constant 32 : i32
    %21 = arith.addi %1, %c32_i32 : i32
    %22 = tpu.assume_multiple %21, 16 : i32
    %c0_10 = arith.constant 0 : index
    %23 = arith.index_cast %22 : i32 to index
    %c0_11 = arith.constant 0 : index
    %24 = vector.load %arg2[%c0_10, %23, %c0_11] : memref<1x320x4xbf16, #tpu.memory_space<vmem>>, vector<1x128x4xbf16>
    %25 = vector.shape_cast %24 : vector<1x128x4xbf16> to vector<128x4xbf16>
    %c2 = arith.constant 2 : index
    %c0_12 = arith.constant 0 : index
    %c0_13 = arith.constant 0 : index
    %26 = vector.load %arg3[%c2, %c0_12, %c0_13] : memref<5x4x8xbf16, #tpu.memory_space<vmem>>, vector<1x4x8xbf16>
    %27 = vector.shape_cast %26 : vector<1x4x8xbf16> to vector<4x8xbf16>
    %cst_14 = arith.constant dense<0.000000e+00> : vector<128x8xf32>
    %28 = tpu.matmul %25, %27, %cst_14 {dimension_numbers = #tpu.dot_dimension_numbers<[1], [0], [0], [1], [0, 0, 1, 1], [], []>} : vector<128x4xbf16>, vector<4x8xbf16>, vector<128x8xf32> -> vector<128x8xf32>
    %29 = arith.addf %20, %28 : vector<128x8xf32>
    %c48_i32 = arith.constant 48 : i32
    %30 = arith.addi %1, %c48_i32 : i32
    %31 = tpu.assume_multiple %30, 16 : i32
    %c0_15 = arith.constant 0 : index
    %32 = arith.index_cast %31 : i32 to index
    %c0_16 = arith.constant 0 : index
    %33 = vector.load %arg2[%c0_15, %32, %c0_16] : memref<1x320x4xbf16, #tpu.memory_space<vmem>>, vector<1x128x4xbf16>
    %34 = vector.shape_cast %33 : vector<1x128x4xbf16> to vector<128x4xbf16>
    %c3 = arith.constant 3 : index
    %c0_17 = arith.constant 0 : index
    %c0_18 = arith.constant 0 : index
    %35 = vector.load %arg3[%c3, %c0_17, %c0_18] : memref<5x4x8xbf16, #tpu.memory_space<vmem>>, vector<1x4x8xbf16>
    %36 = vector.shape_cast %35 : vector<1x4x8xbf16> to vector<4x8xbf16>
    %cst_19 = arith.constant dense<0.000000e+00> : vector<128x8xf32>
    %37 = tpu.matmul %34, %36, %cst_19 {dimension_numbers = #tpu.dot_dimension_numbers<[1], [0], [0], [1], [0, 0, 1, 1], [], []>} : vector<128x4xbf16>, vector<4x8xbf16>, vector<128x8xf32> -> vector<128x8xf32>
    %38 = arith.addf %29, %37 : vector<128x8xf32>
    %c64_i32 = arith.constant 64 : i32
    %39 = arith.addi %1, %c64_i32 : i32
    %40 = tpu.assume_multiple %39, 16 : i32
    %c0_20 = arith.constant 0 : index
    %41 = arith.index_cast %40 : i32 to index
    %c0_21 = arith.constant 0 : index
    %42 = vector.load %arg2[%c0_20, %41, %c0_21] : memref<1x320x4xbf16, #tpu.memory_space<vmem>>, vector<1x128x4xbf16>
    %43 = vector.shape_cast %42 : vector<1x128x4xbf16> to vector<128x4xbf16>
    %c4 = arith.constant 4 : index
    %c0_22 = arith.constant 0 : index
    %c0_23 = arith.constant 0 : index
    %44 = vector.load %arg3[%c4, %c0_22, %c0_23] : memref<5x4x8xbf16, #tpu.memory_space<vmem>>, vector<1x4x8xbf16>
    %45 = vector.shape_cast %44 : vector<1x4x8xbf16> to vector<4x8xbf16>
    %cst_24 = arith.constant dense<0.000000e+00> : vector<128x8xf32>
    %46 = tpu.matmul %43, %45, %cst_24 {dimension_numbers = #tpu.dot_dimension_numbers<[1], [0], [0], [1], [0, 0, 1, 1], [], []>} : vector<128x4xbf16>, vector<4x8xbf16>, vector<128x8xf32> -> vector<128x8xf32>
    %47 = arith.addf %38, %46 : vector<128x8xf32>
    %c0_25 = arith.constant 0 : index
    %c0_26 = arith.constant 0 : index
    %48 = vector.load %arg4[%c0_25, %c0_26] : memref<1x8xf32, #tpu.memory_space<vmem>>, vector<1x8xf32>
    %49 = vector.broadcast %48 : vector<1x8xf32> to vector<128x8xf32>
    %50 = arith.addf %47, %49 : vector<128x8xf32>
    %cst_27 = arith.constant 0.000000e+00 : f32
    %51 = vector.broadcast %cst_27 : f32 to vector<128x8xf32>
    %52 = arith.maximumf %50, %51 : vector<128x8xf32>
    %c0_28 = arith.constant 0 : index
    %c0_29 = arith.constant 0 : index
    %53 = vector.load %arg5[%c0_28, %c0_29] : memref<1x8xf32, #tpu.memory_space<vmem>>, vector<1x8xf32>
    %54 = vector.broadcast %53 : vector<1x8xf32> to vector<128x8xf32>
    %55 = arith.mulf %52, %54 : vector<128x8xf32>
    %c0_30 = arith.constant 0 : index
    %c0_31 = arith.constant 0 : index
    %56 = vector.load %arg6[%c0_30, %c0_31] : memref<1x8xf32, #tpu.memory_space<vmem>>, vector<1x8xf32>
    %57 = vector.broadcast %56 : vector<1x8xf32> to vector<128x8xf32>
    %58 = arith.addf %55, %57 : vector<128x8xf32>
    %c0_32 = arith.constant 0 : index
    %c0_33 = arith.constant 0 : index
    %c0_34 = arith.constant 0 : index
    %59 = vector.load %arg7[%c0_32, %c0_33, %c0_34] : memref<1x128x8xf32, #tpu.memory_space<vmem>>, vector<1x128x8xf32>
    %60 = vector.shape_cast %59 : vector<1x128x8xf32> to vector<128x8xf32>
    %61 = vector.shape_cast %58 : vector<128x8xf32> to vector<1x128x8xf32>
    tpu.vector_store %arg7[%c0_32, %c0_33, %c0_34], %61 {strides = array<i32>} : memref<1x128x8xf32, #tpu.memory_space<vmem>>, vector<1x128x8xf32>,
    return
  }
  func.func @transform_0(%arg0: i32, %arg1: i32) -> (i32, i32, i32) {
    %c0_i32 = arith.constant 0 : i32
    %c0_i32_0 = arith.constant 0 : i32
    %c0_i32_1 = arith.constant 0 : i32
    return %arg0, %c0_i32, %c0_i32_0 : i32, i32, i32
  }
  func.func @transform_1(%arg0: i32, %arg1: i32) -> (i32, i32, i32) {
    %c0_i32 = arith.constant 0 : i32
    %c0_i32_0 = arith.constant 0 : i32
    %c0_i32_1 = arith.constant 0 : i32
    %c0_i32_2 = arith.constant 0 : i32
    return %c0_i32, %c0_i32_0, %c0_i32_1 : i32, i32, i32
  }
  func.func @transform_2(%arg0: i32, %arg1: i32) -> (i32, i32) {
    %c0_i32 = arith.constant 0 : i32
    %c0_i32_0 = arith.constant 0 : i32
    %c0_i32_1 = arith.constant 0 : i32
    return %c0_i32, %c0_i32_0 : i32, i32
  }
  func.func @transform_3(%arg0: i32, %arg1: i32) -> (i32, i32) {
    %c0_i32 = arith.constant 0 : i32
    %c0_i32_0 = arith.constant 0 : i32
    %c0_i32_1 = arith.constant 0 : i32
    return %c0_i32, %c0_i32_0 : i32, i32
  }
  func.func @transform_4(%arg0: i32, %arg1: i32) -> (i32, i32) {
    %c0_i32 = arith.constant 0 : i32
    %c0_i32_0 = arith.constant 0 : i32
    %c0_i32_1 = arith.constant 0 : i32
    return %c0_i32, %c0_i32_0 : i32, i32
  }
  func.func @transform_5(%arg0: i32, %arg1: i32) -> (i32, i32, i32) {
    %c0_i32 = arith.constant 0 : i32
    %c0_i32_0 = arith.constant 0 : i32
    return %arg0, %arg1, %c0_i32 : i32, i32, i32
  }
}

</mosaic_0001>

<llo_original>
// kernel: inception_forward.5
$region0: #{inception_forward.5}
  #allocation0 [shape = 'u32[]', space=smem, size = 0x4, offset = 0x4, fixed_abs, tag = 'smem constant byte address 0x4 - core index']
  #allocation1 [shape = 'u32[144,128]{1,0:T(1,128)}', space=vmem, size = 0x12000, scoped, tag = 'internal scratch']
  %s0 = inlined_call_operand.vmem [shape: bf16[2,288,4], index: 0, kind: input, shape index: {}]
  %s1 = inlined_call_operand.vmem [shape: bf16[3,4,8], index: 1, kind: input, shape index: {}]
  %s2 = inlined_call_operand.vmem [shape: f32[1,8], index: 2, kind: input, shape index: {}]
  %s3 = inlined_call_operand.vmem [shape: f32[1,8], index: 3, kind: input, shape index: {}]
  %s4 = inlined_call_operand.vmem [shape: f32[1,8], index: 4, kind: input, shape index: {}]
  %s5 = inlined_call_operand.vmem [shape: f32[2,256,8], index: 5, kind: output, shape index: {}]
  %s6 = sld [smem:[#allocation0]]
  $region53: #{inception_forward.5} parent=0
    _
  %s8 = ssub.s32 1, %s6
  %s9 = scalar_select 0, %s8, %s6
  loop: start=0, step=1, limit=6
  $region2: #{inception_forward.5} parent=0 // loop_pre_header
    _
  $region3: #{inception_forward.5} parent=0 // loop_header
    %s11 = sphi 0, %s15
    %p12 = scmp.ge.s32.totalorder %s11, 6
    %s18 = sphi 0, %s30
    %s19 = sphi 0, %s26
    %s20 = sphi 0, %s18
    %s21 = sphi 0, %s19
    %s22 = sphi 0, %s20
    %s23 = sphi 0, %s21
    %s33 = sphi 0, %s35
    %s36 = sphi 0, %s33
    %s37 = sphi 0, %s36
    %s53 = sphi 0, %s37
    %s57 = sphi 0, %s57
    %s59 = sphi 0, %s57
    %s60 = sphi 0, %s59
    %s74 = sphi 0, %s60
    %s78 = sphi 0, %s78
    %s80 = sphi 0, %s78
    %s81 = sphi 0, %s80
    %s95 = sphi 0, %s81
    %s99 = sphi 0, %s99
    %s101 = sphi 0, %s99
    %s102 = sphi 0, %s101
    %s116 = sphi 0, %s102
    %s120 = sphi 0, %s120
    %s122 = sphi 0, %s120
    %s123 = sphi 0, %s122
    %s137 = sphi 0, %s123
    %s145 = sphi 0, %s147
    %s148 = sphi 0, %s145
    %s149 = sphi 0, %s148
    %s165 = sphi 0, %s149
  $region4: #{inception_forward.5} parent=0 // loop_header_branch
    %14 = sbr.rel (%p12) target = $region8
  $region5: #{inception_forward.5} parent=0 // loop_body
    %s16 = ssub.s32 %s11, 1
    %s17 = ssub.s32 %s11, 2
    %s24 = sadd.s32 1, %s19
    %p25 = scmp.ge.s32.totalorder %s24, 2
    %s26 = scalar_select %p25, 0, %s24
    %s27 = sadd.s32 1, %s18
    %s28 = scalar_select %p25, %s27, %s18
    %p29 = scmp.ge.s32.totalorder %s28, 2
    %s30 = scalar_select %p29, 0, %s28
    %s31 = ssub.s32 %s18, %s30
    %p32 = scmp.eq.s32.totalorder %s31, 0
    %s34 = sadd.s32 %s33, 1
    %s35 = scalar_select %p32, %s33, %s34
    %p38 = pneg %p32
    %p39 = scmp.eq.s32.totalorder %s11, 3
    %p40 = por %p38, %p39
    %p41 = scmp.ne.s32.totalorder %s33, %s36
    %p42 = scmp.eq.s32.totalorder %s11, 0
    %p43 = por %p41, %p42
    %p44 = scmp.ne.s32.totalorder %s33, %s36
    %p45 = scmp.eq.s32.totalorder %s16, 3
    %p46 = por %p44, %p45
    %p47 = scmp.ne.s32.totalorder %s36, %s37
    %p48 = scmp.eq.s32.totalorder %s16, 0
    %p49 = por %p47, %p48
    %p50 = scmp.ne.s32.totalorder %s36, %s37
    %p51 = scmp.eq.s32.totalorder %s17, 3
    %p52 = por %p50, %p51
    %p54 = scmp.ne.s32.totalorder %s37, %s53
    %p55 = scmp.eq.s32.totalorder %s17, 0
    %p56 = por %p54, %p55
    %s58 = sadd.s32 %s57, 1
    %p61 = scmp.eq.s32.totalorder %s11, 3
    %p62 = scmp.ne.s32.totalorder %s57, %s59
    %p63 = scmp.eq.s32.totalorder %s11, 0
    %p64 = por %p62, %p63
    %p65 = scmp.ne.s32.totalorder %s57, %s59
    %p66 = scmp.eq.s32.totalorder %s16, 3
    %p67 = por %p65, %p66
    %p68 = scmp.ne.s32.totalorder %s59, %s60
    %p69 = scmp.eq.s32.totalorder %s16, 0
    %p70 = por %p68, %p69
    %p71 = scmp.ne.s32.totalorder %s59, %s60
    %p72 = scmp.eq.s32.totalorder %s17, 3
    %p73 = por %p71, %p72
    %p75 = scmp.ne.s32.totalorder %s60, %s74
    %p76 = scmp.eq.s32.totalorder %s17, 0
    %p77 = por %p75, %p76
    %s79 = sadd.s32 %s78, 1
    %p82 = scmp.eq.s32.totalorder %s11, 3
    %p83 = scmp.ne.s32.totalorder %s78, %s80
    %p84 = scmp.eq.s32.totalorder %s11, 0
    %p85 = por %p83, %p84
    %p86 = scmp.ne.s32.totalorder %s78, %s80
    %p87 = scmp.eq.s32.totalorder %s16, 3
    %p88 = por %p86, %p87
    %p89 = scmp.ne.s32.totalorder %s80, %s81
    %p90 = scmp.eq.s32.totalorder %s16, 0
    %p91 = por %p89, %p90
    %p92 = scmp.ne.s32.totalorder %s80, %s81
    %p93 = scmp.eq.s32.totalorder %s17, 3
    %p94 = por %p92, %p93
    %p96 = scmp.ne.s32.totalorder %s81, %s95
    %p97 = scmp.eq.s32.totalorder %s17, 0
    %p98 = por %p96, %p97
    %s100 = sadd.s32 %s99, 1
    %p103 = scmp.eq.s32.totalorder %s11, 3
    %p104 = scmp.ne.s32.totalorder %s99, %s101
    %p105 = scmp.eq.s32.totalorder %s11, 0
    %p106 = por %p104, %p105
    %p107 = scmp.ne.s32.totalorder %s99, %s101
    %p108 = scmp.eq.s32.totalorder %s16, 3
    %p109 = por %p107, %p108
    %p110 = scmp.ne.s32.totalorder %s101, %s102
    %p111 = scmp.eq.s32.totalorder %s16, 0
    %p112 = por %p110, %p111
    %p113 = scmp.ne.s32.totalorder %s101, %s102
    %p114 = scmp.eq.s32.totalorder %s17, 3
    %p115 = por %p113, %p114
    %p117 = scmp.ne.s32.totalorder %s102, %s116
    %p118 = scmp.eq.s32.totalorder %s17, 0
    %p119 = por %p117, %p118
    %s121 = sadd.s32 %s120, 1
    %p124 = scmp.eq.s32.totalorder %s11, 3
    %p125 = scmp.ne.s32.totalorder %s120, %s122
    %p126 = scmp.eq.s32.totalorder %s11, 0
    %p127 = por %p125, %p126
    %p128 = scmp.ne.s32.totalorder %s120, %s122
    %p129 = scmp.eq.s32.totalorder %s16, 3
    %p130 = por %p128, %p129
    %p131 = scmp.ne.s32.totalorder %s122, %s123
    %p132 = scmp.eq.s32.totalorder %s16, 0
    %p133 = por %p131, %p132
    %p134 = scmp.ne.s32.totalorder %s122, %s123
    %p135 = scmp.eq.s32.totalorder %s17, 3
    %p136 = por %p134, %p135
    %p138 = scmp.ne.s32.totalorder %s123, %s137
    %p139 = scmp.eq.s32.totalorder %s17, 0
    %p140 = por %p138, %p139
    %s141 = ssub.s32 %s18, %s30
    %s142 = ssub.s32 %s19, %s26
    %s143 = sor.u32 %s141, %s142
    %p144 = scmp.eq.s32.totalorder %s143, 0
    %s146 = sadd.s32 %s145, 1
    %s147 = scalar_select %p144, %s145, %s146
    %p150 = pneg %p144
    %p151 = scmp.eq.s32.totalorder %s11, 3
    %p152 = por %p150, %p151
    %p153 = scmp.ne.s32.totalorder %s145, %s148
    %p154 = scmp.eq.s32.totalorder %s11, 0
    %p155 = por %p153, %p154
    %p156 = scmp.ne.s32.totalorder %s145, %s148
    %p157 = scmp.eq.s32.totalorder %s16, 3
    %p158 = por %p156, %p157
    %p159 = scmp.ne.s32.totalorder %s148, %s149
    %p160 = scmp.eq.s32.totalorder %s16, 0
    %p161 = por %p159, %p160
    %p162 = scmp.ne.s32.totalorder %s148, %s149
    %p163 = scmp.eq.s32.totalorder %s17, 3
    %p164 = por %p162, %p163
    %p166 = scmp.ne.s32.totalorder %s149, %s165
    %p167 = scmp.eq.s32.totalorder %s17, 0
    %p168 = por %p166, %p167
    %p169 = scmp.le.s32.totalorder 1, %s11
    %p170 = scmp.lt.s32.totalorder %s11, 5
    %p171 = pnand %p169, %p170
    %p172 = pneg %p171
    // Predicated region
    $region9: #{inception_forward.5} parent=5 // pred_check
      _
    $region10: #{inception_forward.5} parent=5 // pred_check_branch
      %174 = sbr.rel (%p171) target = $region12
    $region11: #{inception_forward.5} parent=5 // pred_region
      %s175 = ssub.s32 %s11, 1
      // Predicated region
      $region13: #{inception_forward.5} parent=11 // pred_check
        %p176 = pneg %p70
      $region14: #{inception_forward.5} parent=11 // pred_check_branch
        %178 = sbr.rel (%p176) target = $region16
      $region15: #{inception_forward.5} parent=11 // pred_region
        _
      $region16: #{inception_forward.5} parent=11 // pred_fallthru
        _
      // Predicated region
      $region17: #{inception_forward.5} parent=11 // pred_check
        %p179 = pneg %p91
      $region18: #{inception_forward.5} parent=11 // pred_check_branch
        %181 = sbr.rel (%p179) target = $region20
      $region19: #{inception_forward.5} parent=11 // pred_region
        _
      $region20: #{inception_forward.5} parent=11 // pred_fallthru
        _
      // Predicated region
      $region21: #{inception_forward.5} parent=11 // pred_check
        %p182 = pneg %p112
      $region22: #{inception_forward.5} parent=11 // pred_check_branch
        %184 = sbr.rel (%p182) target = $region24
      $region23: #{inception_forward.5} parent=11 // pred_region
        _
      $region24: #{inception_forward.5} parent=11 // pred_fallthru
        _
      // Predicated region
      $region25: #{inception_forward.5} parent=11 // pred_check
        %p185 = pneg %p133
      $region26: #{inception_forward.5} parent=11 // pred_check_branch
        %187 = sbr.rel (%p185) target = $region28
      $region27: #{inception_forward.5} parent=11 // pred_region
        _
      $region28: #{inception_forward.5} parent=11 // pred_fallthru
        _
    $region12: #{inception_forward.5} parent=5 // pred_fallthru
      _
    %p188 = scmp.lt.s32.totalorder %s11, 4
    // Predicated region
    $region29: #{inception_forward.5} parent=5 // pred_check
      %p189 = pneg %p188
    $region30: #{inception_forward.5} parent=5 // pred_check_branch
      %191 = sbr.rel (%p189) target = $region32
    $region31: #{inception_forward.5} parent=5 // pred_region
      // Predicated region
      $region33: #{inception_forward.5} parent=31 // pred_check
        %p192 = pneg %p43
      $region34: #{inception_forward.5} parent=31 // pred_check_branch
        %194 = sbr.rel (%p192) target = $region36
      $region35: #{inception_forward.5} parent=31 // pred_region
        %p195 = scmp.lt.s32.totalorder %s18, 1
        %s196 = scalar_select %p195, %s18, 1
        %s197 = smul.addr %s196, 36
        %s198 = smul.addr %s197, 4
        %s199 = scalar_lea.vmem %s0, %s198
      $region36: #{inception_forward.5} parent=31 // pred_fallthru
        _
    $region32: #{inception_forward.5} parent=5 // pred_fallthru
      _
    %p200 = scmp.le.s32.totalorder 1, %s11
    %p201 = scmp.lt.s32.totalorder %s11, 5
    %p202 = pnand %p200, %p201
    %p203 = pneg %p202
    // Predicated region
    $region37: #{inception_forward.5} parent=5 // pred_check
      _
    $region38: #{inception_forward.5} parent=5 // pred_check_branch
      %205 = sbr.rel (%p202) target = $region40
    $region39: #{inception_forward.5} parent=5 // pred_region
      %s206 = ssub.s32 %s11, 1
      %p207 = scmp.lt.s32.totalorder %s20, 1
      %s208 = scalar_select %p207, %s20, 1
      %s209 = smul.addr %s208, 36
      %s210 = smul.addr %s209, 4
      %s211 = scalar_lea.vmem %s0, %s210
      %p212 = pneg %p49
      %p213 = pneg %p46
      %p214 = pneg %p70
      %p215 = pneg %p67
      %p216 = pneg %p91
      %p217 = pneg %p88
      %p218 = pneg %p112
      %p219 = pneg %p109
      %p220 = pneg %p133
      %p221 = pneg %p130
      %p222 = pneg %p161
      %p223 = pneg %p158
      %s224 = smul.u32 16, %s21
      %p225 = scmp.lt.s32.totalorder %s20, 1
      %s226 = scalar_select %p225, %s20, 1
      %p227 = scmp.lt.s32.totalorder %s224, 31
      %s228 = scalar_select %p227, %s224, 31
      %s229 = smul.addr %s226, 32
      %s230 = sadd.s32 %s228, %s229
      %s231 = smul.addr %s230, 8
      %s232 = scalar_lea.vmem %s5, %s231
      %p233 = scmp.lt.s32.totalorder %s20, 1
      %s234 = scalar_select %p233, %s20, 1
      %s235 = smul.addr %s234, 36
      %s236 = smul.addr %s235, 4
      %s237 = scalar_lea.vmem %s0, %s236
      %s238 = smul.u32 16, %s21
      %p239 = scmp.lt.s32.totalorder %s20, 1
      %s240 = scalar_select %p239, %s20, 1
      %p241 = scmp.lt.s32.totalorder %s238, 31
      %s242 = scalar_select %p241, %s238, 31
      %s243 = smul.addr %s240, 32
      %s244 = sadd.s32 %s242, %s243
      %s245 = smul.addr %s244, 8
      %s246 = scalar_lea.vmem %s5, %s245
      %s247 = smul.u32 16, %s21
      %s249 = smul.u32 %s21, 128
      %s250 = sshra.s32 %s249, 3
      %s251 = sand.u32 %s249, 7
      %s252 = smul.addr %s250, 4
      %s253 = scalar_lea.vmem %s237, %s252
      %v254 = vld [vmem:[%s253] sm:$0xf]
      %v255 = vld [vmem:[%s253 + $0x4] sm:$0xf]
      %v256 = vld [vmem:[%s253 + $0x8] sm:$0xf]
      %v257 = vld [vmem:[%s253 + $0xc] sm:$0xf]
      %v258 = vld [vmem:[%s253 + $0x10] sm:$0xf]
      %v259 = vld [vmem:[%s253 + $0x14] sm:$0xf]
      %v260 = vld [vmem:[%s253 + $0x18] sm:$0xf]
      %v261 = vld [vmem:[%s253 + $0x1c] sm:$0xf]
      %v262 = vld [vmem:[%s253 + $0x20] sm:$0xf]
      %v263 = vld [vmem:[%s253 + $0x24] sm:$0xf]
      %v264 = vld [vmem:[%s253 + $0x28] sm:$0xf]
      %v265 = vld [vmem:[%s253 + $0x2c] sm:$0xf]
      %v266 = vld [vmem:[%s253 + $0x30] sm:$0xf]
      %v267 = vld [vmem:[%s253 + $0x34] sm:$0xf]
      %v268 = vld [vmem:[%s253 + $0x38] sm:$0xf]
      %v269 = vld [vmem:[%s253 + $0x3c] sm:$0xf]
      %v270 = vld [vmem:[%s1] sm:$0x3]
      %s271 = sadd.s32 %s249, 16
      %s272 = sshra.s32 %s271, 3
      %s273 = sand.u32 %s271, 7
      %s274 = smul.addr %s272, 4
      %s275 = scalar_lea.vmem %s237, %s274
      %v276 = vld [vmem:[%s275] sm:$0xf]
      %v277 = vld [vmem:[%s275 + $0x4] sm:$0xf]
      %v278 = vld [vmem:[%s275 + $0x8] sm:$0xf]
      %v279 = vld [vmem:[%s275 + $0xc] sm:$0xf]
      %v280 = vld [vmem:[%s275 + $0x10] sm:$0xf]
      %v281 = vld [vmem:[%s275 + $0x14] sm:$0xf]
      %v282 = vld [vmem:[%s275 + $0x18] sm:$0xf]
      %v283 = vld [vmem:[%s275 + $0x1c] sm:$0xf]
      %v284 = vld [vmem:[%s275 + $0x20] sm:$0xf]
      %v285 = vld [vmem:[%s275 + $0x24] sm:$0xf]
      %v286 = vld [vmem:[%s275 + $0x28] sm:$0xf]
      %v287 = vld [vmem:[%s275 + $0x2c] sm:$0xf]
      %v288 = vld [vmem:[%s275 + $0x30] sm:$0xf]
      %v289 = vld [vmem:[%s275 + $0x34] sm:$0xf]
      %v290 = vld [vmem:[%s275 + $0x38] sm:$0xf]
      %v291 = vld [vmem:[%s275 + $0x3c] sm:$0xf]
      %s292 = scalar_lea.vmem %s1, 2
      %v293 = vld [vmem:[%s292] sm:$0x3]
      %v310 = vunpack.c.l.b16 %v276
      %v311 = vunpack.c.l.b16 %v277
      %v312 = vunpack.c.l.b16 %v278
      %v313 = vunpack.c.l.b16 %v279
      %v314 = vunpack.c.l.b16 %v280
      %v315 = vunpack.c.l.b16 %v281
      %v316 = vunpack.c.l.b16 %v282
      %v317 = vunpack.c.l.b16 %v283
      %v318 = vunpack.c.l.b16 %v284
      %v319 = vunpack.c.l.b16 %v285
      %v320 = vunpack.c.l.b16 %v286
      %v321 = vunpack.c.l.b16 %v287
      %v322 = vunpack.c.l.b16 %v288
      %v323 = vunpack.c.l.b16 %v289
      %v324 = vunpack.c.l.b16 %v290
      %v325 = vunpack.c.l.b16 %v291
      %v326 = vpack.c.b16 %v311, %v310
      %v327 = vpack.c.b16 %v313, %v312
      %v328 = vpack.c.b16 %v315, %v314
      %v329 = vpack.c.b16 %v317, %v316
      %v330 = vpack.c.b16 %v319, %v318
      %v331 = vpack.c.b16 %v321, %v320
      %v332 = vpack.c.b16 %v323, %v322
      %v333 = vpack.c.b16 %v325, %v324
      %vm334 = vcmask 31744
      %v336 = vsel %vm334, %v326, 0
      %v339 = vsel %vm334, %v327, 0
      %v342 = vsel %vm334, %v328, 0
      %v345 = vsel %vm334, %v329, 0
      %v348 = vsel %vm334, %v330, 0
      %v351 = vsel %vm334, %v331, 0
      %v354 = vsel %vm334, %v332, 0
      %v357 = vsel %vm334, %v333, 0
      %vm359 = vcmask 1041408
      %v361 = vsel %vm359, %v293, 0
      %363 = vmatprep.subr.bf16.mxu0 0
      %364 = vmatpush1.bf16.msra.mxu0 %v361
      %365 = vmatprep.subr.bf16.mxu0 0
      %366 = vmatpush1.bf16.msra.mxu0 0
      %367 = vmatprep.subr.bf16.mxu0 0
      %368 = vmatpush1.bf16.msra.mxu0 0
      %369 = vmatprep.subr.bf16.mxu0 0
      %370 = vmatpush1.bf16.msra.mxu0 0
      %371 = vmatprep.subr.bf16.mxu0 0
      %372 = vmatpush1.bf16.msra.mxu0 0
      %373 = vmatprep.subr.bf16.mxu0 0
      %374 = vmatpush1.bf16.msra.mxu0 0
      %375 = vmatprep.subr.bf16.mxu0 0
      %376 = vmatpush1.bf16.msra.mxu0 0
      %377 = vmatprep.subr.bf16.mxu0 0
      %378 = vmatpush1.bf16.msra.mxu0 0
      %379 = vmatprep.subr.bf16.mxu0 0
      %380 = vmatpush1.bf16.msra.mxu0 0
      %381 = vmatprep.subr.bf16.mxu0 0
      %382 = vmatpush1.bf16.msra.mxu0 0
      %383 = vmatprep.subr.bf16.mxu0 0
      %384 = vmatpush1.bf16.msra.mxu0 0
      %385 = vmatprep.subr.bf16.mxu0 0
      %386 = vmatpush1.bf16.msra.mxu0 0
      %387 = vmatprep.subr.bf16.mxu0 0
      %388 = vmatpush1.bf16.msra.mxu0 0
      %389 = vmatprep.subr.bf16.mxu0 0
      %390 = vmatpush1.bf16.msra.mxu0 0
      %391 = vmatprep.subr.bf16.mxu0 0
      %392 = vmatpush1.bf16.msra.mxu0 0
      %393 = vmatprep.subr.bf16.mxu0 0
      %394 = vmatpush1.bf16.msra.mxu0 0
      %395 = vmatprep.mubr.bf16.mxu0 0
      %396 = vmatmul.mubr.bf16.gmra.mrb[0].mxu0 %v336
      %v397 = vpop.f32.mrb[0].mxu0
      %v398 = vadd.f32 0.0, %v397
      %v399 = vpop.f32.mrb[0].mxu0
      %v400 = vpop.f32.mrb[0].mxu0
      %v401 = vadd.f32 0.0, %v400
      %v402 = vpop.f32.mrb[0].mxu0
      %403 = vmatprep.mubr.bf16.mxu0 0
      %404 = vmatmul.mubr.bf16.gmra.mrb[0].mxu0 %v339
      %v405 = vpop.f32.mrb[0].mxu0
      %v406 = vadd.f32 0.0, %v405
      %v407 = vpop.f32.mrb[0].mxu0
      %v408 = vpop.f32.mrb[0].mxu0
      %v409 = vadd.f32 0.0, %v408
      %v410 = vpop.f32.mrb[0].mxu0
      %411 = vmatprep.mubr.bf16.mxu0 0
      %412 = vmatmul.mubr.bf16.gmra.mrb[0].mxu0 %v342
      %v413 = vpop.f32.mrb[0].mxu0
      %v414 = vadd.f32 0.0, %v413
      %v415 = vpop.f32.mrb[0].mxu0
      %v416 = vpop.f32.mrb[0].mxu0
      %v417 = vadd.f32 0.0, %v416
      %v418 = vpop.f32.mrb[0].mxu0
      %419 = vmatprep.mubr.bf16.mxu0 0
      %420 = vmatmul.mubr.bf16.gmra.mrb[0].mxu0 %v345
      %v421 = vpop.f32.mrb[0].mxu0
      %v422 = vadd.f32 0.0, %v421
      %v423 = vpop.f32.mrb[0].mxu0
      %v424 = vpop.f32.mrb[0].mxu0
      %v425 = vadd.f32 0.0, %v424
      %v426 = vpop.f32.mrb[0].mxu0
      %427 = vmatprep.mubr.bf16.mxu0 0
      %428 = vmatmul.mubr.bf16.gmra.mrb[0].mxu0 %v348
      %v429 = vpop.f32.mrb[0].mxu0
      %v430 = vadd.f32 0.0, %v429
      %v431 = vpop.f32.mrb[0].mxu0
      %v432 = vpop.f32.mrb[0].mxu0
      %v433 = vadd.f32 0.0, %v432
      %v434 = vpop.f32.mrb[0].mxu0
      %435 = vmatprep.mubr.bf16.mxu0 0
      %436 = vmatmul.mubr.bf16.gmra.mrb[0].mxu0 %v351
      %v437 = vpop.f32.mrb[0].mxu0
      %v438 = vadd.f32 0.0, %v437
      %v439 = vpop.f32.mrb[0].mxu0
      %v440 = vpop.f32.mrb[0].mxu0
      %v441 = vadd.f32 0.0, %v440
      %v442 = vpop.f32.mrb[0].mxu0
      %443 = vmatprep.mubr.bf16.mxu0 0
      %444 = vmatmul.mubr.bf16.gmra.mrb[0].mxu0 %v354
      %v445 = vpop.f32.mrb[0].mxu0
      %v446 = vadd.f32 0.0, %v445
      %v447 = vpop.f32.mrb[0].mxu0
      %v448 = vpop.f32.mrb[0].mxu0
      %v449 = vadd.f32 0.0, %v448
      %v450 = vpop.f32.mrb[0].mxu0
      %451 = vmatprep.mubr.bf16.mxu0 0
      %452 = vmatmul.mubr.bf16.gmra.mrb[0].mxu0 %v357
      %v453 = vpop.f32.mrb[0].mxu0
      %v454 = vadd.f32 0.0, %v453
      %v455 = vpop.f32.mrb[0].mxu0
      %v456 = vpop.f32.mrb[0].mxu0
      %v457 = vadd.f32 0.0, %v456
      %v458 = vpop.f32.mrb[0].mxu0
      %459 = vdwg.mxu0
      %v476 = vunpack.c.l.b16 %v254
      %v477 = vunpack.c.l.b16 %v255
      %v478 = vunpack.c.l.b16 %v256
      %v479 = vunpack.c.l.b16 %v257
      %v480 = vunpack.c.l.b16 %v258
      %v481 = vunpack.c.l.b16 %v259
      %v482 = vunpack.c.l.b16 %v260
      %v483 = vunpack.c.l.b16 %v261
      %v484 = vunpack.c.l.b16 %v262
      %v485 = vunpack.c.l.b16 %v263
      %v486 = vunpack.c.l.b16 %v264
      %v487 = vunpack.c.l.b16 %v265
      %v488 = vunpack.c.l.b16 %v266
      %v489 = vunpack.c.l.b16 %v267
      %v490 = vunpack.c.l.b16 %v268
      %v491 = vunpack.c.l.b16 %v269
      %v492 = vpack.c.b16 %v477, %v476
      %v493 = vpack.c.b16 %v479, %v478
      %v494 = vpack.c.b16 %v481, %v480
      %v495 = vpack.c.b16 %v483, %v482
      %v496 = vpack.c.b16 %v485, %v484
      %v497 = vpack.c.b16 %v487, %v486
      %v498 = vpack.c.b16 %v489, %v488
      %v499 = vpack.c.b16 %v491, %v490
      %v501 = vsel %vm334, %v492, 0
      %v504 = vsel %vm334, %v493, 0
      %v507 = vsel %vm334, %v494, 0
      %v510 = vsel %vm334, %v495, 0
      %v513 = vsel %vm334, %v496, 0
      %v516 = vsel %vm334, %v497, 0
      %v519 = vsel %vm334, %v498, 0
      %v522 = vsel %vm334, %v499, 0
      %v525 = vsel %vm359, %v270, 0
      %527 = vmatprep.subr.bf16.mxu0 0
      %528 = vmatpush1.bf16.msra.mxu0 %v525
      %529 = vmatprep.subr.bf16.mxu0 0
      %530 = vmatpush1.bf16.msra.mxu0 0
      %531 = vmatprep.subr.bf16.mxu0 0
      %532 = vmatpush1.bf16.msra.mxu0 0
      %533 = vmatprep.subr.bf16.mxu0 0
      %534 = vmatpush1.bf16.msra.mxu0 0
      %535 = vmatprep.subr.bf16.mxu0 0
      %536 = vmatpush1.bf16.msra.mxu0 0
      %537 = vmatprep.subr.bf16.mxu0 0
      %538 = vmatpush1.bf16.msra.mxu0 0
      %539 = vmatprep.subr.bf16.mxu0 0
      %540 = vmatpush1.bf16.msra.mxu0 0
      %541 = vmatprep.subr.bf16.mxu0 0
      %542 = vmatpush1.bf16.msra.mxu0 0
      %543 = vmatprep.subr.bf16.mxu0 0
      %544 = vmatpush1.bf16.msra.mxu0 0
      %545 = vmatprep.subr.bf16.mxu0 0
      %546 = vmatpush1.bf16.msra.mxu0 0
      %547 = vmatprep.subr.bf16.mxu0 0
      %548 = vmatpush1.bf16.msra.mxu0 0
      %549 = vmatprep.subr.bf16.mxu0 0
      %550 = vmatpush1.bf16.msra.mxu0 0
      %551 = vmatprep.subr.bf16.mxu0 0
      %552 = vmatpush1.bf16.msra.mxu0 0
      %553 = vmatprep.subr.bf16.mxu0 0
      %554 = vmatpush1.bf16.msra.mxu0 0
      %555 = vmatprep.subr.bf16.mxu0 0
      %556 = vmatpush1.bf16.msra.mxu0 0
      %557 = vmatprep.subr.bf16.mxu0 0
      %558 = vmatpush1.bf16.msra.mxu0 0
      %559 = vmatprep.mubr.bf16.mxu0 0
      %560 = vmatmul.mubr.bf16.gmra.mrb[0].mxu0 %v501
      %v561 = vpop.f32.mrb[0].mxu0
      %v562 = vadd.f32 %v398, %v561
      %v563 = vpop.f32.mrb[0].mxu0
      %v564 = vpop.f32.mrb[0].mxu0
      %v565 = vadd.f32 %v401, %v564
      %v566 = vpop.f32.mrb[0].mxu0
      %567 = vmatprep.mubr.bf16.mxu0 0
      %568 = vmatmul.mubr.bf16.gmra.mrb[0].mxu0 %v504
      %v569 = vpop.f32.mrb[0].mxu0
      %v570 = vadd.f32 %v406, %v569
      %v571 = vpop.f32.mrb[0].mxu0
      %v572 = vpop.f32.mrb[0].mxu0
      %v573 = vadd.f32 %v409, %v572
      %v574 = vpop.f32.mrb[0].mxu0
      %575 = vmatprep.mubr.bf16.mxu0 0
      %576 = vmatmul.mubr.bf16.gmra.mrb[0].mxu0 %v507
      %v577 = vpop.f32.mrb[0].mxu0
      %v578 = vadd.f32 %v414, %v577
      %v579 = vpop.f32.mrb[0].mxu0
      %v580 = vpop.f32.mrb[0].mxu0
      %v581 = vadd.f32 %v417, %v580
      %v582 = vpop.f32.mrb[0].mxu0
      %583 = vmatprep.mubr.bf16.mxu0 0
      %584 = vmatmul.mubr.bf16.gmra.mrb[0].mxu0 %v510
      %v585 = vpop.f32.mrb[0].mxu0
      %v586 = vadd.f32 %v422, %v585
      %v587 = vpop.f32.mrb[0].mxu0
      %v588 = vpop.f32.mrb[0].mxu0
      %v589 = vadd.f32 %v425, %v588
      %v590 = vpop.f32.mrb[0].mxu0
      %591 = vmatprep.mubr.bf16.mxu0 0
      %592 = vmatmul.mubr.bf16.gmra.mrb[0].mxu0 %v513
      %v593 = vpop.f32.mrb[0].mxu0
      %v594 = vadd.f32 %v430, %v593
      %v595 = vpop.f32.mrb[0].mxu0
      %v596 = vpop.f32.mrb[0].mxu0
      %v597 = vadd.f32 %v433, %v596
      %v598 = vpop.f32.mrb[0].mxu0
      %599 = vmatprep.mubr.bf16.mxu0 0
      %600 = vmatmul.mubr.bf16.gmra.mrb[0].mxu0 %v516
      %v601 = vpop.f32.mrb[0].mxu0
      %v602 = vadd.f32 %v438, %v601
      %v603 = vpop.f32.mrb[0].mxu0
      %v604 = vpop.f32.mrb[0].mxu0
      %v605 = vadd.f32 %v441, %v604
      %v606 = vpop.f32.mrb[0].mxu0
      %607 = vmatprep.mubr.bf16.mxu0 0
      %608 = vmatmul.mubr.bf16.gmra.mrb[0].mxu0 %v519
      %v609 = vpop.f32.mrb[0].mxu0
      %v610 = vadd.f32 %v446, %v609
      %v611 = vpop.f32.mrb[0].mxu0
      %v612 = vpop.f32.mrb[0].mxu0
      %v613 = vadd.f32 %v449, %v612
      %v614 = vpop.f32.mrb[0].mxu0
      %615 = vmatprep.mubr.bf16.mxu0 0
      %616 = vmatmul.mubr.bf16.gmra.mrb[0].mxu0 %v522
      %v617 = vpop.f32.mrb[0].mxu0
      %v618 = vadd.f32 %v454, %v617
      %v619 = vpop.f32.mrb[0].mxu0
      %v620 = vpop.f32.mrb[0].mxu0
      %v621 = vadd.f32 %v457, %v620
      %v622 = vpop.f32.mrb[0].mxu0
      %623 = vdwg.mxu0
      %s624 = sadd.s32 %s249, 32
      %s625 = sshra.s32 %s624, 3
      %s626 = sand.u32 %s624, 7
      %s627 = smul.addr %s625, 4
      %s628 = scalar_lea.vmem %s237, %s627
      %v629 = vld [vmem:[%s628] sm:$0xf]
      %v630 = vld [vmem:[%s628 + $0x4] sm:$0xf]
      %v631 = vld [vmem:[%s628 + $0x8] sm:$0xf]
      %v632 = vld [vmem:[%s628 + $0xc] sm:$0xf]
      %v633 = vld [vmem:[%s628 + $0x10] sm:$0xf]
      %v634 = vld [vmem:[%s628 + $0x14] sm:$0xf]
      %v635 = vld [vmem:[%s628 + $0x18] sm:$0xf]
      %v636 = vld [vmem:[%s628 + $0x1c] sm:$0xf]
      %v637 = vld [vmem:[%s628 + $0x20] sm:$0xf]
      %v638 = vld [vmem:[%s628 + $0x24] sm:$0xf]
      %v639 = vld [vmem:[%s628 + $0x28] sm:$0xf]
      %v640 = vld [vmem:[%s628 + $0x2c] sm:$0xf]
      %v641 = vld [vmem:[%s628 + $0x30] sm:$0xf]
      %v642 = vld [vmem:[%s628 + $0x34] sm:$0xf]
      %v643 = vld [vmem:[%s628 + $0x38] sm:$0xf]
      %v644 = vld [vmem:[%s628 + $0x3c] sm:$0xf]
      %s645 = scalar_lea.vmem %s1, 4
      %v646 = vld [vmem:[%s645] sm:$0x3]
      %v663 = vunpack.c.l.b16 %v629
      %v664 = vunpack.c.l.b16 %v630
      %v665 = vunpack.c.l.b16 %v631
      %v666 = vunpack.c.l.b16 %v632
      %v667 = vunpack.c.l.b16 %v633
      %v668 = vunpack.c.l.b16 %v634
      %v669 = vunpack.c.l.b16 %v635
      %v670 = vunpack.c.l.b16 %v636
      %v671 = vunpack.c.l.b16 %v637
      %v672 = vunpack.c.l.b16 %v638
      %v673 = vunpack.c.l.b16 %v639
      %v674 = vunpack.c.l.b16 %v640
      %v675 = vunpack.c.l.b16 %v641
      %v676 = vunpack.c.l.b16 %v642
      %v677 = vunpack.c.l.b16 %v643
      %v678 = vunpack.c.l.b16 %v644
      %v679 = vpack.c.b16 %v664, %v663
      %v680 = vpack.c.b16 %v666, %v665
      %v681 = vpack.c.b16 %v668, %v667
      %v682 = vpack.c.b16 %v670, %v669
      %v683 = vpack.c.b16 %v672, %v671
      %v684 = vpack.c.b16 %v674, %v673
      %v685 = vpack.c.b16 %v676, %v675
      %v686 = vpack.c.b16 %v678, %v677
      %v688 = vsel %vm334, %v679, 0
      %v691 = vsel %vm334, %v680, 0
      %v694 = vsel %vm334, %v681, 0
      %v697 = vsel %vm334, %v682, 0
      %v700 = vsel %vm334, %v683, 0
      %v703 = vsel %vm334, %v684, 0
      %v706 = vsel %vm334, %v685, 0
      %v709 = vsel %vm334, %v686, 0
      %v712 = vsel %vm359, %v646, 0
      %714 = vmatprep.subr.bf16.mxu0 0
      %715 = vmatpush1.bf16.msra.mxu0 %v712
      %716 = vmatprep.subr.bf16.mxu0 0
      %717 = vmatpush1.bf16.msra.mxu0 0
      %718 = vmatprep.subr.bf16.mxu0 0
      %719 = vmatpush1.bf16.msra.mxu0 0
      %720 = vmatprep.subr.bf16.mxu0 0
      %721 = vmatpush1.bf16.msra.mxu0 0
      %722 = vmatprep.subr.bf16.mxu0 0
      %723 = vmatpush1.bf16.msra.mxu0 0
      %724 = vmatprep.subr.bf16.mxu0 0
      %725 = vmatpush1.bf16.msra.mxu0 0
      %726 = vmatprep.subr.bf16.mxu0 0
      %727 = vmatpush1.bf16.msra.mxu0 0
      %728 = vmatprep.subr.bf16.mxu0 0
      %729 = vmatpush1.bf16.msra.mxu0 0
      %730 = vmatprep.subr.bf16.mxu0 0
      %731 = vmatpush1.bf16.msra.mxu0 0
      %732 = vmatprep.subr.bf16.mxu0 0
      %733 = vmatpush1.bf16.msra.mxu0 0
      %734 = vmatprep.subr.bf16.mxu0 0
      %735 = vmatpush1.bf16.msra.mxu0 0
      %736 = vmatprep.subr.bf16.mxu0 0
      %737 = vmatpush1.bf16.msra.mxu0 0
      %738 = vmatprep.subr.bf16.mxu0 0
      %739 = vmatpush1.bf16.msra.mxu0 0
      %740 = vmatprep.subr.bf16.mxu0 0
      %741 = vmatpush1.bf16.msra.mxu0 0
      %742 = vmatprep.subr.bf16.mxu0 0
      %743 = vmatpush1.bf16.msra.mxu0 0
      %744 = vmatprep.subr.bf16.mxu0 0
      %745 = vmatpush1.bf16.msra.mxu0 0
      %746 = vmatprep.mubr.bf16.mxu0 0
      %747 = vmatmul.mubr.bf16.gmra.mrb[0].mxu0 %v688
      %v748 = vpop.f32.mrb[0].mxu0
      %v749 = vadd.f32 0.0, %v748
      %v750 = vpop.f32.mrb[0].mxu0
      %v751 = vpop.f32.mrb[0].mxu0
      %v752 = vadd.f32 0.0, %v751
      %v753 = vpop.f32.mrb[0].mxu0
      %754 = vmatprep.mubr.bf16.mxu0 0
      %755 = vmatmul.mubr.bf16.gmra.mrb[0].mxu0 %v691
      %v756 = vpop.f32.mrb[0].mxu0
      %v757 = vadd.f32 0.0, %v756
      %v758 = vpop.f32.mrb[0].mxu0
      %v759 = vpop.f32.mrb[0].mxu0
      %v760 = vadd.f32 0.0, %v759
      %v761 = vpop.f32.mrb[0].mxu0
      %762 = vmatprep.mubr.bf16.mxu0 0
      %763 = vmatmul.mubr.bf16.gmra.mrb[0].mxu0 %v694
      %v764 = vpop.f32.mrb[0].mxu0
      %v765 = vadd.f32 0.0, %v764
      %v766 = vpop.f32.mrb[0].mxu0
      %v767 = vpop.f32.mrb[0].mxu0
      %v768 = vadd.f32 0.0, %v767
      %v769 = vpop.f32.mrb[0].mxu0
      %770 = vmatprep.mubr.bf16.mxu0 0
      %771 = vmatmul.mubr.bf16.gmra.mrb[0].mxu0 %v697
      %v772 = vpop.f32.mrb[0].mxu0
      %v773 = vadd.f32 0.0, %v772
      %v774 = vpop.f32.mrb[0].mxu0
      %v775 = vpop.f32.mrb[0].mxu0
      %v776 = vadd.f32 0.0, %v775
      %v777 = vpop.f32.mrb[0].mxu0
      %778 = vmatprep.mubr.bf16.mxu0 0
      %779 = vmatmul.mubr.bf16.gmra.mrb[0].mxu0 %v700
      %v780 = vpop.f32.mrb[0].mxu0
      %v781 = vadd.f32 0.0, %v780
      %v782 = vpop.f32.mrb[0].mxu0
      %v783 = vpop.f32.mrb[0].mxu0
      %v784 = vadd.f32 0.0, %v783
      %v785 = vpop.f32.mrb[0].mxu0
      %786 = vmatprep.mubr.bf16.mxu0 0
      %787 = vmatmul.mubr.bf16.gmra.mrb[0].mxu0 %v703
      %v788 = vpop.f32.mrb[0].mxu0
      %v789 = vadd.f32 0.0, %v788
      %v790 = vpop.f32.mrb[0].mxu0
      %v791 = vpop.f32.mrb[0].mxu0
      %v792 = vadd.f32 0.0, %v791
      %v793 = vpop.f32.mrb[0].mxu0
      %794 = vmatprep.mubr.bf16.mxu0 0
      %795 = vmatmul.mubr.bf16.gmra.mrb[0].mxu0 %v706
      %v796 = vpop.f32.mrb[0].mxu0
      %v797 = vadd.f32 0.0, %v796
      %v798 = vpop.f32.mrb[0].mxu0
      %v799 = vpop.f32.mrb[0].mxu0
      %v800 = vadd.f32 0.0, %v799
      %v801 = vpop.f32.mrb[0].mxu0
      %802 = vmatprep.mubr.bf16.mxu0 0
      %803 = vmatmul.mubr.bf16.gmra.mrb[0].mxu0 %v709
      %v804 = vpop.f32.mrb[0].mxu0
      %v805 = vadd.f32 0.0, %v804
      %v806 = vpop.f32.mrb[0].mxu0
      %v807 = vpop.f32.mrb[0].mxu0
      %v808 = vadd.f32 0.0, %v807
      %v809 = vpop.f32.mrb[0].mxu0
      %810 = vdwg.mxu0
      %v811 = vadd.f32 %v562, %v749
      %v812 = vadd.f32 %v565, %v752
      %v813 = vadd.f32 %v570, %v757
      %v814 = vadd.f32 %v573, %v760
      %v815 = vadd.f32 %v578, %v765
      %v816 = vadd.f32 %v581, %v768
      %v817 = vadd.f32 %v586, %v773
      %v818 = vadd.f32 %v589, %v776
      %v819 = vadd.f32 %v594, %v781
      %v820 = vadd.f32 %v597, %v784
      %v821 = vadd.f32 %v602, %v789
      %v822 = vadd.f32 %v605, %v792
      %v823 = vadd.f32 %v610, %v797
      %v824 = vadd.f32 %v613, %v800
      %v825 = vadd.f32 %v618, %v805
      %v826 = vadd.f32 %v621, %v808
      %v827 = vld [vmem:[%s2] sm:$0x1]
      %v829 = vlaneseq
      %v830 = vshrl.u32 %v829, 7
      %v831 = vsub.s32 0, %v830
      %v832 = vrot.slane %v827, %v831
      %v834 = vadd.f32 %v811, %v832
      %v835 = vadd.f32 %v812, %v832
      %v836 = vadd.f32 %v813, %v832
      %v837 = vadd.f32 %v814, %v832
      %v838 = vadd.f32 %v815, %v832
      %v839 = vadd.f32 %v816, %v832
      %v840 = vadd.f32 %v817, %v832
      %v841 = vadd.f32 %v818, %v832
      %v842 = vadd.f32 %v819, %v832
      %v843 = vadd.f32 %v820, %v832
      %v844 = vadd.f32 %v821, %v832
      %v845 = vadd.f32 %v822, %v832
      %v846 = vadd.f32 %v823, %v832
      %v847 = vadd.f32 %v824, %v832
      %v848 = vadd.f32 %v825, %v832
      %v849 = vadd.f32 %v826, %v832
      %v850 = vmax.f32 %v834, 0.0
      %v851 = vmax.f32 %v835, 0.0
      %v852 = vmax.f32 %v836, 0.0
      %v853 = vmax.f32 %v837, 0.0
      %v854 = vmax.f32 %v838, 0.0
      %v855 = vmax.f32 %v839, 0.0
      %v856 = vmax.f32 %v840, 0.0
      %v857 = vmax.f32 %v841, 0.0
      %v858 = vmax.f32 %v842, 0.0
      %v859 = vmax.f32 %v843, 0.0
      %v860 = vmax.f32 %v844, 0.0
      %v861 = vmax.f32 %v845, 0.0
      %v862 = vmax.f32 %v846, 0.0
      %v863 = vmax.f32 %v847, 0.0
      %v864 = vmax.f32 %v848, 0.0
      %v865 = vmax.f32 %v849, 0.0
      %v866 = vld [vmem:[%s3] sm:$0x1]
      %v868 = vlaneseq
      %v869 = vshrl.u32 %v868, 7
      %v870 = vsub.s32 0, %v869
      %v871 = vrot.slane %v866, %v870
      %v873 = vmul.f32 %v850, %v871
      %v874 = vmul.f32 %v851, %v871
      %v875 = vmul.f32 %v852, %v871
      %v876 = vmul.f32 %v853, %v871
      %v877 = vmul.f32 %v854, %v871
      %v878 = vmul.f32 %v855, %v871
      %v879 = vmul.f32 %v856, %v871
      %v880 = vmul.f32 %v857, %v871
      %v881 = vmul.f32 %v858, %v871
      %v882 = vmul.f32 %v859, %v871
      %v883 = vmul.f32 %v860, %v871
      %v884 = vmul.f32 %v861, %v871
      %v885 = vmul.f32 %v862, %v871
      %v886 = vmul.f32 %v863, %v871
      %v887 = vmul.f32 %v864, %v871
      %v888 = vmul.f32 %v865, %v871
      %v889 = vld [vmem:[%s4] sm:$0x1]
      %v891 = vlaneseq
      %v892 = vshrl.u32 %v891, 7
      %v893 = vsub.s32 0, %v892
      %v894 = vrot.slane %v889, %v893
      %v896 = vadd.f32 %v873, %v894
      %v897 = vadd.f32 %v874, %v894
      %v898 = vadd.f32 %v875, %v894
      %v899 = vadd.f32 %v876, %v894
      %v900 = vadd.f32 %v877, %v894
      %v901 = vadd.f32 %v878, %v894
      %v902 = vadd.f32 %v879, %v894
      %v903 = vadd.f32 %v880, %v894
      %v904 = vadd.f32 %v881, %v894
      %v905 = vadd.f32 %v882, %v894
      %v906 = vadd.f32 %v883, %v894
      %v907 = vadd.f32 %v884, %v894
      %v908 = vadd.f32 %v885, %v894
      %v909 = vadd.f32 %v886, %v894
      %v910 = vadd.f32 %v887, %v894
      %v911 = vadd.f32 %v888, %v894
      %vm912 = vcmask 64512
      %913 = vst.msk [vmem:[%s246] sm:$0xff] %vm912, %v896
      %914 = vst.msk [vmem:[%s246 + $0x8] sm:$0xff] %vm912, %v897
      %915 = vst.msk [vmem:[%s246 + $0x10] sm:$0xff] %vm912, %v898
      %916 = vst.msk [vmem:[%s246 + $0x18] sm:$0xff] %vm912, %v899
      %917 = vst.msk [vmem:[%s246 + $0x20] sm:$0xff] %vm912, %v900
      %918 = vst.msk [vmem:[%s246 + $0x28] sm:$0xff] %vm912, %v901
      %919 = vst.msk [vmem:[%s246 + $0x30] sm:$0xff] %vm912, %v902
      %920 = vst.msk [vmem:[%s246 + $0x38] sm:$0xff] %vm912, %v903
      %921 = vst.msk [vmem:[%s246 + $0x40] sm:$0xff] %vm912, %v904
      %922 = vst.msk [vmem:[%s246 + $0x48] sm:$0xff] %vm912, %v905
      %923 = vst.msk [vmem:[%s246 + $0x50] sm:$0xff] %vm912, %v906
      %924 = vst.msk [vmem:[%s246 + $0x58] sm:$0xff] %vm912, %v907
      %925 = vst.msk [vmem:[%s246 + $0x60] sm:$0xff] %vm912, %v908
      %926 = vst.msk [vmem:[%s246 + $0x68] sm:$0xff] %vm912, %v909
      %927 = vst.msk [vmem:[%s246 + $0x70] sm:$0xff] %vm912, %v910
      %928 = vst.msk [vmem:[%s246 + $0x78] sm:$0xff] %vm912, %v911
      %s929 = smul.u32 16, %s21
      %p930 = scmp.lt.s32.totalorder %s20, 1
      %s931 = scalar_select %p930, %s20, 1
      %p932 = scmp.lt.s32.totalorder %s929, 31
      %s933 = scalar_select %p932, %s929, 31
      %s934 = smul.addr %s931, 32
      %s935 = sadd.s32 %s933, %s934
      %s936 = smul.addr %s935, 8
      %s937 = scalar_lea.vmem %s5, %s936
      // Predicated region
      $region41: #{inception_forward.5} parent=39 // pred_check
        %p938 = pneg %p158
      $region42: #{inception_forward.5} parent=39 // pred_check_branch
        %940 = sbr.rel (%p938) target = $region44
      $region43: #{inception_forward.5} parent=39 // pred_region
        %s941 = smul.u32 16, %s21
      $region44: #{inception_forward.5} parent=39 // pred_fallthru
        _
    $region40: #{inception_forward.5} parent=5 // pred_fallthru
      _
    %p942 = scmp.le.s32.totalorder 2, %s11
    // Predicated region
    $region45: #{inception_forward.5} parent=5 // pred_check
      %p943 = pneg %p942
    $region46: #{inception_forward.5} parent=5 // pred_check_branch
      %945 = sbr.rel (%p943) target = $region48
    $region47: #{inception_forward.5} parent=5 // pred_region
      %s946 = ssub.s32 %s11, 2
      // Predicated region
      $region49: #{inception_forward.5} parent=47 // pred_check
        %p947 = pneg %p164
      $region50: #{inception_forward.5} parent=47 // pred_check_branch
        %949 = sbr.rel (%p947) target = $region52
      $region51: #{inception_forward.5} parent=47 // pred_region
        %s950 = smul.u32 16, %s23
        %p951 = scmp.lt.s32.totalorder %s22, 1
        %s952 = scalar_select %p951, %s22, 1
        %p953 = scmp.lt.s32.totalorder %s950, 31
        %s954 = scalar_select %p953, %s950, 31
        %s955 = smul.addr %s952, 32
        %s956 = sadd.s32 %s954, %s955
        %s957 = smul.addr %s956, 8
        %s958 = scalar_lea.vmem %s5, %s957
      $region52: #{inception_forward.5} parent=47 // pred_fallthru
        _
    $region48: #{inception_forward.5} parent=5 // pred_fallthru
      _
  $region6: #{inception_forward.5} parent=0 // loop_footer
    %s15 = sadd.s32 1, %s11
  $region7: #{inception_forward.5} parent=0 // loop_footer_branch
    %10 = sbr.rel target = $region3
  $region8: #{inception_forward.5} parent=0 // loop_exit
    _

// kernel: inception_forward.4
$region0: #{inception_forward.4}
  #allocation0 [shape = 'u32[]', space=smem, size = 0x4, offset = 0x4, fixed_abs, tag = 'smem constant byte address 0x4 - core index']
  #allocation1 [shape = 'u32[144,128]{1,0:T(1,128)}', space=vmem, size = 0x12000, scoped, tag = 'internal scratch']
  %s0 = inlined_call_operand.vmem [shape: bf16[512,4], index: 0, kind: input, shape index: {}]
  %s1 = inlined_call_operand.vmem [shape: bf16[4,20], index: 1, kind: input, shape index: {}]
  %s2 = inlined_call_operand.vmem [shape: f32[1,20], index: 2, kind: input, shape index: {}]
  %s3 = inlined_call_operand.vmem [shape: f32[1,20], index: 3, kind: input, shape index: {}]
  %s4 = inlined_call_operand.vmem [shape: f32[1,20], index: 4, kind: input, shape index: {}]
  %s5 = inlined_call_operand.vmem [shape: f32[512,8], index: 5, kind: output, shape index: {0}]
  %s6 = inlined_call_operand.vmem [shape: bf16[512,4], index: 6, kind: output, shape index: {1}]
  %s7 = inlined_call_operand.vmem [shape: bf16[512,4], index: 7, kind: output, shape index: {2}]
  %s8 = inlined_call_operand.vmem [shape: bf16[512,4], index: 8, kind: output, shape index: {3}]
  %9 = xla_tuple %s5, %s6, %s7, %s8
  %s10 = sld [smem:[#allocation0]]
  $region77: #{inception_forward.4} parent=0
    _
  %s12 = ssub.s32 1, %s10
  %s13 = scalar_select 0, %s12, %s10
  loop: start=0, step=1, limit=4
  $region2: #{inception_forward.4} parent=0 // loop_pre_header
    _
  $region3: #{inception_forward.4} parent=0 // loop_header
    %s15 = sphi 0, %s19
    %p16 = scmp.ge.s32.totalorder %s15, 4
    %s25 = sphi 0, %s27
    %s28 = sphi 0, %s25
    %s29 = sphi 0, %s28
    %s45 = sphi 0, %s29
    %s49 = sphi 0, %s49
    %s51 = sphi 0, %s49
    %s52 = sphi 0, %s51
    %s66 = sphi 0, %s52
    %s70 = sphi 0, %s70
    %s72 = sphi 0, %s70
    %s73 = sphi 0, %s72
    %s87 = sphi 0, %s73
    %s91 = sphi 0, %s91
    %s93 = sphi 0, %s91
    %s94 = sphi 0, %s93
    %s108 = sphi 0, %s94
    %s112 = sphi 0, %s112
    %s114 = sphi 0, %s112
    %s115 = sphi 0, %s114
    %s129 = sphi 0, %s115
    %s135 = sphi 0, %s137
    %s138 = sphi 0, %s135
    %s139 = sphi 0, %s138
    %s155 = sphi 0, %s139
    %s161 = sphi 0, %s163
    %s164 = sphi 0, %s161
    %s165 = sphi 0, %s164
    %s181 = sphi 0, %s165
    %s187 = sphi 0, %s189
    %s190 = sphi 0, %s187
    %s191 = sphi 0, %s190
    %s207 = sphi 0, %s191
    %s213 = sphi 0, %s215
    %s216 = sphi 0, %s213
    %s217 = sphi 0, %s216
    %s233 = sphi 0, %s217
  $region4: #{inception_forward.4} parent=0 // loop_header_branch
    %18 = sbr.rel (%p16) target = $region8
  $region5: #{inception_forward.4} parent=0 // loop_body
    %s20 = ssub.s32 %s15, 1
    %s21 = ssub.s32 %s15, 2
    %s22 = sadd.s32 %s15, 1
    %s23 = ssub.s32 %s15, %s22
    %p24 = scmp.eq.s32.totalorder %s23, 0
    %s26 = sadd.s32 %s25, 1
    %s27 = scalar_select %p24, %s25, %s26
    %p30 = pneg %p24
    %p31 = scmp.eq.s32.totalorder %s15, 1
    %p32 = por %p30, %p31
    %p33 = scmp.ne.s32.totalorder %s25, %s28
    %p34 = scmp.eq.s32.totalorder %s15, 0
    %p35 = por %p33, %p34
    %p36 = scmp.ne.s32.totalorder %s25, %s28
    %p37 = scmp.eq.s32.totalorder %s20, 1
    %p38 = por %p36, %p37
    %p39 = scmp.ne.s32.totalorder %s28, %s29
    %p40 = scmp.eq.s32.totalorder %s20, 0
    %p41 = por %p39, %p40
    %p42 = scmp.ne.s32.totalorder %s28, %s29
    %p43 = scmp.eq.s32.totalorder %s21, 1
    %p44 = por %p42, %p43
    %p46 = scmp.ne.s32.totalorder %s29, %s45
    %p47 = scmp.eq.s32.totalorder %s21, 0
    %p48 = por %p46, %p47
    %s50 = sadd.s32 %s49, 1
    %p53 = scmp.eq.s32.totalorder %s15, 1
    %p54 = scmp.ne.s32.totalorder %s49, %s51
    %p55 = scmp.eq.s32.totalorder %s15, 0
    %p56 = por %p54, %p55
    %p57 = scmp.ne.s32.totalorder %s49, %s51
    %p58 = scmp.eq.s32.totalorder %s20, 1
    %p59 = por %p57, %p58
    %p60 = scmp.ne.s32.totalorder %s51, %s52
    %p61 = scmp.eq.s32.totalorder %s20, 0
    %p62 = por %p60, %p61
    %p63 = scmp.ne.s32.totalorder %s51, %s52
    %p64 = scmp.eq.s32.totalorder %s21, 1
    %p65 = por %p63, %p64
    %p67 = scmp.ne.s32.totalorder %s52, %s66
    %p68 = scmp.eq.s32.totalorder %s21, 0
    %p69 = por %p67, %p68
    %s71 = sadd.s32 %s70, 1
    %p74 = scmp.eq.s32.totalorder %s15, 1
    %p75 = scmp.ne.s32.totalorder %s70, %s72
    %p76 = scmp.eq.s32.totalorder %s15, 0
    %p77 = por %p75, %p76
    %p78 = scmp.ne.s32.totalorder %s70, %s72
    %p79 = scmp.eq.s32.totalorder %s20, 1
    %p80 = por %p78, %p79
    %p81 = scmp.ne.s32.totalorder %s72, %s73
    %p82 = scmp.eq.s32.totalorder %s20, 0
    %p83 = por %p81, %p82
    %p84 = scmp.ne.s32.totalorder %s72, %s73
    %p85 = scmp.eq.s32.totalorder %s21, 1
    %p86 = por %p84, %p85
    %p88 = scmp.ne.s32.totalorder %s73, %s87
    %p89 = scmp.eq.s32.totalorder %s21, 0
    %p90 = por %p88, %p89
    %s92 = sadd.s32 %s91, 1
    %p95 = scmp.eq.s32.totalorder %s15, 1
    %p96 = scmp.ne.s32.totalorder %s91, %s93
    %p97 = scmp.eq.s32.totalorder %s15, 0
    %p98 = por %p96, %p97
    %p99 = scmp.ne.s32.totalorder %s91, %s93
    %p100 = scmp.eq.s32.totalorder %s20, 1
    %p101 = por %p99, %p100
    %p102 = scmp.ne.s32.totalorder %s93, %s94
    %p103 = scmp.eq.s32.totalorder %s20, 0
    %p104 = por %p102, %p103
    %p105 = scmp.ne.s32.totalorder %s93, %s94
    %p106 = scmp.eq.s32.totalorder %s21, 1
    %p107 = por %p105, %p106
    %p109 = scmp.ne.s32.totalorder %s94, %s108
    %p110 = scmp.eq.s32.totalorder %s21, 0
    %p111 = por %p109, %p110
    %s113 = sadd.s32 %s112, 1
    %p116 = scmp.eq.s32.totalorder %s15, 1
    %p117 = scmp.ne.s32.totalorder %s112, %s114
    %p118 = scmp.eq.s32.totalorder %s15, 0
    %p119 = por %p117, %p118
    %p120 = scmp.ne.s32.totalorder %s112, %s114
    %p121 = scmp.eq.s32.totalorder %s20, 1
    %p122 = por %p120, %p121
    %p123 = scmp.ne.s32.totalorder %s114, %s115
    %p124 = scmp.eq.s32.totalorder %s20, 0
    %p125 = por %p123, %p124
    %p126 = scmp.ne.s32.totalorder %s114, %s115
    %p127 = scmp.eq.s32.totalorder %s21, 1
    %p128 = por %p126, %p127
    %p130 = scmp.ne.s32.totalorder %s115, %s129
    %p131 = scmp.eq.s32.totalorder %s21, 0
    %p132 = por %p130, %p131
    %s133 = ssub.s32 %s15, %s22
    %p134 = scmp.eq.s32.totalorder %s133, 0
    %s136 = sadd.s32 %s135, 1
    %s137 = scalar_select %p134, %s135, %s136
    %p140 = pneg %p134
    %p141 = scmp.eq.s32.totalorder %s15, 1
    %p142 = por %p140, %p141
    %p143 = scmp.ne.s32.totalorder %s135, %s138
    %p144 = scmp.eq.s32.totalorder %s15, 0
    %p145 = por %p143, %p144
    %p146 = scmp.ne.s32.totalorder %s135, %s138
    %p147 = scmp.eq.s32.totalorder %s20, 1
    %p148 = por %p146, %p147
    %p149 = scmp.ne.s32.totalorder %s138, %s139
    %p150 = scmp.eq.s32.totalorder %s20, 0
    %p151 = por %p149, %p150
    %p152 = scmp.ne.s32.totalorder %s138, %s139
    %p153 = scmp.eq.s32.totalorder %s21, 1
    %p154 = por %p152, %p153
    %p156 = scmp.ne.s32.totalorder %s139, %s155
    %p157 = scmp.eq.s32.totalorder %s21, 0
    %p158 = por %p156, %p157
    %s159 = ssub.s32 %s15, %s22
    %p160 = scmp.eq.s32.totalorder %s159, 0
    %s162 = sadd.s32 %s161, 1
    %s163 = scalar_select %p160, %s161, %s162
    %p166 = pneg %p160
    %p167 = scmp.eq.s32.totalorder %s15, 1
    %p168 = por %p166, %p167
    %p169 = scmp.ne.s32.totalorder %s161, %s164
    %p170 = scmp.eq.s32.totalorder %s15, 0
    %p171 = por %p169, %p170
    %p172 = scmp.ne.s32.totalorder %s161, %s164
    %p173 = scmp.eq.s32.totalorder %s20, 1
    %p174 = por %p172, %p173
    %p175 = scmp.ne.s32.totalorder %s164, %s165
    %p176 = scmp.eq.s32.totalorder %s20, 0
    %p177 = por %p175, %p176
    %p178 = scmp.ne.s32.totalorder %s164, %s165
    %p179 = scmp.eq.s32.totalorder %s21, 1
    %p180 = por %p178, %p179
    %p182 = scmp.ne.s32.totalorder %s165, %s181
    %p183 = scmp.eq.s32.totalorder %s21, 0
    %p184 = por %p182, %p183
    %s185 = ssub.s32 %s15, %s22
    %p186 = scmp.eq.s32.totalorder %s185, 0
    %s188 = sadd.s32 %s187, 1
    %s189 = scalar_select %p186, %s187, %s188
    %p192 = pneg %p186
    %p193 = scmp.eq.s32.totalorder %s15, 1
    %p194 = por %p192, %p193
    %p195 = scmp.ne.s32.totalorder %s187, %s190
    %p196 = scmp.eq.s32.totalorder %s15, 0
    %p197 = por %p195, %p196
    %p198 = scmp.ne.s32.totalorder %s187, %s190
    %p199 = scmp.eq.s32.totalorder %s20, 1
    %p200 = por %p198, %p199
    %p201 = scmp.ne.s32.totalorder %s190, %s191
    %p202 = scmp.eq.s32.totalorder %s20, 0
    %p203 = por %p201, %p202
    %p204 = scmp.ne.s32.totalorder %s190, %s191
    %p205 = scmp.eq.s32.totalorder %s21, 1
    %p206 = por %p204, %p205
    %p208 = scmp.ne.s32.totalorder %s191, %s207
    %p209 = scmp.eq.s32.totalorder %s21, 0
    %p210 = por %p208, %p209
    %s211 = ssub.s32 %s15, %s22
    %p212 = scmp.eq.s32.totalorder %s211, 0
    %s214 = sadd.s32 %s213, 1
    %s215 = scalar_select %p212, %s213, %s214
    %p218 = pneg %p212
    %p219 = scmp.eq.s32.totalorder %s15, 1
    %p220 = por %p218, %p219
    %p221 = scmp.ne.s32.totalorder %s213, %s216
    %p222 = scmp.eq.s32.totalorder %s15, 0
    %p223 = por %p221, %p222
    %p224 = scmp.ne.s32.totalorder %s213, %s216
    %p225 = scmp.eq.s32.totalorder %s20, 1
    %p226 = por %p224, %p225
    %p227 = scmp.ne.s32.totalorder %s216, %s217
    %p228 = scmp.eq.s32.totalorder %s20, 0
    %p229 = por %p227, %p228
    %p230 = scmp.ne.s32.totalorder %s216, %s217
    %p231 = scmp.eq.s32.totalorder %s21, 1
    %p232 = por %p230, %p231
    %p234 = scmp.ne.s32.totalorder %s217, %s233
    %p235 = scmp.eq.s32.totalorder %s21, 0
    %p236 = por %p234, %p235
    %p237 = scmp.le.s32.totalorder 1, %s15
    %p238 = scmp.lt.s32.totalorder %s15, 3
    %p239 = pnand %p237, %p238
    %p240 = pneg %p239
    // Predicated region
    $region9: #{inception_forward.4} parent=5 // pred_check
      _
    $region10: #{inception_forward.4} parent=5 // pred_check_branch
      %242 = sbr.rel (%p239) target = $region12
    $region11: #{inception_forward.4} parent=5 // pred_region
      %s243 = ssub.s32 %s15, 1
      // Predicated region
      $region13: #{inception_forward.4} parent=11 // pred_check
        %p244 = pneg %p62
      $region14: #{inception_forward.4} parent=11 // pred_check_branch
        %246 = sbr.rel (%p244) target = $region16
      $region15: #{inception_forward.4} parent=11 // pred_region
        _
      $region16: #{inception_forward.4} parent=11 // pred_fallthru
        _
      // Predicated region
      $region17: #{inception_forward.4} parent=11 // pred_check
        %p247 = pneg %p83
      $region18: #{inception_forward.4} parent=11 // pred_check_branch
        %249 = sbr.rel (%p247) target = $region20
      $region19: #{inception_forward.4} parent=11 // pred_region
        _
      $region20: #{inception_forward.4} parent=11 // pred_fallthru
        _
      // Predicated region
      $region21: #{inception_forward.4} parent=11 // pred_check
        %p250 = pneg %p104
      $region22: #{inception_forward.4} parent=11 // pred_check_branch
        %252 = sbr.rel (%p250) target = $region24
      $region23: #{inception_forward.4} parent=11 // pred_region
        _
      $region24: #{inception_forward.4} parent=11 // pred_fallthru
        _
      // Predicated region
      $region25: #{inception_forward.4} parent=11 // pred_check
        %p253 = pneg %p125
      $region26: #{inception_forward.4} parent=11 // pred_check_branch
        %255 = sbr.rel (%p253) target = $region28
      $region27: #{inception_forward.4} parent=11 // pred_region
        _
      $region28: #{inception_forward.4} parent=11 // pred_fallthru
        _
    $region12: #{inception_forward.4} parent=5 // pred_fallthru
      _
    %p256 = scmp.lt.s32.totalorder %s15, 2
    // Predicated region
    $region29: #{inception_forward.4} parent=5 // pred_check
      %p257 = pneg %p256
    $region30: #{inception_forward.4} parent=5 // pred_check_branch
      %259 = sbr.rel (%p257) target = $region32
    $region31: #{inception_forward.4} parent=5 // pred_region
      // Predicated region
      $region33: #{inception_forward.4} parent=31 // pred_check
        %p260 = pneg %p35
      $region34: #{inception_forward.4} parent=31 // pred_check_branch
        %262 = sbr.rel (%p260) target = $region36
      $region35: #{inception_forward.4} parent=31 // pred_region
        %s263 = smul.u32 32, %s15
        %p264 = scmp.lt.s32.totalorder %s263, 63
        %s265 = scalar_select %p264, %s263, 63
        %s266 = smul.addr %s265, 4
        %s267 = scalar_lea.vmem %s0, %s266
        %s268 = smul.u32 32, %s15
      $region36: #{inception_forward.4} parent=31 // pred_fallthru
        _
    $region32: #{inception_forward.4} parent=5 // pred_fallthru
      _
    %p269 = scmp.le.s32.totalorder 1, %s15
    %p270 = scmp.lt.s32.totalorder %s15, 3
    %p271 = pnand %p269, %p270
    %p272 = pneg %p271
    // Predicated region
    $region37: #{inception_forward.4} parent=5 // pred_check
      _
    $region38: #{inception_forward.4} parent=5 // pred_check_branch
      %274 = sbr.rel (%p271) target = $region40
    $region39: #{inception_forward.4} parent=5 // pred_region
      %s275 = ssub.s32 %s15, 1
      %s276 = smul.u32 32, %s20
      %p277 = scmp.lt.s32.totalorder %s276, 63
      %s278 = scalar_select %p277, %s276, 63
      %s279 = smul.addr %s278, 4
      %s280 = scalar_lea.vmem %s0, %s279
      %p281 = pneg %p41
      %p282 = pneg %p38
      %p283 = pneg %p62
      %p284 = pneg %p59
      %p285 = pneg %p83
      %p286 = pneg %p80
      %p287 = pneg %p104
      %p288 = pneg %p101
      %p289 = pneg %p125
      %p290 = pneg %p122
      %p291 = pneg %p151
      %p292 = pneg %p148
      %s293 = smul.u32 32, %s20
      %p294 = scmp.lt.s32.totalorder %s293, 63
      %s295 = scalar_select %p294, %s293, 63
      %s296 = smul.addr %s295, 8
      %s297 = scalar_lea.vmem %s5, %s296
      %p298 = pneg %p177
      %p299 = pneg %p174
      %s300 = smul.u32 32, %s20
      %p301 = scmp.lt.s32.totalorder %s300, 63
      %s302 = scalar_select %p301, %s300, 63
      %s303 = smul.addr %s302, 4
      %s304 = scalar_lea.vmem %s6, %s303
      %p305 = pneg %p203
      %p306 = pneg %p200
      %s307 = smul.u32 32, %s20
      %p308 = scmp.lt.s32.totalorder %s307, 63
      %s309 = scalar_select %p308, %s307, 63
      %s310 = smul.addr %s309, 4
      %s311 = scalar_lea.vmem %s7, %s310
      %p312 = pneg %p229
      %p313 = pneg %p226
      %s314 = smul.u32 32, %s20
      %p315 = scmp.lt.s32.totalorder %s314, 63
      %s316 = scalar_select %p315, %s314, 63
      %s317 = smul.addr %s316, 4
      %s318 = scalar_lea.vmem %s8, %s317
      %s319 = smul.u32 32, %s20
      %p320 = scmp.lt.s32.totalorder %s319, 63
      %s321 = scalar_select %p320, %s319, 63
      %s322 = smul.addr %s321, 4
      %s323 = scalar_lea.vmem %s0, %s322
      %s324 = smul.u32 32, %s20
      %s325 = smul.u32 32, %s20
      %p326 = scmp.lt.s32.totalorder %s325, 63
      %s327 = scalar_select %p326, %s325, 63
      %s328 = smul.addr %s327, 8
      %s329 = scalar_lea.vmem %s5, %s328
      %s330 = smul.u32 32, %s20
      %s331 = smul.u32 32, %s20
      %p332 = scmp.lt.s32.totalorder %s331, 63
      %s333 = scalar_select %p332, %s331, 63
      %s334 = smul.addr %s333, 4
      %s335 = scalar_lea.vmem %s6, %s334
      %s336 = smul.u32 32, %s20
      %s337 = smul.u32 32, %s20
      %p338 = scmp.lt.s32.totalorder %s337, 63
      %s339 = scalar_select %p338, %s337, 63
      %s340 = smul.addr %s339, 4
      %s341 = scalar_lea.vmem %s7, %s340
      %s342 = smul.u32 32, %s20
      %s343 = smul.u32 32, %s20
      %p344 = scmp.lt.s32.totalorder %s343, 63
      %s345 = scalar_select %p344, %s343, 63
      %s346 = smul.addr %s345, 4
      %s347 = scalar_lea.vmem %s8, %s346
      %s348 = smul.u32 32, %s20
      %v350 = vld [vmem:[%s323] sm:$0xf]
      %v351 = vld [vmem:[%s323 + $0x4] sm:$0xf]
      %v352 = vld [vmem:[%s323 + $0x8] sm:$0xf]
      %v353 = vld [vmem:[%s323 + $0xc] sm:$0xf]
      %v354 = vld [vmem:[%s323 + $0x10] sm:$0xf]
      %v355 = vld [vmem:[%s323 + $0x14] sm:$0xf]
      %v356 = vld [vmem:[%s323 + $0x18] sm:$0xf]
      %v357 = vld [vmem:[%s323 + $0x1c] sm:$0xf]
      %v358 = vld [vmem:[%s323 + $0x20] sm:$0xf]
      %v359 = vld [vmem:[%s323 + $0x24] sm:$0xf]
      %v360 = vld [vmem:[%s323 + $0x28] sm:$0xf]
      %v361 = vld [vmem:[%s323 + $0x2c] sm:$0xf]
      %v362 = vld [vmem:[%s323 + $0x30] sm:$0xf]
      %v363 = vld [vmem:[%s323 + $0x34] sm:$0xf]
      %v364 = vld [vmem:[%s323 + $0x38] sm:$0xf]
      %v365 = vld [vmem:[%s323 + $0x3c] sm:$0xf]
      %v366 = vld [vmem:[%s323 + $0x40] sm:$0xf]
      %v367 = vld [vmem:[%s323 + $0x44] sm:$0xf]
      %v368 = vld [vmem:[%s323 + $0x48] sm:$0xf]
      %v369 = vld [vmem:[%s323 + $0x4c] sm:$0xf]
      %v370 = vld [vmem:[%s323 + $0x50] sm:$0xf]
      %v371 = vld [vmem:[%s323 + $0x54] sm:$0xf]
      %v372 = vld [vmem:[%s323 + $0x58] sm:$0xf]
      %v373 = vld [vmem:[%s323 + $0x5c] sm:$0xf]
      %v374 = vld [vmem:[%s323 + $0x60] sm:$0xf]
      %v375 = vld [vmem:[%s323 + $0x64] sm:$0xf]
      %v376 = vld [vmem:[%s323 + $0x68] sm:$0xf]
      %v377 = vld [vmem:[%s323 + $0x6c] sm:$0xf]
      %v378 = vld [vmem:[%s323 + $0x70] sm:$0xf]
      %v379 = vld [vmem:[%s323 + $0x74] sm:$0xf]
      %v380 = vld [vmem:[%s323 + $0x78] sm:$0xf]
      %v381 = vld [vmem:[%s323 + $0x7c] sm:$0xf]
      %v382 = vld [vmem:[%s1] sm:$0x3]
      %v383 = vld [vmem:[%s2] sm:$0x1]
      %v385 = vlaneseq
      %v386 = vshrl.u32 %v385, 7
      %v387 = vsub.s32 0, %v386
      %v388 = vrot.slane %v383, %v387
      %v422 = vunpack.c.l.b16 %v350
      %v423 = vunpack.c.l.b16 %v351
      %v424 = vunpack.c.l.b16 %v352
      %v425 = vunpack.c.l.b16 %v353
      %v426 = vunpack.c.l.b16 %v354
      %v427 = vunpack.c.l.b16 %v355
      %v428 = vunpack.c.l.b16 %v356
      %v429 = vunpack.c.l.b16 %v357
      %v430 = vunpack.c.l.b16 %v358
      %v431 = vunpack.c.l.b16 %v359
      %v432 = vunpack.c.l.b16 %v360
      %v433 = vunpack.c.l.b16 %v361
      %v434 = vunpack.c.l.b16 %v362
      %v435 = vunpack.c.l.b16 %v363
      %v436 = vunpack.c.l.b16 %v364
      %v437 = vunpack.c.l.b16 %v365
      %v438 = vunpack.c.l.b16 %v366
      %v439 = vunpack.c.l.b16 %v367
      %v440 = vunpack.c.l.b16 %v368
      %v441 = vunpack.c.l.b16 %v369
      %v442 = vunpack.c.l.b16 %v370
      %v443 = vunpack.c.l.b16 %v371
      %v444 = vunpack.c.l.b16 %v372
      %v445 = vunpack.c.l.b16 %v373
      %v446 = vunpack.c.l.b16 %v374
      %v447 = vunpack.c.l.b16 %v375
      %v448 = vunpack.c.l.b16 %v376
      %v449 = vunpack.c.l.b16 %v377
      %v450 = vunpack.c.l.b16 %v378
      %v451 = vunpack.c.l.b16 %v379
      %v452 = vunpack.c.l.b16 %v380
      %v453 = vunpack.c.l.b16 %v381
      %v454 = vpack.c.b16 %v423, %v422
      %v455 = vpack.c.b16 %v425, %v424
      %v456 = vpack.c.b16 %v427, %v426
      %v457 = vpack.c.b16 %v429, %v428
      %v458 = vpack.c.b16 %v431, %v430
      %v459 = vpack.c.b16 %v433, %v432
      %v460 = vpack.c.b16 %v435, %v434
      %v461 = vpack.c.b16 %v437, %v436
      %v462 = vpack.c.b16 %v439, %v438
      %v463 = vpack.c.b16 %v441, %v440
      %v464 = vpack.c.b16 %v443, %v442
      %v465 = vpack.c.b16 %v445, %v444
      %v466 = vpack.c.b16 %v447, %v446
      %v467 = vpack.c.b16 %v449, %v448
      %v468 = vpack.c.b16 %v451, %v450
      %v469 = vpack.c.b16 %v453, %v452
      %vm470 = vcmask 31744
      %v472 = vsel %vm470, %v454, 0
      %v475 = vsel %vm470, %v455, 0
      %v478 = vsel %vm470, %v456, 0
      %v481 = vsel %vm470, %v457, 0
      %v484 = vsel %vm470, %v458, 0
      %v487 = vsel %vm470, %v459, 0
      %v490 = vsel %vm470, %v460, 0
      %v493 = vsel %vm470, %v461, 0
      %v496 = vsel %vm470, %v462, 0
      %v499 = vsel %vm470, %v463, 0
      %v502 = vsel %vm470, %v464, 0
      %v505 = vsel %vm470, %v465, 0
      %v508 = vsel %vm470, %v466, 0
      %v511 = vsel %vm470, %v467, 0
      %v514 = vsel %vm470, %v468, 0
      %v517 = vsel %vm470, %v469, 0
      %vm519 = vcmask 1041408
      %v521 = vsel %vm519, %v382, 0
      %523 = vmatprep.subr.bf16.mxu0 0
      %524 = vmatpush1.bf16.msra.mxu0 %v521
      %525 = vmatprep.subr.bf16.mxu0 0
      %526 = vmatpush1.bf16.msra.mxu0 0
      %527 = vmatprep.subr.bf16.mxu0 0
      %528 = vmatpush1.bf16.msra.mxu0 0
      %529 = vmatprep.subr.bf16.mxu0 0
      %530 = vmatpush1.bf16.msra.mxu0 0
      %531 = vmatprep.subr.bf16.mxu0 0
      %532 = vmatpush1.bf16.msra.mxu0 0
      %533 = vmatprep.subr.bf16.mxu0 0
      %534 = vmatpush1.bf16.msra.mxu0 0
      %535 = vmatprep.subr.bf16.mxu0 0
      %536 = vmatpush1.bf16.msra.mxu0 0
      %537 = vmatprep.subr.bf16.mxu0 0
      %538 = vmatpush1.bf16.msra.mxu0 0
      %539 = vmatprep.subr.bf16.mxu0 0
      %540 = vmatpush1.bf16.msra.mxu0 0
      %541 = vmatprep.subr.bf16.mxu0 0
      %542 = vmatpush1.bf16.msra.mxu0 0
      %543 = vmatprep.subr.bf16.mxu0 0
      %544 = vmatpush1.bf16.msra.mxu0 0
      %545 = vmatprep.subr.bf16.mxu0 0
      %546 = vmatpush1.bf16.msra.mxu0 0
      %547 = vmatprep.subr.bf16.mxu0 0
      %548 = vmatpush1.bf16.msra.mxu0 0
      %549 = vmatprep.subr.bf16.mxu0 0
      %550 = vmatpush1.bf16.msra.mxu0 0
      %551 = vmatprep.subr.bf16.mxu0 0
      %552 = vmatpush1.bf16.msra.mxu0 0
      %553 = vmatprep.subr.bf16.mxu0 0
      %554 = vmatpush1.bf16.msra.mxu0 0
      %555 = vmatprep.mubr.bf16.mxu0 0
      %556 = vmatmul.mubr.bf16.gmra.mrb[0].mxu0 %v472
      %v557 = vpop.f32.mrb[0].mxu0
      %v558 = vadd.f32 %v388, %v557
      %v559 = vpop.f32.mrb[0].mxu0
      %v560 = vpop.f32.mrb[0].mxu0
      %v561 = vadd.f32 %v388, %v560
      %v562 = vpop.f32.mrb[0].mxu0
      %563 = vmatprep.mubr.bf16.mxu0 0
      %564 = vmatmul.mubr.bf16.gmra.mrb[0].mxu0 %v475
      %v565 = vpop.f32.mrb[0].mxu0
      %v566 = vadd.f32 %v388, %v565
      %v567 = vpop.f32.mrb[0].mxu0
      %v568 = vpop.f32.mrb[0].mxu0
      %v569 = vadd.f32 %v388, %v568
      %v570 = vpop.f32.mrb[0].mxu0
      %571 = vmatprep.mubr.bf16.mxu0 0
      %572 = vmatmul.mubr.bf16.gmra.mrb[0].mxu0 %v478
      %v573 = vpop.f32.mrb[0].mxu0
      %v574 = vadd.f32 %v388, %v573
      %v575 = vpop.f32.mrb[0].mxu0
      %v576 = vpop.f32.mrb[0].mxu0
      %v577 = vadd.f32 %v388, %v576
      %v578 = vpop.f32.mrb[0].mxu0
      %579 = vmatprep.mubr.bf16.mxu0 0
      %580 = vmatmul.mubr.bf16.gmra.mrb[0].mxu0 %v481
      %v581 = vpop.f32.mrb[0].mxu0
      %v582 = vadd.f32 %v388, %v581
      %v583 = vpop.f32.mrb[0].mxu0
      %v584 = vpop.f32.mrb[0].mxu0
      %v585 = vadd.f32 %v388, %v584
      %v586 = vpop.f32.mrb[0].mxu0
      %587 = vmatprep.mubr.bf16.mxu0 0
      %588 = vmatmul.mubr.bf16.gmra.mrb[0].mxu0 %v484
      %v589 = vpop.f32.mrb[0].mxu0
      %v590 = vadd.f32 %v388, %v589
      %v591 = vpop.f32.mrb[0].mxu0
      %v592 = vpop.f32.mrb[0].mxu0
      %v593 = vadd.f32 %v388, %v592
      %v594 = vpop.f32.mrb[0].mxu0
      %595 = vmatprep.mubr.bf16.mxu0 0
      %596 = vmatmul.mubr.bf16.gmra.mrb[0].mxu0 %v487
      %v597 = vpop.f32.mrb[0].mxu0
      %v598 = vadd.f32 %v388, %v597
      %v599 = vpop.f32.mrb[0].mxu0
      %v600 = vpop.f32.mrb[0].mxu0
      %v601 = vadd.f32 %v388, %v600
      %v602 = vpop.f32.mrb[0].mxu0
      %603 = vmatprep.mubr.bf16.mxu0 0
      %604 = vmatmul.mubr.bf16.gmra.mrb[0].mxu0 %v490
      %v605 = vpop.f32.mrb[0].mxu0
      %v606 = vadd.f32 %v388, %v605
      %v607 = vpop.f32.mrb[0].mxu0
      %v608 = vpop.f32.mrb[0].mxu0
      %v609 = vadd.f32 %v388, %v608
      %v610 = vpop.f32.mrb[0].mxu0
      %611 = vmatprep.mubr.bf16.mxu0 0
      %612 = vmatmul.mubr.bf16.gmra.mrb[0].mxu0 %v493
      %v613 = vpop.f32.mrb[0].mxu0
      %v614 = vadd.f32 %v388, %v613
      %v615 = vpop.f32.mrb[0].mxu0
      %v616 = vpop.f32.mrb[0].mxu0
      %v617 = vadd.f32 %v388, %v616
      %v618 = vpop.f32.mrb[0].mxu0
      %619 = vmatprep.mubr.bf16.mxu0 0
      %620 = vmatmul.mubr.bf16.gmra.mrb[0].mxu0 %v496
      %v621 = vpop.f32.mrb[0].mxu0
      %v622 = vadd.f32 %v388, %v621
      %v623 = vpop.f32.mrb[0].mxu0
      %v624 = vpop.f32.mrb[0].mxu0
      %v625 = vadd.f32 %v388, %v624
      %v626 = vpop.f32.mrb[0].mxu0
      %627 = vmatprep.mubr.bf16.mxu0 0
      %628 = vmatmul.mubr.bf16.gmra.mrb[0].mxu0 %v499
      %v629 = vpop.f32.mrb[0].mxu0
      %v630 = vadd.f32 %v388, %v629
      %v631 = vpop.f32.mrb[0].mxu0
      %v632 = vpop.f32.mrb[0].mxu0
      %v633 = vadd.f32 %v388, %v632
      %v634 = vpop.f32.mrb[0].mxu0
      %635 = vmatprep.mubr.bf16.mxu0 0
      %636 = vmatmul.mubr.bf16.gmra.mrb[0].mxu0 %v502
      %v637 = vpop.f32.mrb[0].mxu0
      %v638 = vadd.f32 %v388, %v637
      %v639 = vpop.f32.mrb[0].mxu0
      %v640 = vpop.f32.mrb[0].mxu0
      %v641 = vadd.f32 %v388, %v640
      %v642 = vpop.f32.mrb[0].mxu0
      %643 = vmatprep.mubr.bf16.mxu0 0
      %644 = vmatmul.mubr.bf16.gmra.mrb[0].mxu0 %v505
      %v645 = vpop.f32.mrb[0].mxu0
      %v646 = vadd.f32 %v388, %v645
      %v647 = vpop.f32.mrb[0].mxu0
      %v648 = vpop.f32.mrb[0].mxu0
      %v649 = vadd.f32 %v388, %v648
      %v650 = vpop.f32.mrb[0].mxu0
      %651 = vmatprep.mubr.bf16.mxu0 0
      %652 = vmatmul.mubr.bf16.gmra.mrb[0].mxu0 %v508
      %v653 = vpop.f32.mrb[0].mxu0
      %v654 = vadd.f32 %v388, %v653
      %v655 = vpop.f32.mrb[0].mxu0
      %v656 = vpop.f32.mrb[0].mxu0
      %v657 = vadd.f32 %v388, %v656
      %v658 = vpop.f32.mrb[0].mxu0
      %659 = vmatprep.mubr.bf16.mxu0 0
      %660 = vmatmul.mubr.bf16.gmra.mrb[0].mxu0 %v511
      %v661 = vpop.f32.mrb[0].mxu0
      %v662 = vadd.f32 %v388, %v661
      %v663 = vpop.f32.mrb[0].mxu0
      %v664 = vpop.f32.mrb[0].mxu0
      %v665 = vadd.f32 %v388, %v664
      %v666 = vpop.f32.mrb[0].mxu0
      %667 = vmatprep.mubr.bf16.mxu0 0
      %668 = vmatmul.mubr.bf16.gmra.mrb[0].mxu0 %v514
      %v669 = vpop.f32.mrb[0].mxu0
      %v670 = vadd.f32 %v388, %v669
      %v671 = vpop.f32.mrb[0].mxu0
      %v672 = vpop.f32.mrb[0].mxu0
      %v673 = vadd.f32 %v388, %v672
      %v674 = vpop.f32.mrb[0].mxu0
      %675 = vmatprep.mubr.bf16.mxu0 0
      %676 = vmatmul.mubr.bf16.gmra.mrb[0].mxu0 %v517
      %v677 = vpop.f32.mrb[0].mxu0
      %v678 = vadd.f32 %v388, %v677
      %v679 = vpop.f32.mrb[0].mxu0
      %v680 = vpop.f32.mrb[0].mxu0
      %v681 = vadd.f32 %v388, %v680
      %v682 = vpop.f32.mrb[0].mxu0
      %683 = vdwg.mxu0
      %v684 = vmax.f32 %v558, 0.0
      %v685 = vmax.f32 %v561, 0.0
      %v686 = vmax.f32 %v566, 0.0
      %v687 = vmax.f32 %v569, 0.0
      %v688 = vmax.f32 %v574, 0.0
      %v689 = vmax.f32 %v577, 0.0
      %v690 = vmax.f32 %v582, 0.0
      %v691 = vmax.f32 %v585, 0.0
      %v692 = vmax.f32 %v590, 0.0
      %v693 = vmax.f32 %v593, 0.0
      %v694 = vmax.f32 %v598, 0.0
      %v695 = vmax.f32 %v601, 0.0
      %v696 = vmax.f32 %v606, 0.0
      %v697 = vmax.f32 %v609, 0.0
      %v698 = vmax.f32 %v614, 0.0
      %v699 = vmax.f32 %v617, 0.0
      %v700 = vmax.f32 %v622, 0.0
      %v701 = vmax.f32 %v625, 0.0
      %v702 = vmax.f32 %v630, 0.0
      %v703 = vmax.f32 %v633, 0.0
      %v704 = vmax.f32 %v638, 0.0
      %v705 = vmax.f32 %v641, 0.0
      %v706 = vmax.f32 %v646, 0.0
      %v707 = vmax.f32 %v649, 0.0
      %v708 = vmax.f32 %v654, 0.0
      %v709 = vmax.f32 %v657, 0.0
      %v710 = vmax.f32 %v662, 0.0
      %v711 = vmax.f32 %v665, 0.0
      %v712 = vmax.f32 %v670, 0.0
      %v713 = vmax.f32 %v673, 0.0
      %v714 = vmax.f32 %v678, 0.0
      %v715 = vmax.f32 %v681, 0.0
      %v716 = vld [vmem:[%s3] sm:$0x1]
      %v718 = vlaneseq
      %v719 = vshrl.u32 %v718, 7
      %v720 = vsub.s32 0, %v719
      %v721 = vrot.slane %v716, %v720
      %v723 = vmul.f32 %v684, %v721
      %v724 = vmul.f32 %v685, %v721
      %v725 = vmul.f32 %v686, %v721
      %v726 = vmul.f32 %v687, %v721
      %v727 = vmul.f32 %v688, %v721
      %v728 = vmul.f32 %v689, %v721
      %v729 = vmul.f32 %v690, %v721
      %v730 = vmul.f32 %v691, %v721
      %v731 = vmul.f32 %v692, %v721
      %v732 = vmul.f32 %v693, %v721
      %v733 = vmul.f32 %v694, %v721
      %v734 = vmul.f32 %v695, %v721
      %v735 = vmul.f32 %v696, %v721
      %v736 = vmul.f32 %v697, %v721
      %v737 = vmul.f32 %v698, %v721
      %v738 = vmul.f32 %v699, %v721
      %v739 = vmul.f32 %v700, %v721
      %v740 = vmul.f32 %v701, %v721
      %v741 = vmul.f32 %v702, %v721
      %v742 = vmul.f32 %v703, %v721
      %v743 = vmul.f32 %v704, %v721
      %v744 = vmul.f32 %v705, %v721
      %v745 = vmul.f32 %v706, %v721
      %v746 = vmul.f32 %v707, %v721
      %v747 = vmul.f32 %v708, %v721
      %v748 = vmul.f32 %v709, %v721
      %v749 = vmul.f32 %v710, %v721
      %v750 = vmul.f32 %v711, %v721
      %v751 = vmul.f32 %v712, %v721
      %v752 = vmul.f32 %v713, %v721
      %v753 = vmul.f32 %v714, %v721
      %v754 = vmul.f32 %v715, %v721
      %v755 = vld [vmem:[%s4] sm:$0x1]
      %v757 = vlaneseq
      %v758 = vshrl.u32 %v757, 7
      %v759 = vsub.s32 0, %v758
      %v760 = vrot.slane %v755, %v759
      %v762 = vadd.f32 %v723, %v760
      %v763 = vadd.f32 %v724, %v760
      %v764 = vadd.f32 %v725, %v760
      %v765 = vadd.f32 %v726, %v760
      %v766 = vadd.f32 %v727, %v760
      %v767 = vadd.f32 %v728, %v760
      %v768 = vadd.f32 %v729, %v760
      %v769 = vadd.f32 %v730, %v760
      %v770 = vadd.f32 %v731, %v760
      %v771 = vadd.f32 %v732, %v760
      %v772 = vadd.f32 %v733, %v760
      %v773 = vadd.f32 %v734, %v760
      %v774 = vadd.f32 %v735, %v760
      %v775 = vadd.f32 %v736, %v760
      %v776 = vadd.f32 %v737, %v760
      %v777 = vadd.f32 %v738, %v760
      %v778 = vadd.f32 %v739, %v760
      %v779 = vadd.f32 %v740, %v760
      %v780 = vadd.f32 %v741, %v760
      %v781 = vadd.f32 %v742, %v760
      %v782 = vadd.f32 %v743, %v760
      %v783 = vadd.f32 %v744, %v760
      %v784 = vadd.f32 %v745, %v760
      %v785 = vadd.f32 %v746, %v760
      %v786 = vadd.f32 %v747, %v760
      %v787 = vadd.f32 %v748, %v760
      %v788 = vadd.f32 %v749, %v760
      %v789 = vadd.f32 %v750, %v760
      %v790 = vadd.f32 %v751, %v760
      %v791 = vadd.f32 %v752, %v760
      %v792 = vadd.f32 %v753, %v760
      %v793 = vadd.f32 %v754, %v760
      %vm794 = vcmask 64512
      %795 = vst.msk [vmem:[%s329] sm:$0xff] %vm794, %v762
      %796 = vst.msk [vmem:[%s329 + $0x8] sm:$0xff] %vm794, %v763
      %797 = vst.msk [vmem:[%s329 + $0x10] sm:$0xff] %vm794, %v764
      %798 = vst.msk [vmem:[%s329 + $0x18] sm:$0xff] %vm794, %v765
      %799 = vst.msk [vmem:[%s329 + $0x20] sm:$0xff] %vm794, %v766
      %800 = vst.msk [vmem:[%s329 + $0x28] sm:$0xff] %vm794, %v767
      %801 = vst.msk [vmem:[%s329 + $0x30] sm:$0xff] %vm794, %v768
      %802 = vst.msk [vmem:[%s329 + $0x38] sm:$0xff] %vm794, %v769
      %803 = vst.msk [vmem:[%s329 + $0x40] sm:$0xff] %vm794, %v770
      %804 = vst.msk [vmem:[%s329 + $0x48] sm:$0xff] %vm794, %v771
      %805 = vst.msk [vmem:[%s329 + $0x50] sm:$0xff] %vm794, %v772
      %806 = vst.msk [vmem:[%s329 + $0x58] sm:$0xff] %vm794, %v773
      %807 = vst.msk [vmem:[%s329 + $0x60] sm:$0xff] %vm794, %v774
      %808 = vst.msk [vmem:[%s329 + $0x68] sm:$0xff] %vm794, %v775
      %809 = vst.msk [vmem:[%s329 + $0x70] sm:$0xff] %vm794, %v776
      %810 = vst.msk [vmem:[%s329 + $0x78] sm:$0xff] %vm794, %v777
      %811 = vst.msk [vmem:[%s329 + $0x80] sm:$0xff] %vm794, %v778
      %812 = vst.msk [vmem:[%s329 + $0x88] sm:$0xff] %vm794, %v779
      %813 = vst.msk [vmem:[%s329 + $0x90] sm:$0xff] %vm794, %v780
      %814 = vst.msk [vmem:[%s329 + $0x98] sm:$0xff] %vm794, %v781
      %815 = vst.msk [vmem:[%s329 + $0xa0] sm:$0xff] %vm794, %v782
      %816 = vst.msk [vmem:[%s329 + $0xa8] sm:$0xff] %vm794, %v783
      %817 = vst.msk [vmem:[%s329 + $0xb0] sm:$0xff] %vm794, %v784
      %818 = vst.msk [vmem:[%s329 + $0xb8] sm:$0xff] %vm794, %v785
      %819 = vst.msk [vmem:[%s329 + $0xc0] sm:$0xff] %vm794, %v786
      %820 = vst.msk [vmem:[%s329 + $0xc8] sm:$0xff] %vm794, %v787
      %821 = vst.msk [vmem:[%s329 + $0xd0] sm:$0xff] %vm794, %v788
      %822 = vst.msk [vmem:[%s329 + $0xd8] sm:$0xff] %vm794, %v789
      %823 = vst.msk [vmem:[%s329 + $0xe0] sm:$0xff] %vm794, %v790
      %824 = vst.msk [vmem:[%s329 + $0xe8] sm:$0xff] %vm794, %v791
      %825 = vst.msk [vmem:[%s329 + $0xf0] sm:$0xff] %vm794, %v792
      %826 = vst.msk [vmem:[%s329 + $0xf8] sm:$0xff] %vm794, %v793
      %v827 = vpack.c.bf16 %v763, %v762
      %v828 = vpack.c.bf16 %v765, %v764
      %v829 = vpack.c.bf16 %v767, %v766
      %v830 = vpack.c.bf16 %v769, %v768
      %v831 = vpack.c.bf16 %v771, %v770
      %v832 = vpack.c.bf16 %v773, %v772
      %v833 = vpack.c.bf16 %v775, %v774
      %v834 = vpack.c.bf16 %v777, %v776
      %v835 = vpack.c.bf16 %v779, %v778
      %v836 = vpack.c.bf16 %v781, %v780
      %v837 = vpack.c.bf16 %v783, %v782
      %v838 = vpack.c.bf16 %v785, %v784
      %v839 = vpack.c.bf16 %v787, %v786
      %v840 = vpack.c.bf16 %v789, %v788
      %v841 = vpack.c.bf16 %v791, %v790
      %v842 = vpack.c.bf16 %v793, %v792
      %v859 = vunpack.c.l.b16 %v827
      %v860 = vunpack.c.h.b16 %v827
      %v861 = vunpack.c.l.b16 %v828
      %v862 = vunpack.c.h.b16 %v828
      %v863 = vunpack.c.l.b16 %v829
      %v864 = vunpack.c.h.b16 %v829
      %v865 = vunpack.c.l.b16 %v830
      %v866 = vunpack.c.h.b16 %v830
      %v867 = vunpack.c.l.b16 %v831
      %v868 = vunpack.c.h.b16 %v831
      %v869 = vunpack.c.l.b16 %v832
      %v870 = vunpack.c.h.b16 %v832
      %v871 = vunpack.c.l.b16 %v833
      %v872 = vunpack.c.h.b16 %v833
      %v873 = vunpack.c.l.b16 %v834
      %v874 = vunpack.c.h.b16 %v834
      %v875 = vunpack.c.l.b16 %v835
      %v876 = vunpack.c.h.b16 %v835
      %v877 = vunpack.c.l.b16 %v836
      %v878 = vunpack.c.h.b16 %v836
      %v879 = vunpack.c.l.b16 %v837
      %v880 = vunpack.c.h.b16 %v837
      %v881 = vunpack.c.l.b16 %v838
      %v882 = vunpack.c.h.b16 %v838
      %v883 = vunpack.c.l.b16 %v839
      %v884 = vunpack.c.h.b16 %v839
      %v885 = vunpack.c.l.b16 %v840
      %v886 = vunpack.c.h.b16 %v840
      %v887 = vunpack.c.l.b16 %v841
      %v888 = vunpack.c.h.b16 %v841
      %v889 = vunpack.c.l.b16 %v842
      %v890 = vunpack.c.h.b16 %v842
      %v891 = vpack.c.b16 %v859, %v859
      %v892 = vpack.c.b16 %v860, %v860
      %v893 = vpack.c.b16 %v861, %v861
      %v894 = vpack.c.b16 %v862, %v862
      %v895 = vpack.c.b16 %v863, %v863
      %v896 = vpack.c.b16 %v864, %v864
      %v897 = vpack.c.b16 %v865, %v865
      %v898 = vpack.c.b16 %v866, %v866
      %v899 = vpack.c.b16 %v867, %v867
      %v900 = vpack.c.b16 %v868, %v868
      %v901 = vpack.c.b16 %v869, %v869
      %v902 = vpack.c.b16 %v870, %v870
      %v903 = vpack.c.b16 %v871, %v871
      %v904 = vpack.c.b16 %v872, %v872
      %v905 = vpack.c.b16 %v873, %v873
      %v906 = vpack.c.b16 %v874, %v874
      %v907 = vpack.c.b16 %v875, %v875
      %v908 = vpack.c.b16 %v876, %v876
      %v909 = vpack.c.b16 %v877, %v877
      %v910 = vpack.c.b16 %v878, %v878
      %v911 = vpack.c.b16 %v879, %v879
      %v912 = vpack.c.b16 %v880, %v880
      %v913 = vpack.c.b16 %v881, %v881
      %v914 = vpack.c.b16 %v882, %v882
      %v915 = vpack.c.b16 %v883, %v883
      %v916 = vpack.c.b16 %v884, %v884
      %v917 = vpack.c.b16 %v885, %v885
      %v918 = vpack.c.b16 %v886, %v886
      %v919 = vpack.c.b16 %v887, %v887
      %v920 = vpack.c.b16 %v888, %v888
      %v921 = vpack.c.b16 %v889, %v889
      %v922 = vpack.c.b16 %v890, %v890
      %923 = vrot.lane.b32.xlu0 %v891, 120
      %v924 = vpop.permute.xlu0 %923
      %925 = vrot.lane.b32.xlu0 %v892, 120
      %v926 = vpop.permute.xlu0 %925
      %927 = vrot.lane.b32.xlu0 %v893, 120
      %v928 = vpop.permute.xlu0 %927
      %929 = vrot.lane.b32.xlu0 %v894, 120
      %v930 = vpop.permute.xlu0 %929
      %931 = vrot.lane.b32.xlu0 %v895, 120
      %v932 = vpop.permute.xlu0 %931
      %933 = vrot.lane.b32.xlu0 %v896, 120
      %v934 = vpop.permute.xlu0 %933
      %935 = vrot.lane.b32.xlu0 %v897, 120
      %v936 = vpop.permute.xlu0 %935
      %937 = vrot.lane.b32.xlu0 %v898, 120
      %v938 = vpop.permute.xlu0 %937
      %939 = vrot.lane.b32.xlu0 %v899, 120
      %v940 = vpop.permute.xlu0 %939
      %941 = vrot.lane.b32.xlu0 %v900, 120
      %v942 = vpop.permute.xlu0 %941
      %943 = vrot.lane.b32.xlu0 %v901, 120
      %v944 = vpop.permute.xlu0 %943
      %945 = vrot.lane.b32.xlu0 %v902, 120
      %v946 = vpop.permute.xlu0 %945
      %947 = vrot.lane.b32.xlu0 %v903, 120
      %v948 = vpop.permute.xlu0 %947
      %949 = vrot.lane.b32.xlu0 %v904, 120
      %v950 = vpop.permute.xlu0 %949
      %951 = vrot.lane.b32.xlu0 %v905, 120
      %v952 = vpop.permute.xlu0 %951
      %953 = vrot.lane.b32.xlu0 %v906, 120
      %v954 = vpop.permute.xlu0 %953
      %955 = vrot.lane.b32.xlu0 %v907, 120
      %v956 = vpop.permute.xlu0 %955
      %957 = vrot.lane.b32.xlu0 %v908, 120
      %v958 = vpop.permute.xlu0 %957
      %959 = vrot.lane.b32.xlu0 %v909, 120
      %v960 = vpop.permute.xlu0 %959
      %961 = vrot.lane.b32.xlu0 %v910, 120
      %v962 = vpop.permute.xlu0 %961
      %963 = vrot.lane.b32.xlu0 %v911, 120
      %v964 = vpop.permute.xlu0 %963
      %965 = vrot.lane.b32.xlu0 %v912, 120
      %v966 = vpop.permute.xlu0 %965
      %967 = vrot.lane.b32.xlu0 %v913, 120
      %v968 = vpop.permute.xlu0 %967
      %969 = vrot.lane.b32.xlu0 %v914, 120
      %v970 = vpop.permute.xlu0 %969
      %971 = vrot.lane.b32.xlu0 %v915, 120
      %v972 = vpop.permute.xlu0 %971
      %973 = vrot.lane.b32.xlu0 %v916, 120
      %v974 = vpop.permute.xlu0 %973
      %975 = vrot.lane.b32.xlu0 %v917, 120
      %v976 = vpop.permute.xlu0 %975
      %977 = vrot.lane.b32.xlu0 %v918, 120
      %v978 = vpop.permute.xlu0 %977
      %979 = vrot.lane.b32.xlu0 %v919, 120
      %v980 = vpop.permute.xlu0 %979
      %981 = vrot.lane.b32.xlu0 %v920, 120
      %v982 = vpop.permute.xlu0 %981
      %983 = vrot.lane.b32.xlu0 %v921, 120
      %v984 = vpop.permute.xlu0 %983
      %985 = vrot.lane.b32.xlu0 %v922, 120
      %v986 = vpop.permute.xlu0 %985
      %vm1019 = vcmask 27648
      %1020 = vst.msk [vmem:[%s335] sm:$0xf] %vm1019, %v924
      %1021 = vst.msk [vmem:[%s335 + $0x4] sm:$0xf] %vm1019, %v926
      %1022 = vst.msk [vmem:[%s335 + $0x8] sm:$0xf] %vm1019, %v928
      %1023 = vst.msk [vmem:[%s335 + $0xc] sm:$0xf] %vm1019, %v930
      %1024 = vst.msk [vmem:[%s335 + $0x10] sm:$0xf] %vm1019, %v932
      %1025 = vst.msk [vmem:[%s335 + $0x14] sm:$0xf] %vm1019, %v934
      %1026 = vst.msk [vmem:[%s335 + $0x18] sm:$0xf] %vm1019, %v936
      %1027 = vst.msk [vmem:[%s335 + $0x1c] sm:$0xf] %vm1019, %v938
      %1028 = vst.msk [vmem:[%s335 + $0x20] sm:$0xf] %vm1019, %v940
      %1029 = vst.msk [vmem:[%s335 + $0x24] sm:$0xf] %vm1019, %v942
      %1030 = vst.msk [vmem:[%s335 + $0x28] sm:$0xf] %vm1019, %v944
      %1031 = vst.msk [vmem:[%s335 + $0x2c] sm:$0xf] %vm1019, %v946
      %1032 = vst.msk [vmem:[%s335 + $0x30] sm:$0xf] %vm1019, %v948
      %1033 = vst.msk [vmem:[%s335 + $0x34] sm:$0xf] %vm1019, %v950
      %1034 = vst.msk [vmem:[%s335 + $0x38] sm:$0xf] %vm1019, %v952
      %1035 = vst.msk [vmem:[%s335 + $0x3c] sm:$0xf] %vm1019, %v954
      %1036 = vst.msk [vmem:[%s335 + $0x40] sm:$0xf] %vm1019, %v956
      %1037 = vst.msk [vmem:[%s335 + $0x44] sm:$0xf] %vm1019, %v958
      %1038 = vst.msk [vmem:[%s335 + $0x48] sm:$0xf] %vm1019, %v960
      %1039 = vst.msk [vmem:[%s335 + $0x4c] sm:$0xf] %vm1019, %v962
      %1040 = vst.msk [vmem:[%s335 + $0x50] sm:$0xf] %vm1019, %v964
      %1041 = vst.msk [vmem:[%s335 + $0x54] sm:$0xf] %vm1019, %v966
      %1042 = vst.msk [vmem:[%s335 + $0x58] sm:$0xf] %vm1019, %v968
      %1043 = vst.msk [vmem:[%s335 + $0x5c] sm:$0xf] %vm1019, %v970
      %1044 = vst.msk [vmem:[%s335 + $0x60] sm:$0xf] %vm1019, %v972
      %1045 = vst.msk [vmem:[%s335 + $0x64] sm:$0xf] %vm1019, %v974
      %1046 = vst.msk [vmem:[%s335 + $0x68] sm:$0xf] %vm1019, %v976
      %1047 = vst.msk [vmem:[%s335 + $0x6c] sm:$0xf] %vm1019, %v978
      %1048 = vst.msk [vmem:[%s335 + $0x70] sm:$0xf] %vm1019, %v980
      %1049 = vst.msk [vmem:[%s335 + $0x74] sm:$0xf] %vm1019, %v982
      %1050 = vst.msk [vmem:[%s335 + $0x78] sm:$0xf] %vm1019, %v984
      %1051 = vst.msk [vmem:[%s335 + $0x7c] sm:$0xf] %vm1019, %v986
      %1052 = vrot.lane.b32.xlu0 %v891, 116
      %v1053 = vpop.permute.xlu0 %1052
      %1054 = vrot.lane.b32.xlu0 %v892, 116
      %v1055 = vpop.permute.xlu0 %1054
      %1056 = vrot.lane.b32.xlu0 %v893, 116
      %v1057 = vpop.permute.xlu0 %1056
      %1058 = vrot.lane.b32.xlu0 %v894, 116
      %v1059 = vpop.permute.xlu0 %1058
      %1060 = vrot.lane.b32.xlu0 %v895, 116
      %v1061 = vpop.permute.xlu0 %1060
      %1062 = vrot.lane.b32.xlu0 %v896, 116
      %v1063 = vpop.permute.xlu0 %1062
      %1064 = vrot.lane.b32.xlu0 %v897, 116
      %v1065 = vpop.permute.xlu0 %1064
      %1066 = vrot.lane.b32.xlu0 %v898, 116
      %v1067 = vpop.permute.xlu0 %1066
      %1068 = vrot.lane.b32.xlu0 %v899, 116
      %v1069 = vpop.permute.xlu0 %1068
      %1070 = vrot.lane.b32.xlu0 %v900, 116
      %v1071 = vpop.permute.xlu0 %1070
      %1072 = vrot.lane.b32.xlu0 %v901, 116
      %v1073 = vpop.permute.xlu0 %1072
      %1074 = vrot.lane.b32.xlu0 %v902, 116
      %v1075 = vpop.permute.xlu0 %1074
      %1076 = vrot.lane.b32.xlu0 %v903, 116
      %v1077 = vpop.permute.xlu0 %1076
      %1078 = vrot.lane.b32.xlu0 %v904, 116
      %v1079 = vpop.permute.xlu0 %1078
      %1080 = vrot.lane.b32.xlu0 %v905, 116
      %v1081 = vpop.permute.xlu0 %1080
      %1082 = vrot.lane.b32.xlu0 %v906, 116
      %v1083 = vpop.permute.xlu0 %1082
      %1084 = vrot.lane.b32.xlu0 %v907, 116
      %v1085 = vpop.permute.xlu0 %1084
      %1086 = vrot.lane.b32.xlu0 %v908, 116
      %v1087 = vpop.permute.xlu0 %1086
      %1088 = vrot.lane.b32.xlu0 %v909, 116
      %v1089 = vpop.permute.xlu0 %1088
      %1090 = vrot.lane.b32.xlu0 %v910, 116
      %v1091 = vpop.permute.xlu0 %1090
      %1092 = vrot.lane.b32.xlu0 %v911, 116
      %v1093 = vpop.permute.xlu0 %1092
      %1094 = vrot.lane.b32.xlu0 %v912, 116
      %v1095 = vpop.permute.xlu0 %1094
      %1096 = vrot.lane.b32.xlu0 %v913, 116
      %v1097 = vpop.permute.xlu0 %1096
      %1098 = vrot.lane.b32.xlu0 %v914, 116
      %v1099 = vpop.permute.xlu0 %1098
      %1100 = vrot.lane.b32.xlu0 %v915, 116
      %v1101 = vpop.permute.xlu0 %1100
      %1102 = vrot.lane.b32.xlu0 %v916, 116
      %v1103 = vpop.permute.xlu0 %1102
      %1104 = vrot.lane.b32.xlu0 %v917, 116
      %v1105 = vpop.permute.xlu0 %1104
      %1106 = vrot.lane.b32.xlu0 %v918, 116
      %v1107 = vpop.permute.xlu0 %1106
      %1108 = vrot.lane.b32.xlu0 %v919, 116
      %v1109 = vpop.permute.xlu0 %1108
      %1110 = vrot.lane.b32.xlu0 %v920, 116
      %v1111 = vpop.permute.xlu0 %1110
      %1112 = vrot.lane.b32.xlu0 %v921, 116
      %v1113 = vpop.permute.xlu0 %1112
      %1114 = vrot.lane.b32.xlu0 %v922, 116
      %v1115 = vpop.permute.xlu0 %1114
      %1148 = vst.msk [vmem:[%s341] sm:$0xf] %vm1019, %v1053
      %1149 = vst.msk [vmem:[%s341 + $0x4] sm:$0xf] %vm1019, %v1055
      %1150 = vst.msk [vmem:[%s341 + $0x8] sm:$0xf] %vm1019, %v1057
      %1151 = vst.msk [vmem:[%s341 + $0xc] sm:$0xf] %vm1019, %v1059
      %1152 = vst.msk [vmem:[%s341 + $0x10] sm:$0xf] %vm1019, %v1061
      %1153 = vst.msk [vmem:[%s341 + $0x14] sm:$0xf] %vm1019, %v1063
      %1154 = vst.msk [vmem:[%s341 + $0x18] sm:$0xf] %vm1019, %v1065
      %1155 = vst.msk [vmem:[%s341 + $0x1c] sm:$0xf] %vm1019, %v1067
      %1156 = vst.msk [vmem:[%s341 + $0x20] sm:$0xf] %vm1019, %v1069
      %1157 = vst.msk [vmem:[%s341 + $0x24] sm:$0xf] %vm1019, %v1071
      %1158 = vst.msk [vmem:[%s341 + $0x28] sm:$0xf] %vm1019, %v1073
      %1159 = vst.msk [vmem:[%s341 + $0x2c] sm:$0xf] %vm1019, %v1075
      %1160 = vst.msk [vmem:[%s341 + $0x30] sm:$0xf] %vm1019, %v1077
      %1161 = vst.msk [vmem:[%s341 + $0x34] sm:$0xf] %vm1019, %v1079
      %1162 = vst.msk [vmem:[%s341 + $0x38] sm:$0xf] %vm1019, %v1081
      %1163 = vst.msk [vmem:[%s341 + $0x3c] sm:$0xf] %vm1019, %v1083
      %1164 = vst.msk [vmem:[%s341 + $0x40] sm:$0xf] %vm1019, %v1085
      %1165 = vst.msk [vmem:[%s341 + $0x44] sm:$0xf] %vm1019, %v1087
      %1166 = vst.msk [vmem:[%s341 + $0x48] sm:$0xf] %vm1019, %v1089
      %1167 = vst.msk [vmem:[%s341 + $0x4c] sm:$0xf] %vm1019, %v1091
      %1168 = vst.msk [vmem:[%s341 + $0x50] sm:$0xf] %vm1019, %v1093
      %1169 = vst.msk [vmem:[%s341 + $0x54] sm:$0xf] %vm1019, %v1095
      %1170 = vst.msk [vmem:[%s341 + $0x58] sm:$0xf] %vm1019, %v1097
      %1171 = vst.msk [vmem:[%s341 + $0x5c] sm:$0xf] %vm1019, %v1099
      %1172 = vst.msk [vmem:[%s341 + $0x60] sm:$0xf] %vm1019, %v1101
      %1173 = vst.msk [vmem:[%s341 + $0x64] sm:$0xf] %vm1019, %v1103
      %1174 = vst.msk [vmem:[%s341 + $0x68] sm:$0xf] %vm1019, %v1105
      %1175 = vst.msk [vmem:[%s341 + $0x6c] sm:$0xf] %vm1019, %v1107
      %1176 = vst.msk [vmem:[%s341 + $0x70] sm:$0xf] %vm1019, %v1109
      %1177 = vst.msk [vmem:[%s341 + $0x74] sm:$0xf] %vm1019, %v1111
      %1178 = vst.msk [vmem:[%s341 + $0x78] sm:$0xf] %vm1019, %v1113
      %1179 = vst.msk [vmem:[%s341 + $0x7c] sm:$0xf] %vm1019, %v1115
      %1180 = vrot.lane.b32.xlu0 %v891, 112
      %v1181 = vpop.permute.xlu0 %1180
      %1182 = vrot.lane.b32.xlu0 %v892, 112
      %v1183 = vpop.permute.xlu0 %1182
      %1184 = vrot.lane.b32.xlu0 %v893, 112
      %v1185 = vpop.permute.xlu0 %1184
      %1186 = vrot.lane.b32.xlu0 %v894, 112
      %v1187 = vpop.permute.xlu0 %1186
      %1188 = vrot.lane.b32.xlu0 %v895, 112
      %v1189 = vpop.permute.xlu0 %1188
      %1190 = vrot.lane.b32.xlu0 %v896, 112
      %v1191 = vpop.permute.xlu0 %1190
      %1192 = vrot.lane.b32.xlu0 %v897, 112
      %v1193 = vpop.permute.xlu0 %1192
      %1194 = vrot.lane.b32.xlu0 %v898, 112
      %v1195 = vpop.permute.xlu0 %1194
      %1196 = vrot.lane.b32.xlu0 %v899, 112
      %v1197 = vpop.permute.xlu0 %1196
      %1198 = vrot.lane.b32.xlu0 %v900, 112
      %v1199 = vpop.permute.xlu0 %1198
      %1200 = vrot.lane.b32.xlu0 %v901, 112
      %v1201 = vpop.permute.xlu0 %1200
      %1202 = vrot.lane.b32.xlu0 %v902, 112
      %v1203 = vpop.permute.xlu0 %1202
      %1204 = vrot.lane.b32.xlu0 %v903, 112
      %v1205 = vpop.permute.xlu0 %1204
      %1206 = vrot.lane.b32.xlu0 %v904, 112
      %v1207 = vpop.permute.xlu0 %1206
      %1208 = vrot.lane.b32.xlu0 %v905, 112
      %v1209 = vpop.permute.xlu0 %1208
      %1210 = vrot.lane.b32.xlu0 %v906, 112
      %v1211 = vpop.permute.xlu0 %1210
      %1212 = vrot.lane.b32.xlu0 %v907, 112
      %v1213 = vpop.permute.xlu0 %1212
      %1214 = vrot.lane.b32.xlu0 %v908, 112
      %v1215 = vpop.permute.xlu0 %1214
      %1216 = vrot.lane.b32.xlu0 %v909, 112
      %v1217 = vpop.permute.xlu0 %1216
      %1218 = vrot.lane.b32.xlu0 %v910, 112
      %v1219 = vpop.permute.xlu0 %1218
      %1220 = vrot.lane.b32.xlu0 %v911, 112
      %v1221 = vpop.permute.xlu0 %1220
      %1222 = vrot.lane.b32.xlu0 %v912, 112
      %v1223 = vpop.permute.xlu0 %1222
      %1224 = vrot.lane.b32.xlu0 %v913, 112
      %v1225 = vpop.permute.xlu0 %1224
      %1226 = vrot.lane.b32.xlu0 %v914, 112
      %v1227 = vpop.permute.xlu0 %1226
      %1228 = vrot.lane.b32.xlu0 %v915, 112
      %v1229 = vpop.permute.xlu0 %1228
      %1230 = vrot.lane.b32.xlu0 %v916, 112
      %v1231 = vpop.permute.xlu0 %1230
      %1232 = vrot.lane.b32.xlu0 %v917, 112
      %v1233 = vpop.permute.xlu0 %1232
      %1234 = vrot.lane.b32.xlu0 %v918, 112
      %v1235 = vpop.permute.xlu0 %1234
      %1236 = vrot.lane.b32.xlu0 %v919, 112
      %v1237 = vpop.permute.xlu0 %1236
      %1238 = vrot.lane.b32.xlu0 %v920, 112
      %v1239 = vpop.permute.xlu0 %1238
      %1240 = vrot.lane.b32.xlu0 %v921, 112
      %v1241 = vpop.permute.xlu0 %1240
      %1242 = vrot.lane.b32.xlu0 %v922, 112
      %v1243 = vpop.permute.xlu0 %1242
      %1276 = vst.msk [vmem:[%s347] sm:$0xf] %vm1019, %v1181
      %1277 = vst.msk [vmem:[%s347 + $0x4] sm:$0xf] %vm1019, %v1183
      %1278 = vst.msk [vmem:[%s347 + $0x8] sm:$0xf] %vm1019, %v1185
      %1279 = vst.msk [vmem:[%s347 + $0xc] sm:$0xf] %vm1019, %v1187
      %1280 = vst.msk [vmem:[%s347 + $0x10] sm:$0xf] %vm1019, %v1189
      %1281 = vst.msk [vmem:[%s347 + $0x14] sm:$0xf] %vm1019, %v1191
      %1282 = vst.msk [vmem:[%s347 + $0x18] sm:$0xf] %vm1019, %v1193
      %1283 = vst.msk [vmem:[%s347 + $0x1c] sm:$0xf] %vm1019, %v1195
      %1284 = vst.msk [vmem:[%s347 + $0x20] sm:$0xf] %vm1019, %v1197
      %1285 = vst.msk [vmem:[%s347 + $0x24] sm:$0xf] %vm1019, %v1199
      %1286 = vst.msk [vmem:[%s347 + $0x28] sm:$0xf] %vm1019, %v1201
      %1287 = vst.msk [vmem:[%s347 + $0x2c] sm:$0xf] %vm1019, %v1203
      %1288 = vst.msk [vmem:[%s347 + $0x30] sm:$0xf] %vm1019, %v1205
      %1289 = vst.msk [vmem:[%s347 + $0x34] sm:$0xf] %vm1019, %v1207
      %1290 = vst.msk [vmem:[%s347 + $0x38] sm:$0xf] %vm1019, %v1209
      %1291 = vst.msk [vmem:[%s347 + $0x3c] sm:$0xf] %vm1019, %v1211
      %1292 = vst.msk [vmem:[%s347 + $0x40] sm:$0xf] %vm1019, %v1213
      %1293 = vst.msk [vmem:[%s347 + $0x44] sm:$0xf] %vm1019, %v1215
      %1294 = vst.msk [vmem:[%s347 + $0x48] sm:$0xf] %vm1019, %v1217
      %1295 = vst.msk [vmem:[%s347 + $0x4c] sm:$0xf] %vm1019, %v1219
      %1296 = vst.msk [vmem:[%s347 + $0x50] sm:$0xf] %vm1019, %v1221
      %1297 = vst.msk [vmem:[%s347 + $0x54] sm:$0xf] %vm1019, %v1223
      %1298 = vst.msk [vmem:[%s347 + $0x58] sm:$0xf] %vm1019, %v1225
      %1299 = vst.msk [vmem:[%s347 + $0x5c] sm:$0xf] %vm1019, %v1227
      %1300 = vst.msk [vmem:[%s347 + $0x60] sm:$0xf] %vm1019, %v1229
      %1301 = vst.msk [vmem:[%s347 + $0x64] sm:$0xf] %vm1019, %v1231
      %1302 = vst.msk [vmem:[%s347 + $0x68] sm:$0xf] %vm1019, %v1233
      %1303 = vst.msk [vmem:[%s347 + $0x6c] sm:$0xf] %vm1019, %v1235
      %1304 = vst.msk [vmem:[%s347 + $0x70] sm:$0xf] %vm1019, %v1237
      %1305 = vst.msk [vmem:[%s347 + $0x74] sm:$0xf] %vm1019, %v1239
      %1306 = vst.msk [vmem:[%s347 + $0x78] sm:$0xf] %vm1019, %v1241
      %1307 = vst.msk [vmem:[%s347 + $0x7c] sm:$0xf] %vm1019, %v1243
      %s1308 = smul.u32 32, %s20
      %p1309 = scmp.lt.s32.totalorder %s1308, 63
      %s1310 = scalar_select %p1309, %s1308, 63
      %s1311 = smul.addr %s1310, 8
      %s1312 = scalar_lea.vmem %s5, %s1311
      %s1313 = smul.u32 32, %s20
      %p1314 = scmp.lt.s32.totalorder %s1313, 63
      %s1315 = scalar_select %p1314, %s1313, 63
      %s1316 = smul.addr %s1315, 4
      %s1317 = scalar_lea.vmem %s6, %s1316
      %s1318 = smul.u32 32, %s20
      %p1319 = scmp.lt.s32.totalorder %s1318, 63
      %s1320 = scalar_select %p1319, %s1318, 63
      %s1321 = smul.addr %s1320, 4
      %s1322 = scalar_lea.vmem %s7, %s1321
      %s1323 = smul.u32 32, %s20
      %p1324 = scmp.lt.s32.totalorder %s1323, 63
      %s1325 = scalar_select %p1324, %s1323, 63
      %s1326 = smul.addr %s1325, 4
      %s1327 = scalar_lea.vmem %s8, %s1326
      // Predicated region
      $region41: #{inception_forward.4} parent=39 // pred_check
        %p1328 = pneg %p148
      $region42: #{inception_forward.4} parent=39 // pred_check_branch
        %1330 = sbr.rel (%p1328) target = $region44
      $region43: #{inception_forward.4} parent=39 // pred_region
        %s1331 = smul.u32 32, %s20
      $region44: #{inception_forward.4} parent=39 // pred_fallthru
        _
      // Predicated region
      $region45: #{inception_forward.4} parent=39 // pred_check
        %p1332 = pneg %p174
      $region46: #{inception_forward.4} parent=39 // pred_check_branch
        %1334 = sbr.rel (%p1332) target = $region48
      $region47: #{inception_forward.4} parent=39 // pred_region
        %s1335 = smul.u32 32, %s20
      $region48: #{inception_forward.4} parent=39 // pred_fallthru
        _
      // Predicated region
      $region49: #{inception_forward.4} parent=39 // pred_check
        %p1336 = pneg %p200
      $region50: #{inception_forward.4} parent=39 // pred_check_branch
        %1338 = sbr.rel (%p1336) target = $region52
      $region51: #{inception_forward.4} parent=39 // pred_region
        %s1339 = smul.u32 32, %s20
      $region52: #{inception_forward.4} parent=39 // pred_fallthru
        _
      // Predicated region
      $region53: #{inception_forward.4} parent=39 // pred_check
        %p1340 = pneg %p226
      $region54: #{inception_forward.4} parent=39 // pred_check_branch
        %1342 = sbr.rel (%p1340) target = $region56
      $region55: #{inception_forward.4} parent=39 // pred_region
        %s1343 = smul.u32 32, %s20
      $region56: #{inception_forward.4} parent=39 // pred_fallthru
        _
    $region40: #{inception_forward.4} parent=5 // pred_fallthru
      _
    %p1344 = scmp.le.s32.totalorder 2, %s15
    // Predicated region
    $region57: #{inception_forward.4} parent=5 // pred_check
      %p1345 = pneg %p1344
    $region58: #{inception_forward.4} parent=5 // pred_check_branch
      %1347 = sbr.rel (%p1345) target = $region60
    $region59: #{inception_forward.4} parent=5 // pred_region
      %s1348 = ssub.s32 %s15, 2
      // Predicated region
      $region61: #{inception_forward.4} parent=59 // pred_check
        %p1349 = pneg %p154
      $region62: #{inception_forward.4} parent=59 // pred_check_branch
        %1351 = sbr.rel (%p1349) target = $region64
      $region63: #{inception_forward.4} parent=59 // pred_region
        %s1352 = smul.u32 32, %s21
        %p1353 = scmp.lt.s32.totalorder %s1352, 63
        %s1354 = scalar_select %p1353, %s1352, 63
        %s1355 = smul.addr %s1354, 8
        %s1356 = scalar_lea.vmem %s5, %s1355
      $region64: #{inception_forward.4} parent=59 // pred_fallthru
        _
      // Predicated region
      $region65: #{inception_forward.4} parent=59 // pred_check
        %p1357 = pneg %p180
      $region66: #{inception_forward.4} parent=59 // pred_check_branch
        %1359 = sbr.rel (%p1357) target = $region68
      $region67: #{inception_forward.4} parent=59 // pred_region
        %s1360 = smul.u32 32, %s21
        %p1361 = scmp.lt.s32.totalorder %s1360, 63
        %s1362 = scalar_select %p1361, %s1360, 63
        %s1363 = smul.addr %s1362, 4
        %s1364 = scalar_lea.vmem %s6, %s1363
      $region68: #{inception_forward.4} parent=59 // pred_fallthru
        _
      // Predicated region
      $region69: #{inception_forward.4} parent=59 // pred_check
        %p1365 = pneg %p206
      $region70: #{inception_forward.4} parent=59 // pred_check_branch
        %1367 = sbr.rel (%p1365) target = $region72
      $region71: #{inception_forward.4} parent=59 // pred_region
        %s1368 = smul.u32 32, %s21
        %p1369 = scmp.lt.s32.totalorder %s1368, 63
        %s1370 = scalar_select %p1369, %s1368, 63
        %s1371 = smul.addr %s1370, 4
        %s1372 = scalar_lea.vmem %s7, %s1371
      $region72: #{inception_forward.4} parent=59 // pred_fallthru
        _
      // Predicated region
      $region73: #{inception_forward.4} parent=59 // pred_check
        %p1373 = pneg %p232
      $region74: #{inception_forward.4} parent=59 // pred_check_branch
        %1375 = sbr.rel (%p1373) target = $region76
      $region75: #{inception_forward.4} parent=59 // pred_region
        %s1376 = smul.u32 32, %s21
        %p1377 = scmp.lt.s32.totalorder %s1376, 63
        %s1378 = scalar_select %p1377, %s1376, 63
        %s1379 = smul.addr %s1378, 4
        %s1380 = scalar_lea.vmem %s8, %s1379
      $region76: #{inception_forward.4} parent=59 // pred_fallthru
        _
    $region60: #{inception_forward.4} parent=5 // pred_fallthru
      _
  $region6: #{inception_forward.4} parent=0 // loop_footer
    %s19 = sadd.s32 1, %s15
  $region7: #{inception_forward.4} parent=0 // loop_footer_branch
    %14 = sbr.rel target = $region3
  $region8: #{inception_forward.4} parent=0 // loop_exit
    _

// kernel: inception_forward.6
$region0: #{inception_forward.6}
  #allocation0 [shape = 'u32[]', space=smem, size = 0x4, offset = 0x4, fixed_abs, tag = 'smem constant byte address 0x4 - core index']
  #allocation1 [shape = 'u32[144,128]{1,0:T(1,128)}', space=vmem, size = 0x12000, scoped, tag = 'internal scratch']
  %s0 = inlined_call_operand.vmem [shape: bf16[2,320,4], index: 0, kind: input, shape index: {}]
  %s1 = inlined_call_operand.vmem [shape: bf16[5,4,8], index: 1, kind: input, shape index: {}]
  %s2 = inlined_call_operand.vmem [shape: f32[1,8], index: 2, kind: input, shape index: {}]
  %s3 = inlined_call_operand.vmem [shape: f32[1,8], index: 3, kind: input, shape index: {}]
  %s4 = inlined_call_operand.vmem [shape: f32[1,8], index: 4, kind: input, shape index: {}]
  %s5 = inlined_call_operand.vmem [shape: f32[2,256,8], index: 5, kind: output, shape index: {}]
  %s6 = sld [smem:[#allocation0]]
  $region53: #{inception_forward.6} parent=0
    _
  %s8 = ssub.s32 1, %s6
  %s9 = scalar_select 0, %s8, %s6
  loop: start=0, step=1, limit=6
  $region2: #{inception_forward.6} parent=0 // loop_pre_header
    _
  $region3: #{inception_forward.6} parent=0 // loop_header
    %s11 = sphi 0, %s15
    %p12 = scmp.ge.s32.totalorder %s11, 6
    %s18 = sphi 0, %s30
    %s19 = sphi 0, %s26
    %s20 = sphi 0, %s18
    %s21 = sphi 0, %s19
    %s22 = sphi 0, %s20
    %s23 = sphi 0, %s21
    %s33 = sphi 0, %s35
    %s36 = sphi 0, %s33
    %s37 = sphi 0, %s36
    %s53 = sphi 0, %s37
    %s57 = sphi 0, %s57
    %s59 = sphi 0, %s57
    %s60 = sphi 0, %s59
    %s74 = sphi 0, %s60
    %s78 = sphi 0, %s78
    %s80 = sphi 0, %s78
    %s81 = sphi 0, %s80
    %s95 = sphi 0, %s81
    %s99 = sphi 0, %s99
    %s101 = sphi 0, %s99
    %s102 = sphi 0, %s101
    %s116 = sphi 0, %s102
    %s120 = sphi 0, %s120
    %s122 = sphi 0, %s120
    %s123 = sphi 0, %s122
    %s137 = sphi 0, %s123
    %s145 = sphi 0, %s147
    %s148 = sphi 0, %s145
    %s149 = sphi 0, %s148
    %s165 = sphi 0, %s149
  $region4: #{inception_forward.6} parent=0 // loop_header_branch
    %14 = sbr.rel (%p12) target = $region8
  $region5: #{inception_forward.6} parent=0 // loop_body
    %s16 = ssub.s32 %s11, 1
    %s17 = ssub.s32 %s11, 2
    %s24 = sadd.s32 1, %s19
    %p25 = scmp.ge.s32.totalorder %s24, 2
    %s26 = scalar_select %p25, 0, %s24
    %s27 = sadd.s32 1, %s18
    %s28 = scalar_select %p25, %s27, %s18
    %p29 = scmp.ge.s32.totalorder %s28, 2
    %s30 = scalar_select %p29, 0, %s28
    %s31 = ssub.s32 %s18, %s30
    %p32 = scmp.eq.s32.totalorder %s31, 0
    %s34 = sadd.s32 %s33, 1
    %s35 = scalar_select %p32, %s33, %s34
    %p38 = pneg %p32
    %p39 = scmp.eq.s32.totalorder %s11, 3
    %p40 = por %p38, %p39
    %p41 = scmp.ne.s32.totalorder %s33, %s36
    %p42 = scmp.eq.s32.totalorder %s11, 0
    %p43 = por %p41, %p42
    %p44 = scmp.ne.s32.totalorder %s33, %s36
    %p45 = scmp.eq.s32.totalorder %s16, 3
    %p46 = por %p44, %p45
    %p47 = scmp.ne.s32.totalorder %s36, %s37
    %p48 = scmp.eq.s32.totalorder %s16, 0
    %p49 = por %p47, %p48
    %p50 = scmp.ne.s32.totalorder %s36, %s37
    %p51 = scmp.eq.s32.totalorder %s17, 3
    %p52 = por %p50, %p51
    %p54 = scmp.ne.s32.totalorder %s37, %s53
    %p55 = scmp.eq.s32.totalorder %s17, 0
    %p56 = por %p54, %p55
    %s58 = sadd.s32 %s57, 1
    %p61 = scmp.eq.s32.totalorder %s11, 3
    %p62 = scmp.ne.s32.totalorder %s57, %s59
    %p63 = scmp.eq.s32.totalorder %s11, 0
    %p64 = por %p62, %p63
    %p65 = scmp.ne.s32.totalorder %s57, %s59
    %p66 = scmp.eq.s32.totalorder %s16, 3
    %p67 = por %p65, %p66
    %p68 = scmp.ne.s32.totalorder %s59, %s60
    %p69 = scmp.eq.s32.totalorder %s16, 0
    %p70 = por %p68, %p69
    %p71 = scmp.ne.s32.totalorder %s59, %s60
    %p72 = scmp.eq.s32.totalorder %s17, 3
    %p73 = por %p71, %p72
    %p75 = scmp.ne.s32.totalorder %s60, %s74
    %p76 = scmp.eq.s32.totalorder %s17, 0
    %p77 = por %p75, %p76
    %s79 = sadd.s32 %s78, 1
    %p82 = scmp.eq.s32.totalorder %s11, 3
    %p83 = scmp.ne.s32.totalorder %s78, %s80
    %p84 = scmp.eq.s32.totalorder %s11, 0
    %p85 = por %p83, %p84
    %p86 = scmp.ne.s32.totalorder %s78, %s80
    %p87 = scmp.eq.s32.totalorder %s16, 3
    %p88 = por %p86, %p87
    %p89 = scmp.ne.s32.totalorder %s80, %s81
    %p90 = scmp.eq.s32.totalorder %s16, 0
    %p91 = por %p89, %p90
    %p92 = scmp.ne.s32.totalorder %s80, %s81
    %p93 = scmp.eq.s32.totalorder %s17, 3
    %p94 = por %p92, %p93
    %p96 = scmp.ne.s32.totalorder %s81, %s95
    %p97 = scmp.eq.s32.totalorder %s17, 0
    %p98 = por %p96, %p97
    %s100 = sadd.s32 %s99, 1
    %p103 = scmp.eq.s32.totalorder %s11, 3
    %p104 = scmp.ne.s32.totalorder %s99, %s101
    %p105 = scmp.eq.s32.totalorder %s11, 0
    %p106 = por %p104, %p105
    %p107 = scmp.ne.s32.totalorder %s99, %s101
    %p108 = scmp.eq.s32.totalorder %s16, 3
    %p109 = por %p107, %p108
    %p110 = scmp.ne.s32.totalorder %s101, %s102
    %p111 = scmp.eq.s32.totalorder %s16, 0
    %p112 = por %p110, %p111
    %p113 = scmp.ne.s32.totalorder %s101, %s102
    %p114 = scmp.eq.s32.totalorder %s17, 3
    %p115 = por %p113, %p114
    %p117 = scmp.ne.s32.totalorder %s102, %s116
    %p118 = scmp.eq.s32.totalorder %s17, 0
    %p119 = por %p117, %p118
    %s121 = sadd.s32 %s120, 1
    %p124 = scmp.eq.s32.totalorder %s11, 3
    %p125 = scmp.ne.s32.totalorder %s120, %s122
    %p126 = scmp.eq.s32.totalorder %s11, 0
    %p127 = por %p125, %p126
    %p128 = scmp.ne.s32.totalorder %s120, %s122
    %p129 = scmp.eq.s32.totalorder %s16, 3
    %p130 = por %p128, %p129
    %p131 = scmp.ne.s32.totalorder %s122, %s123
    %p132 = scmp.eq.s32.totalorder %s16, 0
    %p133 = por %p131, %p132
    %p134 = scmp.ne.s32.totalorder %s122, %s123
    %p135 = scmp.eq.s32.totalorder %s17, 3
    %p136 = por %p134, %p135
    %p138 = scmp.ne.s32.totalorder %s123, %s137
    %p139 = scmp.eq.s32.totalorder %s17, 0
    %p140 = por %p138, %p139
    %s141 = ssub.s32 %s18, %s30
    %s142 = ssub.s32 %s19, %s26
    %s143 = sor.u32 %s141, %s142
    %p144 = scmp.eq.s32.totalorder %s143, 0
    %s146 = sadd.s32 %s145, 1
    %s147 = scalar_select %p144, %s145, %s146
    %p150 = pneg %p144
    %p151 = scmp.eq.s32.totalorder %s11, 3
    %p152 = por %p150, %p151
    %p153 = scmp.ne.s32.totalorder %s145, %s148
    %p154 = scmp.eq.s32.totalorder %s11, 0
    %p155 = por %p153, %p154
    %p156 = scmp.ne.s32.totalorder %s145, %s148
    %p157 = scmp.eq.s32.totalorder %s16, 3
    %p158 = por %p156, %p157
    %p159 = scmp.ne.s32.totalorder %s148, %s149
    %p160 = scmp.eq.s32.totalorder %s16, 0
    %p161 = por %p159, %p160
    %p162 = scmp.ne.s32.totalorder %s148, %s149
    %p163 = scmp.eq.s32.totalorder %s17, 3
    %p164 = por %p162, %p163
    %p166 = scmp.ne.s32.totalorder %s149, %s165
    %p167 = scmp.eq.s32.totalorder %s17, 0
    %p168 = por %p166, %p167
    %p169 = scmp.le.s32.totalorder 1, %s11
    %p170 = scmp.lt.s32.totalorder %s11, 5
    %p171 = pnand %p169, %p170
    %p172 = pneg %p171
    // Predicated region
    $region9: #{inception_forward.6} parent=5 // pred_check
      _
    $region10: #{inception_forward.6} parent=5 // pred_check_branch
      %174 = sbr.rel (%p171) target = $region12
    $region11: #{inception_forward.6} parent=5 // pred_region
      %s175 = ssub.s32 %s11, 1
      // Predicated region
      $region13: #{inception_forward.6} parent=11 // pred_check
        %p176 = pneg %p70
      $region14: #{inception_forward.6} parent=11 // pred_check_branch
        %178 = sbr.rel (%p176) target = $region16
      $region15: #{inception_forward.6} parent=11 // pred_region
        _
      $region16: #{inception_forward.6} parent=11 // pred_fallthru
        _
      // Predicated region
      $region17: #{inception_forward.6} parent=11 // pred_check
        %p179 = pneg %p91
      $region18: #{inception_forward.6} parent=11 // pred_check_branch
        %181 = sbr.rel (%p179) target = $region20
      $region19: #{inception_forward.6} parent=11 // pred_region
        _
      $region20: #{inception_forward.6} parent=11 // pred_fallthru
        _
      // Predicated region
      $region21: #{inception_forward.6} parent=11 // pred_check
        %p182 = pneg %p112
      $region22: #{inception_forward.6} parent=11 // pred_check_branch
        %184 = sbr.rel (%p182) target = $region24
      $region23: #{inception_forward.6} parent=11 // pred_region
        _
      $region24: #{inception_forward.6} parent=11 // pred_fallthru
        _
      // Predicated region
      $region25: #{inception_forward.6} parent=11 // pred_check
        %p185 = pneg %p133
      $region26: #{inception_forward.6} parent=11 // pred_check_branch
        %187 = sbr.rel (%p185) target = $region28
      $region27: #{inception_forward.6} parent=11 // pred_region
        _
      $region28: #{inception_forward.6} parent=11 // pred_fallthru
        _
    $region12: #{inception_forward.6} parent=5 // pred_fallthru
      _
    %p188 = scmp.lt.s32.totalorder %s11, 4
    // Predicated region
    $region29: #{inception_forward.6} parent=5 // pred_check
      %p189 = pneg %p188
    $region30: #{inception_forward.6} parent=5 // pred_check_branch
      %191 = sbr.rel (%p189) target = $region32
    $region31: #{inception_forward.6} parent=5 // pred_region
      // Predicated region
      $region33: #{inception_forward.6} parent=31 // pred_check
        %p192 = pneg %p43
      $region34: #{inception_forward.6} parent=31 // pred_check_branch
        %194 = sbr.rel (%p192) target = $region36
      $region35: #{inception_forward.6} parent=31 // pred_region
        %p195 = scmp.lt.s32.totalorder %s18, 1
        %s196 = scalar_select %p195, %s18, 1
        %s197 = smul.addr %s196, 40
        %s198 = smul.addr %s197, 4
        %s199 = scalar_lea.vmem %s0, %s198
      $region36: #{inception_forward.6} parent=31 // pred_fallthru
        _
    $region32: #{inception_forward.6} parent=5 // pred_fallthru
      _
    %p200 = scmp.le.s32.totalorder 1, %s11
    %p201 = scmp.lt.s32.totalorder %s11, 5
    %p202 = pnand %p200, %p201
    %p203 = pneg %p202
    // Predicated region
    $region37: #{inception_forward.6} parent=5 // pred_check
      _
    $region38: #{inception_forward.6} parent=5 // pred_check_branch
      %205 = sbr.rel (%p202) target = $region40
    $region39: #{inception_forward.6} parent=5 // pred_region
      %s206 = ssub.s32 %s11, 1
      %p207 = scmp.lt.s32.totalorder %s20, 1
      %s208 = scalar_select %p207, %s20, 1
      %s209 = smul.addr %s208, 40
      %s210 = smul.addr %s209, 4
      %s211 = scalar_lea.vmem %s0, %s210
      %p212 = pneg %p49
      %p213 = pneg %p46
      %p214 = pneg %p70
      %p215 = pneg %p67
      %p216 = pneg %p91
      %p217 = pneg %p88
      %p218 = pneg %p112
      %p219 = pneg %p109
      %p220 = pneg %p133
      %p221 = pneg %p130
      %p222 = pneg %p161
      %p223 = pneg %p158
      %s224 = smul.u32 16, %s21
      %p225 = scmp.lt.s32.totalorder %s20, 1
      %s226 = scalar_select %p225, %s20, 1
      %p227 = scmp.lt.s32.totalorder %s224, 31
      %s228 = scalar_select %p227, %s224, 31
      %s229 = smul.addr %s226, 32
      %s230 = sadd.s32 %s228, %s229
      %s231 = smul.addr %s230, 8
      %s232 = scalar_lea.vmem %s5, %s231
      %p233 = scmp.lt.s32.totalorder %s20, 1
      %s234 = scalar_select %p233, %s20, 1
      %s235 = smul.addr %s234, 40
      %s236 = smul.addr %s235, 4
      %s237 = scalar_lea.vmem %s0, %s236
      %s238 = smul.u32 16, %s21
      %p239 = scmp.lt.s32.totalorder %s20, 1
      %s240 = scalar_select %p239, %s20, 1
      %p241 = scmp.lt.s32.totalorder %s238, 31
      %s242 = scalar_select %p241, %s238, 31
      %s243 = smul.addr %s240, 32
      %s244 = sadd.s32 %s242, %s243
      %s245 = smul.addr %s244, 8
      %s246 = scalar_lea.vmem %s5, %s245
      %s247 = smul.u32 16, %s21
      %s249 = smul.u32 %s21, 128
      %s250 = sshra.s32 %s249, 3
      %s251 = sand.u32 %s249, 7
      %s252 = smul.addr %s250, 4
      %s253 = scalar_lea.vmem %s237, %s252
      %v254 = vld [vmem:[%s253] sm:$0xf]
      %v255 = vld [vmem:[%s253 + $0x4] sm:$0xf]
      %v256 = vld [vmem:[%s253 + $0x8] sm:$0xf]
      %v257 = vld [vmem:[%s253 + $0xc] sm:$0xf]
      %v258 = vld [vmem:[%s253 + $0x10] sm:$0xf]
      %v259 = vld [vmem:[%s253 + $0x14] sm:$0xf]
      %v260 = vld [vmem:[%s253 + $0x18] sm:$0xf]
      %v261 = vld [vmem:[%s253 + $0x1c] sm:$0xf]
      %v262 = vld [vmem:[%s253 + $0x20] sm:$0xf]
      %v263 = vld [vmem:[%s253 + $0x24] sm:$0xf]
      %v264 = vld [vmem:[%s253 + $0x28] sm:$0xf]
      %v265 = vld [vmem:[%s253 + $0x2c] sm:$0xf]
      %v266 = vld [vmem:[%s253 + $0x30] sm:$0xf]
      %v267 = vld [vmem:[%s253 + $0x34] sm:$0xf]
      %v268 = vld [vmem:[%s253 + $0x38] sm:$0xf]
      %v269 = vld [vmem:[%s253 + $0x3c] sm:$0xf]
      %v270 = vld [vmem:[%s1] sm:$0x3]
      %s271 = sadd.s32 %s249, 16
      %s272 = sshra.s32 %s271, 3
      %s273 = sand.u32 %s271, 7
      %s274 = smul.addr %s272, 4
      %s275 = scalar_lea.vmem %s237, %s274
      %v276 = vld [vmem:[%s275] sm:$0xf]
      %v277 = vld [vmem:[%s275 + $0x4] sm:$0xf]
      %v278 = vld [vmem:[%s275 + $0x8] sm:$0xf]
      %v279 = vld [vmem:[%s275 + $0xc] sm:$0xf]
      %v280 = vld [vmem:[%s275 + $0x10] sm:$0xf]
      %v281 = vld [vmem:[%s275 + $0x14] sm:$0xf]
      %v282 = vld [vmem:[%s275 + $0x18] sm:$0xf]
      %v283 = vld [vmem:[%s275 + $0x1c] sm:$0xf]
      %v284 = vld [vmem:[%s275 + $0x20] sm:$0xf]
      %v285 = vld [vmem:[%s275 + $0x24] sm:$0xf]
      %v286 = vld [vmem:[%s275 + $0x28] sm:$0xf]
      %v287 = vld [vmem:[%s275 + $0x2c] sm:$0xf]
      %v288 = vld [vmem:[%s275 + $0x30] sm:$0xf]
      %v289 = vld [vmem:[%s275 + $0x34] sm:$0xf]
      %v290 = vld [vmem:[%s275 + $0x38] sm:$0xf]
      %v291 = vld [vmem:[%s275 + $0x3c] sm:$0xf]
      %s292 = scalar_lea.vmem %s1, 2
      %v293 = vld [vmem:[%s292] sm:$0x3]
      %v310 = vunpack.c.l.b16 %v276
      %v311 = vunpack.c.l.b16 %v277
      %v312 = vunpack.c.l.b16 %v278
      %v313 = vunpack.c.l.b16 %v279
      %v314 = vunpack.c.l.b16 %v280
      %v315 = vunpack.c.l.b16 %v281
      %v316 = vunpack.c.l.b16 %v282
      %v317 = vunpack.c.l.b16 %v283
      %v318 = vunpack.c.l.b16 %v284
      %v319 = vunpack.c.l.b16 %v285
      %v320 = vunpack.c.l.b16 %v286
      %v321 = vunpack.c.l.b16 %v287
      %v322 = vunpack.c.l.b16 %v288
      %v323 = vunpack.c.l.b16 %v289
      %v324 = vunpack.c.l.b16 %v290
      %v325 = vunpack.c.l.b16 %v291
      %v326 = vpack.c.b16 %v311, %v310
      %v327 = vpack.c.b16 %v313, %v312
      %v328 = vpack.c.b16 %v315, %v314
      %v329 = vpack.c.b16 %v317, %v316
      %v330 = vpack.c.b16 %v319, %v318
      %v331 = vpack.c.b16 %v321, %v320
      %v332 = vpack.c.b16 %v323, %v322
      %v333 = vpack.c.b16 %v325, %v324
      %vm334 = vcmask 31744
      %v336 = vsel %vm334, %v326, 0
      %v339 = vsel %vm334, %v327, 0
      %v342 = vsel %vm334, %v328, 0
      %v345 = vsel %vm334, %v329, 0
      %v348 = vsel %vm334, %v330, 0
      %v351 = vsel %vm334, %v331, 0
      %v354 = vsel %vm334, %v332, 0
      %v357 = vsel %vm334, %v333, 0
      %vm359 = vcmask 1041408
      %v361 = vsel %vm359, %v293, 0
      %363 = vmatprep.subr.bf16.mxu0 0
      %364 = vmatpush1.bf16.msra.mxu0 %v361
      %365 = vmatprep.subr.bf16.mxu0 0
      %366 = vmatpush1.bf16.msra.mxu0 0
      %367 = vmatprep.subr.bf16.mxu0 0
      %368 = vmatpush1.bf16.msra.mxu0 0
      %369 = vmatprep.subr.bf16.mxu0 0
      %370 = vmatpush1.bf16.msra.mxu0 0
      %371 = vmatprep.subr.bf16.mxu0 0
      %372 = vmatpush1.bf16.msra.mxu0 0
      %373 = vmatprep.subr.bf16.mxu0 0
      %374 = vmatpush1.bf16.msra.mxu0 0
      %375 = vmatprep.subr.bf16.mxu0 0
      %376 = vmatpush1.bf16.msra.mxu0 0
      %377 = vmatprep.subr.bf16.mxu0 0
      %378 = vmatpush1.bf16.msra.mxu0 0
      %379 = vmatprep.subr.bf16.mxu0 0
      %380 = vmatpush1.bf16.msra.mxu0 0
      %381 = vmatprep.subr.bf16.mxu0 0
      %382 = vmatpush1.bf16.msra.mxu0 0
      %383 = vmatprep.subr.bf16.mxu0 0
      %384 = vmatpush1.bf16.msra.mxu0 0
      %385 = vmatprep.subr.bf16.mxu0 0
      %386 = vmatpush1.bf16.msra.mxu0 0
      %387 = vmatprep.subr.bf16.mxu0 0
      %388 = vmatpush1.bf16.msra.mxu0 0
      %389 = vmatprep.subr.bf16.mxu0 0
      %390 = vmatpush1.bf16.msra.mxu0 0
      %391 = vmatprep.subr.bf16.mxu0 0
      %392 = vmatpush1.bf16.msra.mxu0 0
      %393 = vmatprep.subr.bf16.mxu0 0
      %394 = vmatpush1.bf16.msra.mxu0 0
      %395 = vmatprep.mubr.bf16.mxu0 0
      %396 = vmatmul.mubr.bf16.gmra.mrb[0].mxu0 %v336
      %v397 = vpop.f32.mrb[0].mxu0
      %v398 = vadd.f32 0.0, %v397
      %v399 = vpop.f32.mrb[0].mxu0
      %v400 = vpop.f32.mrb[0].mxu0
      %v401 = vadd.f32 0.0, %v400
      %v402 = vpop.f32.mrb[0].mxu0
      %403 = vmatprep.mubr.bf16.mxu0 0
      %404 = vmatmul.mubr.bf16.gmra.mrb[0].mxu0 %v339
      %v405 = vpop.f32.mrb[0].mxu0
      %v406 = vadd.f32 0.0, %v405
      %v407 = vpop.f32.mrb[0].mxu0
      %v408 = vpop.f32.mrb[0].mxu0
      %v409 = vadd.f32 0.0, %v408
      %v410 = vpop.f32.mrb[0].mxu0
      %411 = vmatprep.mubr.bf16.mxu0 0
      %412 = vmatmul.mubr.bf16.gmra.mrb[0].mxu0 %v342
      %v413 = vpop.f32.mrb[0].mxu0
      %v414 = vadd.f32 0.0, %v413
      %v415 = vpop.f32.mrb[0].mxu0
      %v416 = vpop.f32.mrb[0].mxu0
      %v417 = vadd.f32 0.0, %v416
      %v418 = vpop.f32.mrb[0].mxu0
      %419 = vmatprep.mubr.bf16.mxu0 0
      %420 = vmatmul.mubr.bf16.gmra.mrb[0].mxu0 %v345
      %v421 = vpop.f32.mrb[0].mxu0
      %v422 = vadd.f32 0.0, %v421
      %v423 = vpop.f32.mrb[0].mxu0
      %v424 = vpop.f32.mrb[0].mxu0
      %v425 = vadd.f32 0.0, %v424
      %v426 = vpop.f32.mrb[0].mxu0
      %427 = vmatprep.mubr.bf16.mxu0 0
      %428 = vmatmul.mubr.bf16.gmra.mrb[0].mxu0 %v348
      %v429 = vpop.f32.mrb[0].mxu0
      %v430 = vadd.f32 0.0, %v429
      %v431 = vpop.f32.mrb[0].mxu0
      %v432 = vpop.f32.mrb[0].mxu0
      %v433 = vadd.f32 0.0, %v432
      %v434 = vpop.f32.mrb[0].mxu0
      %435 = vmatprep.mubr.bf16.mxu0 0
      %436 = vmatmul.mubr.bf16.gmra.mrb[0].mxu0 %v351
      %v437 = vpop.f32.mrb[0].mxu0
      %v438 = vadd.f32 0.0, %v437
      %v439 = vpop.f32.mrb[0].mxu0
      %v440 = vpop.f32.mrb[0].mxu0
      %v441 = vadd.f32 0.0, %v440
      %v442 = vpop.f32.mrb[0].mxu0
      %443 = vmatprep.mubr.bf16.mxu0 0
      %444 = vmatmul.mubr.bf16.gmra.mrb[0].mxu0 %v354
      %v445 = vpop.f32.mrb[0].mxu0
      %v446 = vadd.f32 0.0, %v445
      %v447 = vpop.f32.mrb[0].mxu0
      %v448 = vpop.f32.mrb[0].mxu0
      %v449 = vadd.f32 0.0, %v448
      %v450 = vpop.f32.mrb[0].mxu0
      %451 = vmatprep.mubr.bf16.mxu0 0
      %452 = vmatmul.mubr.bf16.gmra.mrb[0].mxu0 %v357
      %v453 = vpop.f32.mrb[0].mxu0
      %v454 = vadd.f32 0.0, %v453
      %v455 = vpop.f32.mrb[0].mxu0
      %v456 = vpop.f32.mrb[0].mxu0
      %v457 = vadd.f32 0.0, %v456
      %v458 = vpop.f32.mrb[0].mxu0
      %459 = vdwg.mxu0
      %v476 = vunpack.c.l.b16 %v254
      %v477 = vunpack.c.l.b16 %v255
      %v478 = vunpack.c.l.b16 %v256
      %v479 = vunpack.c.l.b16 %v257
      %v480 = vunpack.c.l.b16 %v258
      %v481 = vunpack.c.l.b16 %v259
      %v482 = vunpack.c.l.b16 %v260
      %v483 = vunpack.c.l.b16 %v261
      %v484 = vunpack.c.l.b16 %v262
      %v485 = vunpack.c.l.b16 %v263
      %v486 = vunpack.c.l.b16 %v264
      %v487 = vunpack.c.l.b16 %v265
      %v488 = vunpack.c.l.b16 %v266
      %v489 = vunpack.c.l.b16 %v267
      %v490 = vunpack.c.l.b16 %v268
      %v491 = vunpack.c.l.b16 %v269
      %v492 = vpack.c.b16 %v477, %v476
      %v493 = vpack.c.b16 %v479, %v478
      %v494 = vpack.c.b16 %v481, %v480
      %v495 = vpack.c.b16 %v483, %v482
      %v496 = vpack.c.b16 %v485, %v484
      %v497 = vpack.c.b16 %v487, %v486
      %v498 = vpack.c.b16 %v489, %v488
      %v499 = vpack.c.b16 %v491, %v490
      %v501 = vsel %vm334, %v492, 0
      %v504 = vsel %vm334, %v493, 0
      %v507 = vsel %vm334, %v494, 0
      %v510 = vsel %vm334, %v495, 0
      %v513 = vsel %vm334, %v496, 0
      %v516 = vsel %vm334, %v497, 0
      %v519 = vsel %vm334, %v498, 0
      %v522 = vsel %vm334, %v499, 0
      %v525 = vsel %vm359, %v270, 0
      %527 = vmatprep.subr.bf16.mxu0 0
      %528 = vmatpush1.bf16.msra.mxu0 %v525
      %529 = vmatprep.subr.bf16.mxu0 0
      %530 = vmatpush1.bf16.msra.mxu0 0
      %531 = vmatprep.subr.bf16.mxu0 0
      %532 = vmatpush1.bf16.msra.mxu0 0
      %533 = vmatprep.subr.bf16.mxu0 0
      %534 = vmatpush1.bf16.msra.mxu0 0
      %535 = vmatprep.subr.bf16.mxu0 0
      %536 = vmatpush1.bf16.msra.mxu0 0
      %537 = vmatprep.subr.bf16.mxu0 0
      %538 = vmatpush1.bf16.msra.mxu0 0
      %539 = vmatprep.subr.bf16.mxu0 0
      %540 = vmatpush1.bf16.msra.mxu0 0
      %541 = vmatprep.subr.bf16.mxu0 0
      %542 = vmatpush1.bf16.msra.mxu0 0
      %543 = vmatprep.subr.bf16.mxu0 0
      %544 = vmatpush1.bf16.msra.mxu0 0
      %545 = vmatprep.subr.bf16.mxu0 0
      %546 = vmatpush1.bf16.msra.mxu0 0
      %547 = vmatprep.subr.bf16.mxu0 0
      %548 = vmatpush1.bf16.msra.mxu0 0
      %549 = vmatprep.subr.bf16.mxu0 0
      %550 = vmatpush1.bf16.msra.mxu0 0
      %551 = vmatprep.subr.bf16.mxu0 0
      %552 = vmatpush1.bf16.msra.mxu0 0
      %553 = vmatprep.subr.bf16.mxu0 0
      %554 = vmatpush1.bf16.msra.mxu0 0
      %555 = vmatprep.subr.bf16.mxu0 0
      %556 = vmatpush1.bf16.msra.mxu0 0
      %557 = vmatprep.subr.bf16.mxu0 0
      %558 = vmatpush1.bf16.msra.mxu0 0
      %559 = vmatprep.mubr.bf16.mxu0 0
      %560 = vmatmul.mubr.bf16.gmra.mrb[0].mxu0 %v501
      %v561 = vpop.f32.mrb[0].mxu0
      %v562 = vadd.f32 %v398, %v561
      %v563 = vpop.f32.mrb[0].mxu0
      %v564 = vpop.f32.mrb[0].mxu0
      %v565 = vadd.f32 %v401, %v564
      %v566 = vpop.f32.mrb[0].mxu0
      %567 = vmatprep.mubr.bf16.mxu0 0
      %568 = vmatmul.mubr.bf16.gmra.mrb[0].mxu0 %v504
      %v569 = vpop.f32.mrb[0].mxu0
      %v570 = vadd.f32 %v406, %v569
      %v571 = vpop.f32.mrb[0].mxu0
      %v572 = vpop.f32.mrb[0].mxu0
      %v573 = vadd.f32 %v409, %v572
      %v574 = vpop.f32.mrb[0].mxu0
      %575 = vmatprep.mubr.bf16.mxu0 0
      %576 = vmatmul.mubr.bf16.gmra.mrb[0].mxu0 %v507
      %v577 = vpop.f32.mrb[0].mxu0
      %v578 = vadd.f32 %v414, %v577
      %v579 = vpop.f32.mrb[0].mxu0
      %v580 = vpop.f32.mrb[0].mxu0
      %v581 = vadd.f32 %v417, %v580
      %v582 = vpop.f32.mrb[0].mxu0
      %583 = vmatprep.mubr.bf16.mxu0 0
      %584 = vmatmul.mubr.bf16.gmra.mrb[0].mxu0 %v510
      %v585 = vpop.f32.mrb[0].mxu0
      %v586 = vadd.f32 %v422, %v585
      %v587 = vpop.f32.mrb[0].mxu0
      %v588 = vpop.f32.mrb[0].mxu0
      %v589 = vadd.f32 %v425, %v588
      %v590 = vpop.f32.mrb[0].mxu0
      %591 = vmatprep.mubr.bf16.mxu0 0
      %592 = vmatmul.mubr.bf16.gmra.mrb[0].mxu0 %v513
      %v593 = vpop.f32.mrb[0].mxu0
      %v594 = vadd.f32 %v430, %v593
      %v595 = vpop.f32.mrb[0].mxu0
      %v596 = vpop.f32.mrb[0].mxu0
      %v597 = vadd.f32 %v433, %v596
      %v598 = vpop.f32.mrb[0].mxu0
      %599 = vmatprep.mubr.bf16.mxu0 0
      %600 = vmatmul.mubr.bf16.gmra.mrb[0].mxu0 %v516
      %v601 = vpop.f32.mrb[0].mxu0
      %v602 = vadd.f32 %v438, %v601
      %v603 = vpop.f32.mrb[0].mxu0
      %v604 = vpop.f32.mrb[0].mxu0
      %v605 = vadd.f32 %v441, %v604
      %v606 = vpop.f32.mrb[0].mxu0
      %607 = vmatprep.mubr.bf16.mxu0 0
      %608 = vmatmul.mubr.bf16.gmra.mrb[0].mxu0 %v519
      %v609 = vpop.f32.mrb[0].mxu0
      %v610 = vadd.f32 %v446, %v609
      %v611 = vpop.f32.mrb[0].mxu0
      %v612 = vpop.f32.mrb[0].mxu0
      %v613 = vadd.f32 %v449, %v612
      %v614 = vpop.f32.mrb[0].mxu0
      %615 = vmatprep.mubr.bf16.mxu0 0
      %616 = vmatmul.mubr.bf16.gmra.mrb[0].mxu0 %v522
      %v617 = vpop.f32.mrb[0].mxu0
      %v618 = vadd.f32 %v454, %v617
      %v619 = vpop.f32.mrb[0].mxu0
      %v620 = vpop.f32.mrb[0].mxu0
      %v621 = vadd.f32 %v457, %v620
      %v622 = vpop.f32.mrb[0].mxu0
      %623 = vdwg.mxu0
      %s624 = sadd.s32 %s249, 32
      %s625 = sshra.s32 %s624, 3
      %s626 = sand.u32 %s624, 7
      %s627 = smul.addr %s625, 4
      %s628 = scalar_lea.vmem %s237, %s627
      %v629 = vld [vmem:[%s628] sm:$0xf]
      %v630 = vld [vmem:[%s628 + $0x4] sm:$0xf]
      %v631 = vld [vmem:[%s628 + $0x8] sm:$0xf]
      %v632 = vld [vmem:[%s628 + $0xc] sm:$0xf]
      %v633 = vld [vmem:[%s628 + $0x10] sm:$0xf]
      %v634 = vld [vmem:[%s628 + $0x14] sm:$0xf]
      %v635 = vld [vmem:[%s628 + $0x18] sm:$0xf]
      %v636 = vld [vmem:[%s628 + $0x1c] sm:$0xf]
      %v637 = vld [vmem:[%s628 + $0x20] sm:$0xf]
      %v638 = vld [vmem:[%s628 + $0x24] sm:$0xf]
      %v639 = vld [vmem:[%s628 + $0x28] sm:$0xf]
      %v640 = vld [vmem:[%s628 + $0x2c] sm:$0xf]
      %v641 = vld [vmem:[%s628 + $0x30] sm:$0xf]
      %v642 = vld [vmem:[%s628 + $0x34] sm:$0xf]
      %v643 = vld [vmem:[%s628 + $0x38] sm:$0xf]
      %v644 = vld [vmem:[%s628 + $0x3c] sm:$0xf]
      %s645 = scalar_lea.vmem %s1, 4
      %v646 = vld [vmem:[%s645] sm:$0x3]
      %v663 = vunpack.c.l.b16 %v629
      %v664 = vunpack.c.l.b16 %v630
      %v665 = vunpack.c.l.b16 %v631
      %v666 = vunpack.c.l.b16 %v632
      %v667 = vunpack.c.l.b16 %v633
      %v668 = vunpack.c.l.b16 %v634
      %v669 = vunpack.c.l.b16 %v635
      %v670 = vunpack.c.l.b16 %v636
      %v671 = vunpack.c.l.b16 %v637
      %v672 = vunpack.c.l.b16 %v638
      %v673 = vunpack.c.l.b16 %v639
      %v674 = vunpack.c.l.b16 %v640
      %v675 = vunpack.c.l.b16 %v641
      %v676 = vunpack.c.l.b16 %v642
      %v677 = vunpack.c.l.b16 %v643
      %v678 = vunpack.c.l.b16 %v644
      %v679 = vpack.c.b16 %v664, %v663
      %v680 = vpack.c.b16 %v666, %v665
      %v681 = vpack.c.b16 %v668, %v667
      %v682 = vpack.c.b16 %v670, %v669
      %v683 = vpack.c.b16 %v672, %v671
      %v684 = vpack.c.b16 %v674, %v673
      %v685 = vpack.c.b16 %v676, %v675
      %v686 = vpack.c.b16 %v678, %v677
      %v688 = vsel %vm334, %v679, 0
      %v691 = vsel %vm334, %v680, 0
      %v694 = vsel %vm334, %v681, 0
      %v697 = vsel %vm334, %v682, 0
      %v700 = vsel %vm334, %v683, 0
      %v703 = vsel %vm334, %v684, 0
      %v706 = vsel %vm334, %v685, 0
      %v709 = vsel %vm334, %v686, 0
      %v712 = vsel %vm359, %v646, 0
      %714 = vmatprep.subr.bf16.mxu0 0
      %715 = vmatpush1.bf16.msra.mxu0 %v712
      %716 = vmatprep.subr.bf16.mxu0 0
      %717 = vmatpush1.bf16.msra.mxu0 0
      %718 = vmatprep.subr.bf16.mxu0 0
      %719 = vmatpush1.bf16.msra.mxu0 0
      %720 = vmatprep.subr.bf16.mxu0 0
      %721 = vmatpush1.bf16.msra.mxu0 0
      %722 = vmatprep.subr.bf16.mxu0 0
      %723 = vmatpush1.bf16.msra.mxu0 0
      %724 = vmatprep.subr.bf16.mxu0 0
      %725 = vmatpush1.bf16.msra.mxu0 0
      %726 = vmatprep.subr.bf16.mxu0 0
      %727 = vmatpush1.bf16.msra.mxu0 0
      %728 = vmatprep.subr.bf16.mxu0 0
      %729 = vmatpush1.bf16.msra.mxu0 0
      %730 = vmatprep.subr.bf16.mxu0 0
      %731 = vmatpush1.bf16.msra.mxu0 0
      %732 = vmatprep.subr.bf16.mxu0 0
      %733 = vmatpush1.bf16.msra.mxu0 0
      %734 = vmatprep.subr.bf16.mxu0 0
      %735 = vmatpush1.bf16.msra.mxu0 0
      %736 = vmatprep.subr.bf16.mxu0 0
      %737 = vmatpush1.bf16.msra.mxu0 0
      %738 = vmatprep.subr.bf16.mxu0 0
      %739 = vmatpush1.bf16.msra.mxu0 0
      %740 = vmatprep.subr.bf16.mxu0 0
      %741 = vmatpush1.bf16.msra.mxu0 0
      %742 = vmatprep.subr.bf16.mxu0 0
      %743 = vmatpush1.bf16.msra.mxu0 0
      %744 = vmatprep.subr.bf16.mxu0 0
      %745 = vmatpush1.bf16.msra.mxu0 0
      %746 = vmatprep.mubr.bf16.mxu0 0
      %747 = vmatmul.mubr.bf16.gmra.mrb[0].mxu0 %v688
      %v748 = vpop.f32.mrb[0].mxu0
      %v749 = vadd.f32 0.0, %v748
      %v750 = vpop.f32.mrb[0].mxu0
      %v751 = vpop.f32.mrb[0].mxu0
      %v752 = vadd.f32 0.0, %v751
      %v753 = vpop.f32.mrb[0].mxu0
      %754 = vmatprep.mubr.bf16.mxu0 0
      %755 = vmatmul.mubr.bf16.gmra.mrb[0].mxu0 %v691
      %v756 = vpop.f32.mrb[0].mxu0
      %v757 = vadd.f32 0.0, %v756
      %v758 = vpop.f32.mrb[0].mxu0
      %v759 = vpop.f32.mrb[0].mxu0
      %v760 = vadd.f32 0.0, %v759
      %v761 = vpop.f32.mrb[0].mxu0
      %762 = vmatprep.mubr.bf16.mxu0 0
      %763 = vmatmul.mubr.bf16.gmra.mrb[0].mxu0 %v694
      %v764 = vpop.f32.mrb[0].mxu0
      %v765 = vadd.f32 0.0, %v764
      %v766 = vpop.f32.mrb[0].mxu0
      %v767 = vpop.f32.mrb[0].mxu0
      %v768 = vadd.f32 0.0, %v767
      %v769 = vpop.f32.mrb[0].mxu0
      %770 = vmatprep.mubr.bf16.mxu0 0
      %771 = vmatmul.mubr.bf16.gmra.mrb[0].mxu0 %v697
      %v772 = vpop.f32.mrb[0].mxu0
      %v773 = vadd.f32 0.0, %v772
      %v774 = vpop.f32.mrb[0].mxu0
      %v775 = vpop.f32.mrb[0].mxu0
      %v776 = vadd.f32 0.0, %v775
      %v777 = vpop.f32.mrb[0].mxu0
      %778 = vmatprep.mubr.bf16.mxu0 0
      %779 = vmatmul.mubr.bf16.gmra.mrb[0].mxu0 %v700
      %v780 = vpop.f32.mrb[0].mxu0
      %v781 = vadd.f32 0.0, %v780
      %v782 = vpop.f32.mrb[0].mxu0
      %v783 = vpop.f32.mrb[0].mxu0
      %v784 = vadd.f32 0.0, %v783
      %v785 = vpop.f32.mrb[0].mxu0
      %786 = vmatprep.mubr.bf16.mxu0 0
      %787 = vmatmul.mubr.bf16.gmra.mrb[0].mxu0 %v703
      %v788 = vpop.f32.mrb[0].mxu0
      %v789 = vadd.f32 0.0, %v788
      %v790 = vpop.f32.mrb[0].mxu0
      %v791 = vpop.f32.mrb[0].mxu0
      %v792 = vadd.f32 0.0, %v791
      %v793 = vpop.f32.mrb[0].mxu0
      %794 = vmatprep.mubr.bf16.mxu0 0
      %795 = vmatmul.mubr.bf16.gmra.mrb[0].mxu0 %v706
      %v796 = vpop.f32.mrb[0].mxu0
      %v797 = vadd.f32 0.0, %v796
      %v798 = vpop.f32.mrb[0].mxu0
      %v799 = vpop.f32.mrb[0].mxu0
      %v800 = vadd.f32 0.0, %v799
      %v801 = vpop.f32.mrb[0].mxu0
      %802 = vmatprep.mubr.bf16.mxu0 0
      %803 = vmatmul.mubr.bf16.gmra.mrb[0].mxu0 %v709
      %v804 = vpop.f32.mrb[0].mxu0
      %v805 = vadd.f32 0.0, %v804
      %v806 = vpop.f32.mrb[0].mxu0
      %v807 = vpop.f32.mrb[0].mxu0
      %v808 = vadd.f32 0.0, %v807
      %v809 = vpop.f32.mrb[0].mxu0
      %810 = vdwg.mxu0
      %v811 = vadd.f32 %v562, %v749
      %v812 = vadd.f32 %v565, %v752
      %v813 = vadd.f32 %v570, %v757
      %v814 = vadd.f32 %v573, %v760
      %v815 = vadd.f32 %v578, %v765
      %v816 = vadd.f32 %v581, %v768
      %v817 = vadd.f32 %v586, %v773
      %v818 = vadd.f32 %v589, %v776
      %v819 = vadd.f32 %v594, %v781
      %v820 = vadd.f32 %v597, %v784
      %v821 = vadd.f32 %v602, %v789
      %v822 = vadd.f32 %v605, %v792
      %v823 = vadd.f32 %v610, %v797
      %v824 = vadd.f32 %v613, %v800
      %v825 = vadd.f32 %v618, %v805
      %v826 = vadd.f32 %v621, %v808
      %s827 = sadd.s32 %s249, 48
      %s828 = sshra.s32 %s827, 3
      %s829 = sand.u32 %s827, 7
      %s830 = smul.addr %s828, 4
      %s831 = scalar_lea.vmem %s237, %s830
      %v832 = vld [vmem:[%s831] sm:$0xf]
      %v833 = vld [vmem:[%s831 + $0x4] sm:$0xf]
      %v834 = vld [vmem:[%s831 + $0x8] sm:$0xf]
      %v835 = vld [vmem:[%s831 + $0xc] sm:$0xf]
      %v836 = vld [vmem:[%s831 + $0x10] sm:$0xf]
      %v837 = vld [vmem:[%s831 + $0x14] sm:$0xf]
      %v838 = vld [vmem:[%s831 + $0x18] sm:$0xf]
      %v839 = vld [vmem:[%s831 + $0x1c] sm:$0xf]
      %v840 = vld [vmem:[%s831 + $0x20] sm:$0xf]
      %v841 = vld [vmem:[%s831 + $0x24] sm:$0xf]
      %v842 = vld [vmem:[%s831 + $0x28] sm:$0xf]
      %v843 = vld [vmem:[%s831 + $0x2c] sm:$0xf]
      %v844 = vld [vmem:[%s831 + $0x30] sm:$0xf]
      %v845 = vld [vmem:[%s831 + $0x34] sm:$0xf]
      %v846 = vld [vmem:[%s831 + $0x38] sm:$0xf]
      %v847 = vld [vmem:[%s831 + $0x3c] sm:$0xf]
      %s848 = scalar_lea.vmem %s1, 6
      %v849 = vld [vmem:[%s848] sm:$0x3]
      %v866 = vunpack.c.l.b16 %v832
      %v867 = vunpack.c.l.b16 %v833
      %v868 = vunpack.c.l.b16 %v834
      %v869 = vunpack.c.l.b16 %v835
      %v870 = vunpack.c.l.b16 %v836
      %v871 = vunpack.c.l.b16 %v837
      %v872 = vunpack.c.l.b16 %v838
      %v873 = vunpack.c.l.b16 %v839
      %v874 = vunpack.c.l.b16 %v840
      %v875 = vunpack.c.l.b16 %v841
      %v876 = vunpack.c.l.b16 %v842
      %v877 = vunpack.c.l.b16 %v843
      %v878 = vunpack.c.l.b16 %v844
      %v879 = vunpack.c.l.b16 %v845
      %v880 = vunpack.c.l.b16 %v846
      %v881 = vunpack.c.l.b16 %v847
      %v882 = vpack.c.b16 %v867, %v866
      %v883 = vpack.c.b16 %v869, %v868
      %v884 = vpack.c.b16 %v871, %v870
      %v885 = vpack.c.b16 %v873, %v872
      %v886 = vpack.c.b16 %v875, %v874
      %v887 = vpack.c.b16 %v877, %v876
      %v888 = vpack.c.b16 %v879, %v878
      %v889 = vpack.c.b16 %v881, %v880
      %v891 = vsel %vm334, %v882, 0
      %v894 = vsel %vm334, %v883, 0
      %v897 = vsel %vm334, %v884, 0
      %v900 = vsel %vm334, %v885, 0
      %v903 = vsel %vm334, %v886, 0
      %v906 = vsel %vm334, %v887, 0
      %v909 = vsel %vm334, %v888, 0
      %v912 = vsel %vm334, %v889, 0
      %v915 = vsel %vm359, %v849, 0
      %917 = vmatprep.subr.bf16.mxu0 0
      %918 = vmatpush1.bf16.msra.mxu0 %v915
      %919 = vmatprep.subr.bf16.mxu0 0
      %920 = vmatpush1.bf16.msra.mxu0 0
      %921 = vmatprep.subr.bf16.mxu0 0
      %922 = vmatpush1.bf16.msra.mxu0 0
      %923 = vmatprep.subr.bf16.mxu0 0
      %924 = vmatpush1.bf16.msra.mxu0 0
      %925 = vmatprep.subr.bf16.mxu0 0
      %926 = vmatpush1.bf16.msra.mxu0 0
      %927 = vmatprep.subr.bf16.mxu0 0
      %928 = vmatpush1.bf16.msra.mxu0 0
      %929 = vmatprep.subr.bf16.mxu0 0
      %930 = vmatpush1.bf16.msra.mxu0 0
      %931 = vmatprep.subr.bf16.mxu0 0
      %932 = vmatpush1.bf16.msra.mxu0 0
      %933 = vmatprep.subr.bf16.mxu0 0
      %934 = vmatpush1.bf16.msra.mxu0 0
      %935 = vmatprep.subr.bf16.mxu0 0
      %936 = vmatpush1.bf16.msra.mxu0 0
      %937 = vmatprep.subr.bf16.mxu0 0
      %938 = vmatpush1.bf16.msra.mxu0 0
      %939 = vmatprep.subr.bf16.mxu0 0
      %940 = vmatpush1.bf16.msra.mxu0 0
      %941 = vmatprep.subr.bf16.mxu0 0
      %942 = vmatpush1.bf16.msra.mxu0 0
      %943 = vmatprep.subr.bf16.mxu0 0
      %944 = vmatpush1.bf16.msra.mxu0 0
      %945 = vmatprep.subr.bf16.mxu0 0
      %946 = vmatpush1.bf16.msra.mxu0 0
      %947 = vmatprep.subr.bf16.mxu0 0
      %948 = vmatpush1.bf16.msra.mxu0 0
      %949 = vmatprep.mubr.bf16.mxu0 0
      %950 = vmatmul.mubr.bf16.gmra.mrb[0].mxu0 %v891
      %v951 = vpop.f32.mrb[0].mxu0
      %v952 = vadd.f32 0.0, %v951
      %v953 = vpop.f32.mrb[0].mxu0
      %v954 = vpop.f32.mrb[0].mxu0
      %v955 = vadd.f32 0.0, %v954
      %v956 = vpop.f32.mrb[0].mxu0
      %957 = vmatprep.mubr.bf16.mxu0 0
      %958 = vmatmul.mubr.bf16.gmra.mrb[0].mxu0 %v894
      %v959 = vpop.f32.mrb[0].mxu0
      %v960 = vadd.f32 0.0, %v959
      %v961 = vpop.f32.mrb[0].mxu0
      %v962 = vpop.f32.mrb[0].mxu0
      %v963 = vadd.f32 0.0, %v962
      %v964 = vpop.f32.mrb[0].mxu0
      %965 = vmatprep.mubr.bf16.mxu0 0
      %966 = vmatmul.mubr.bf16.gmra.mrb[0].mxu0 %v897
      %v967 = vpop.f32.mrb[0].mxu0
      %v968 = vadd.f32 0.0, %v967
      %v969 = vpop.f32.mrb[0].mxu0
      %v970 = vpop.f32.mrb[0].mxu0
      %v971 = vadd.f32 0.0, %v970
      %v972 = vpop.f32.mrb[0].mxu0
      %973 = vmatprep.mubr.bf16.mxu0 0
      %974 = vmatmul.mubr.bf16.gmra.mrb[0].mxu0 %v900
      %v975 = vpop.f32.mrb[0].mxu0
      %v976 = vadd.f32 0.0, %v975
      %v977 = vpop.f32.mrb[0].mxu0
      %v978 = vpop.f32.mrb[0].mxu0
      %v979 = vadd.f32 0.0, %v978
      %v980 = vpop.f32.mrb[0].mxu0
      %981 = vmatprep.mubr.bf16.mxu0 0
      %982 = vmatmul.mubr.bf16.gmra.mrb[0].mxu0 %v903
      %v983 = vpop.f32.mrb[0].mxu0
      %v984 = vadd.f32 0.0, %v983
      %v985 = vpop.f32.mrb[0].mxu0
      %v986 = vpop.f32.mrb[0].mxu0
      %v987 = vadd.f32 0.0, %v986
      %v988 = vpop.f32.mrb[0].mxu0
      %989 = vmatprep.mubr.bf16.mxu0 0
      %990 = vmatmul.mubr.bf16.gmra.mrb[0].mxu0 %v906
      %v991 = vpop.f32.mrb[0].mxu0
      %v992 = vadd.f32 0.0, %v991
      %v993 = vpop.f32.mrb[0].mxu0
      %v994 = vpop.f32.mrb[0].mxu0
      %v995 = vadd.f32 0.0, %v994
      %v996 = vpop.f32.mrb[0].mxu0
      %997 = vmatprep.mubr.bf16.mxu0 0
      %998 = vmatmul.mubr.bf16.gmra.mrb[0].mxu0 %v909
      %v999 = vpop.f32.mrb[0].mxu0
      %v1000 = vadd.f32 0.0, %v999
      %v1001 = vpop.f32.mrb[0].mxu0
      %v1002 = vpop.f32.mrb[0].mxu0
      %v1003 = vadd.f32 0.0, %v1002
      %v1004 = vpop.f32.mrb[0].mxu0
      %1005 = vmatprep.mubr.bf16.mxu0 0
      %1006 = vmatmul.mubr.bf16.gmra.mrb[0].mxu0 %v912
      %v1007 = vpop.f32.mrb[0].mxu0
      %v1008 = vadd.f32 0.0, %v1007
      %v1009 = vpop.f32.mrb[0].mxu0
      %v1010 = vpop.f32.mrb[0].mxu0
      %v1011 = vadd.f32 0.0, %v1010
      %v1012 = vpop.f32.mrb[0].mxu0
      %1013 = vdwg.mxu0
      %v1014 = vadd.f32 %v811, %v952
      %v1015 = vadd.f32 %v812, %v955
      %v1016 = vadd.f32 %v813, %v960
      %v1017 = vadd.f32 %v814, %v963
      %v1018 = vadd.f32 %v815, %v968
      %v1019 = vadd.f32 %v816, %v971
      %v1020 = vadd.f32 %v817, %v976
      %v1021 = vadd.f32 %v818, %v979
      %v1022 = vadd.f32 %v819, %v984
      %v1023 = vadd.f32 %v820, %v987
      %v1024 = vadd.f32 %v821, %v992
      %v1025 = vadd.f32 %v822, %v995
      %v1026 = vadd.f32 %v823, %v1000
      %v1027 = vadd.f32 %v824, %v1003
      %v1028 = vadd.f32 %v825, %v1008
      %v1029 = vadd.f32 %v826, %v1011
      %s1030 = sadd.s32 %s249, 64
      %s1031 = sshra.s32 %s1030, 3
      %s1032 = sand.u32 %s1030, 7
      %s1033 = smul.addr %s1031, 4
      %s1034 = scalar_lea.vmem %s237, %s1033
      %v1035 = vld [vmem:[%s1034] sm:$0xf]
      %v1036 = vld [vmem:[%s1034 + $0x4] sm:$0xf]
      %v1037 = vld [vmem:[%s1034 + $0x8] sm:$0xf]
      %v1038 = vld [vmem:[%s1034 + $0xc] sm:$0xf]
      %v1039 = vld [vmem:[%s1034 + $0x10] sm:$0xf]
      %v1040 = vld [vmem:[%s1034 + $0x14] sm:$0xf]
      %v1041 = vld [vmem:[%s1034 + $0x18] sm:$0xf]
      %v1042 = vld [vmem:[%s1034 + $0x1c] sm:$0xf]
      %v1043 = vld [vmem:[%s1034 + $0x20] sm:$0xf]
      %v1044 = vld [vmem:[%s1034 + $0x24] sm:$0xf]
      %v1045 = vld [vmem:[%s1034 + $0x28] sm:$0xf]
      %v1046 = vld [vmem:[%s1034 + $0x2c] sm:$0xf]
      %v1047 = vld [vmem:[%s1034 + $0x30] sm:$0xf]
      %v1048 = vld [vmem:[%s1034 + $0x34] sm:$0xf]
      %v1049 = vld [vmem:[%s1034 + $0x38] sm:$0xf]
      %v1050 = vld [vmem:[%s1034 + $0x3c] sm:$0xf]
      %s1051 = scalar_lea.vmem %s1, 8
      %v1052 = vld [vmem:[%s1051] sm:$0x3]
      %v1069 = vunpack.c.l.b16 %v1035
      %v1070 = vunpack.c.l.b16 %v1036
      %v1071 = vunpack.c.l.b16 %v1037
      %v1072 = vunpack.c.l.b16 %v1038
      %v1073 = vunpack.c.l.b16 %v1039
      %v1074 = vunpack.c.l.b16 %v1040
      %v1075 = vunpack.c.l.b16 %v1041
      %v1076 = vunpack.c.l.b16 %v1042
      %v1077 = vunpack.c.l.b16 %v1043
      %v1078 = vunpack.c.l.b16 %v1044
      %v1079 = vunpack.c.l.b16 %v1045
      %v1080 = vunpack.c.l.b16 %v1046
      %v1081 = vunpack.c.l.b16 %v1047
      %v1082 = vunpack.c.l.b16 %v1048
      %v1083 = vunpack.c.l.b16 %v1049
      %v1084 = vunpack.c.l.b16 %v1050
      %v1085 = vpack.c.b16 %v1070, %v1069
      %v1086 = vpack.c.b16 %v1072, %v1071
      %v1087 = vpack.c.b16 %v1074, %v1073
      %v1088 = vpack.c.b16 %v1076, %v1075
      %v1089 = vpack.c.b16 %v1078, %v1077
      %v1090 = vpack.c.b16 %v1080, %v1079
      %v1091 = vpack.c.b16 %v1082, %v1081
      %v1092 = vpack.c.b16 %v1084, %v1083
      %v1094 = vsel %vm334, %v1085, 0
      %v1097 = vsel %vm334, %v1086, 0
      %v1100 = vsel %vm334, %v1087, 0
      %v1103 = vsel %vm334, %v1088, 0
      %v1106 = vsel %vm334, %v1089, 0
      %v1109 = vsel %vm334, %v1090, 0
      %v1112 = vsel %vm334, %v1091, 0
      %v1115 = vsel %vm334, %v1092, 0
      %v1118 = vsel %vm359, %v1052, 0
      %1120 = vmatprep.subr.bf16.mxu0 0
      %1121 = vmatpush1.bf16.msra.mxu0 %v1118
      %1122 = vmatprep.subr.bf16.mxu0 0
      %1123 = vmatpush1.bf16.msra.mxu0 0
      %1124 = vmatprep.subr.bf16.mxu0 0
      %1125 = vmatpush1.bf16.msra.mxu0 0
      %1126 = vmatprep.subr.bf16.mxu0 0
      %1127 = vmatpush1.bf16.msra.mxu0 0
      %1128 = vmatprep.subr.bf16.mxu0 0
      %1129 = vmatpush1.bf16.msra.mxu0 0
      %1130 = vmatprep.subr.bf16.mxu0 0
      %1131 = vmatpush1.bf16.msra.mxu0 0
      %1132 = vmatprep.subr.bf16.mxu0 0
      %1133 = vmatpush1.bf16.msra.mxu0 0
      %1134 = vmatprep.subr.bf16.mxu0 0
      %1135 = vmatpush1.bf16.msra.mxu0 0
      %1136 = vmatprep.subr.bf16.mxu0 0
      %1137 = vmatpush1.bf16.msra.mxu0 0
      %1138 = vmatprep.subr.bf16.mxu0 0
      %1139 = vmatpush1.bf16.msra.mxu0 0
      %1140 = vmatprep.subr.bf16.mxu0 0
      %1141 = vmatpush1.bf16.msra.mxu0 0
      %1142 = vmatprep.subr.bf16.mxu0 0
      %1143 = vmatpush1.bf16.msra.mxu0 0
      %1144 = vmatprep.subr.bf16.mxu0 0
      %1145 = vmatpush1.bf16.msra.mxu0 0
      %1146 = vmatprep.subr.bf16.mxu0 0
      %1147 = vmatpush1.bf16.msra.mxu0 0
      %1148 = vmatprep.subr.bf16.mxu0 0
      %1149 = vmatpush1.bf16.msra.mxu0 0
      %1150 = vmatprep.subr.bf16.mxu0 0
      %1151 = vmatpush1.bf16.msra.mxu0 0
      %1152 = vmatprep.mubr.bf16.mxu0 0
      %1153 = vmatmul.mubr.bf16.gmra.mrb[0].mxu0 %v1094
      %v1154 = vpop.f32.mrb[0].mxu0
      %v1155 = vadd.f32 0.0, %v1154
      %v1156 = vpop.f32.mrb[0].mxu0
      %v1157 = vpop.f32.mrb[0].mxu0
      %v1158 = vadd.f32 0.0, %v1157
      %v1159 = vpop.f32.mrb[0].mxu0
      %1160 = vmatprep.mubr.bf16.mxu0 0
      %1161 = vmatmul.mubr.bf16.gmra.mrb[0].mxu0 %v1097
      %v1162 = vpop.f32.mrb[0].mxu0
      %v1163 = vadd.f32 0.0, %v1162
      %v1164 = vpop.f32.mrb[0].mxu0
      %v1165 = vpop.f32.mrb[0].mxu0
      %v1166 = vadd.f32 0.0, %v1165
      %v1167 = vpop.f32.mrb[0].mxu0
      %1168 = vmatprep.mubr.bf16.mxu0 0
      %1169 = vmatmul.mubr.bf16.gmra.mrb[0].mxu0 %v1100
      %v1170 = vpop.f32.mrb[0].mxu0
      %v1171 = vadd.f32 0.0, %v1170
      %v1172 = vpop.f32.mrb[0].mxu0
      %v1173 = vpop.f32.mrb[0].mxu0
      %v1174 = vadd.f32 0.0, %v1173
      %v1175 = vpop.f32.mrb[0].mxu0
      %1176 = vmatprep.mubr.bf16.mxu0 0
      %1177 = vmatmul.mubr.bf16.gmra.mrb[0].mxu0 %v1103
      %v1178 = vpop.f32.mrb[0].mxu0
      %v1179 = vadd.f32 0.0, %v1178
      %v1180 = vpop.f32.mrb[0].mxu0
      %v1181 = vpop.f32.mrb[0].mxu0
      %v1182 = vadd.f32 0.0, %v1181
      %v1183 = vpop.f32.mrb[0].mxu0
      %1184 = vmatprep.mubr.bf16.mxu0 0
      %1185 = vmatmul.mubr.bf16.gmra.mrb[0].mxu0 %v1106
      %v1186 = vpop.f32.mrb[0].mxu0
      %v1187 = vadd.f32 0.0, %v1186
      %v1188 = vpop.f32.mrb[0].mxu0
      %v1189 = vpop.f32.mrb[0].mxu0
      %v1190 = vadd.f32 0.0, %v1189
      %v1191 = vpop.f32.mrb[0].mxu0
      %1192 = vmatprep.mubr.bf16.mxu0 0
      %1193 = vmatmul.mubr.bf16.gmra.mrb[0].mxu0 %v1109
      %v1194 = vpop.f32.mrb[0].mxu0
      %v1195 = vadd.f32 0.0, %v1194
      %v1196 = vpop.f32.mrb[0].mxu0
      %v1197 = vpop.f32.mrb[0].mxu0
      %v1198 = vadd.f32 0.0, %v1197
      %v1199 = vpop.f32.mrb[0].mxu0
      %1200 = vmatprep.mubr.bf16.mxu0 0
      %1201 = vmatmul.mubr.bf16.gmra.mrb[0].mxu0 %v1112
      %v1202 = vpop.f32.mrb[0].mxu0
      %v1203 = vadd.f32 0.0, %v1202
      %v1204 = vpop.f32.mrb[0].mxu0
      %v1205 = vpop.f32.mrb[0].mxu0
      %v1206 = vadd.f32 0.0, %v1205
      %v1207 = vpop.f32.mrb[0].mxu0
      %1208 = vmatprep.mubr.bf16.mxu0 0
      %1209 = vmatmul.mubr.bf16.gmra.mrb[0].mxu0 %v1115
      %v1210 = vpop.f32.mrb[0].mxu0
      %v1211 = vadd.f32 0.0, %v1210
      %v1212 = vpop.f32.mrb[0].mxu0
      %v1213 = vpop.f32.mrb[0].mxu0
      %v1214 = vadd.f32 0.0, %v1213
      %v1215 = vpop.f32.mrb[0].mxu0
      %1216 = vdwg.mxu0
      %v1217 = vadd.f32 %v1014, %v1155
      %v1218 = vadd.f32 %v1015, %v1158
      %v1219 = vadd.f32 %v1016, %v1163
      %v1220 = vadd.f32 %v1017, %v1166
      %v1221 = vadd.f32 %v1018, %v1171
      %v1222 = vadd.f32 %v1019, %v1174
      %v1223 = vadd.f32 %v1020, %v1179
      %v1224 = vadd.f32 %v1021, %v1182
      %v1225 = vadd.f32 %v1022, %v1187
      %v1226 = vadd.f32 %v1023, %v1190
      %v1227 = vadd.f32 %v1024, %v1195
      %v1228 = vadd.f32 %v1025, %v1198
      %v1229 = vadd.f32 %v1026, %v1203
      %v1230 = vadd.f32 %v1027, %v1206
      %v1231 = vadd.f32 %v1028, %v1211
      %v1232 = vadd.f32 %v1029, %v1214
      %v1233 = vld [vmem:[%s2] sm:$0x1]
      %v1235 = vlaneseq
      %v1236 = vshrl.u32 %v1235, 7
      %v1237 = vsub.s32 0, %v1236
      %v1238 = vrot.slane %v1233, %v1237
      %v1240 = vadd.f32 %v1217, %v1238
      %v1241 = vadd.f32 %v1218, %v1238
      %v1242 = vadd.f32 %v1219, %v1238
      %v1243 = vadd.f32 %v1220, %v1238
      %v1244 = vadd.f32 %v1221, %v1238
      %v1245 = vadd.f32 %v1222, %v1238
      %v1246 = vadd.f32 %v1223, %v1238
      %v1247 = vadd.f32 %v1224, %v1238
      %v1248 = vadd.f32 %v1225, %v1238
      %v1249 = vadd.f32 %v1226, %v1238
      %v1250 = vadd.f32 %v1227, %v1238
      %v1251 = vadd.f32 %v1228, %v1238
      %v1252 = vadd.f32 %v1229, %v1238
      %v1253 = vadd.f32 %v1230, %v1238
      %v1254 = vadd.f32 %v1231, %v1238
      %v1255 = vadd.f32 %v1232, %v1238
      %v1256 = vmax.f32 %v1240, 0.0
      %v1257 = vmax.f32 %v1241, 0.0
      %v1258 = vmax.f32 %v1242, 0.0
      %v1259 = vmax.f32 %v1243, 0.0
      %v1260 = vmax.f32 %v1244, 0.0
      %v1261 = vmax.f32 %v1245, 0.0
      %v1262 = vmax.f32 %v1246, 0.0
      %v1263 = vmax.f32 %v1247, 0.0
      %v1264 = vmax.f32 %v1248, 0.0
      %v1265 = vmax.f32 %v1249, 0.0
      %v1266 = vmax.f32 %v1250, 0.0
      %v1267 = vmax.f32 %v1251, 0.0
      %v1268 = vmax.f32 %v1252, 0.0
      %v1269 = vmax.f32 %v1253, 0.0
      %v1270 = vmax.f32 %v1254, 0.0
      %v1271 = vmax.f32 %v1255, 0.0
      %v1272 = vld [vmem:[%s3] sm:$0x1]
      %v1274 = vlaneseq
      %v1275 = vshrl.u32 %v1274, 7
      %v1276 = vsub.s32 0, %v1275
      %v1277 = vrot.slane %v1272, %v1276
      %v1279 = vmul.f32 %v1256, %v1277
      %v1280 = vmul.f32 %v1257, %v1277
      %v1281 = vmul.f32 %v1258, %v1277
      %v1282 = vmul.f32 %v1259, %v1277
      %v1283 = vmul.f32 %v1260, %v1277
      %v1284 = vmul.f32 %v1261, %v1277
      %v1285 = vmul.f32 %v1262, %v1277
      %v1286 = vmul.f32 %v1263, %v1277
      %v1287 = vmul.f32 %v1264, %v1277
      %v1288 = vmul.f32 %v1265, %v1277
      %v1289 = vmul.f32 %v1266, %v1277
      %v1290 = vmul.f32 %v1267, %v1277
      %v1291 = vmul.f32 %v1268, %v1277
      %v1292 = vmul.f32 %v1269, %v1277
      %v1293 = vmul.f32 %v1270, %v1277
      %v1294 = vmul.f32 %v1271, %v1277
      %v1295 = vld [vmem:[%s4] sm:$0x1]
      %v1297 = vlaneseq
      %v1298 = vshrl.u32 %v1297, 7
      %v1299 = vsub.s32 0, %v1298
      %v1300 = vrot.slane %v1295, %v1299
      %v1302 = vadd.f32 %v1279, %v1300
      %v1303 = vadd.f32 %v1280, %v1300
      %v1304 = vadd.f32 %v1281, %v1300
      %v1305 = vadd.f32 %v1282, %v1300
      %v1306 = vadd.f32 %v1283, %v1300
      %v1307 = vadd.f32 %v1284, %v1300
      %v1308 = vadd.f32 %v1285, %v1300
      %v1309 = vadd.f32 %v1286, %v1300
      %v1310 = vadd.f32 %v1287, %v1300
      %v1311 = vadd.f32 %v1288, %v1300
      %v1312 = vadd.f32 %v1289, %v1300
      %v1313 = vadd.f32 %v1290, %v1300
      %v1314 = vadd.f32 %v1291, %v1300
      %v1315 = vadd.f32 %v1292, %v1300
      %v1316 = vadd.f32 %v1293, %v1300
      %v1317 = vadd.f32 %v1294, %v1300
      %vm1318 = vcmask 64512
      %1319 = vst.msk [vmem:[%s246] sm:$0xff] %vm1318, %v1302
      %1320 = vst.msk [vmem:[%s246 + $0x8] sm:$0xff] %vm1318, %v1303
      %1321 = vst.msk [vmem:[%s246 + $0x10] sm:$0xff] %vm1318, %v1304
      %1322 = vst.msk [vmem:[%s246 + $0x18] sm:$0xff] %vm1318, %v1305
      %1323 = vst.msk [vmem:[%s246 + $0x20] sm:$0xff] %vm1318, %v1306
      %1324 = vst.msk [vmem:[%s246 + $0x28] sm:$0xff] %vm1318, %v1307
      %1325 = vst.msk [vmem:[%s246 + $0x30] sm:$0xff] %vm1318, %v1308
      %1326 = vst.msk [vmem:[%s246 + $0x38] sm:$0xff] %vm1318, %v1309
      %1327 = vst.msk [vmem:[%s246 + $0x40] sm:$0xff] %vm1318, %v1310
      %1328 = vst.msk [vmem:[%s246 + $0x48] sm:$0xff] %vm1318, %v1311
      %1329 = vst.msk [vmem:[%s246 + $0x50] sm:$0xff] %vm1318, %v1312
      %1330 = vst.msk [vmem:[%s246 + $0x58] sm:$0xff] %vm1318, %v1313
      %1331 = vst.msk [vmem:[%s246 + $0x60] sm:$0xff] %vm1318, %v1314
      %1332 = vst.msk [vmem:[%s246 + $0x68] sm:$0xff] %vm1318, %v1315
      %1333 = vst.msk [vmem:[%s246 + $0x70] sm:$0xff] %vm1318, %v1316
      %1334 = vst.msk [vmem:[%s246 + $0x78] sm:$0xff] %vm1318, %v1317
      %s1335 = smul.u32 16, %s21
      %p1336 = scmp.lt.s32.totalorder %s20, 1
      %s1337 = scalar_select %p1336, %s20, 1
      %p1338 = scmp.lt.s32.totalorder %s1335, 31
      %s1339 = scalar_select %p1338, %s1335, 31
      %s1340 = smul.addr %s1337, 32
      %s1341 = sadd.s32 %s1339, %s1340
      %s1342 = smul.addr %s1341, 8
      %s1343 = scalar_lea.vmem %s5, %s1342
      // Predicated region
      $region41: #{inception_forward.6} parent=39 // pred_check
        %p1344 = pneg %p158
      $region42: #{inception_forward.6} parent=39 // pred_check_branch
        %1346 = sbr.rel (%p1344) target = $region44
      $region43: #{inception_forward.6} parent=39 // pred_region
        %s1347 = smul.u32 16, %s21
      $region44: #{inception_forward.6} parent=39 // pred_fallthru
        _
    $region40: #{inception_forward.6} parent=5 // pred_fallthru
      _
    %p1348 = scmp.le.s32.totalorder 2, %s11
    // Predicated region
    $region45: #{inception_forward.6} parent=5 // pred_check
      %p1349 = pneg %p1348
    $region46: #{inception_forward.6} parent=5 // pred_check_branch
      %1351 = sbr.rel (%p1349) target = $region48
    $region47: #{inception_forward.6} parent=5 // pred_region
      %s1352 = ssub.s32 %s11, 2
      // Predicated region
      $region49: #{inception_forward.6} parent=47 // pred_check
        %p1353 = pneg %p164
      $region50: #{inception_forward.6} parent=47 // pred_check_branch
        %1355 = sbr.rel (%p1353) target = $region52
      $region51: #{inception_forward.6} parent=47 // pred_region
        %s1356 = smul.u32 16, %s23
        %p1357 = scmp.lt.s32.totalorder %s22, 1
        %s1358 = scalar_select %p1357, %s22, 1
        %p1359 = scmp.lt.s32.totalorder %s1356, 31
        %s1360 = scalar_select %p1359, %s1356, 31
        %s1361 = smul.addr %s1358, 32
        %s1362 = sadd.s32 %s1360, %s1361
        %s1363 = smul.addr %s1362, 8
        %s1364 = scalar_lea.vmem %s5, %s1363
      $region52: #{inception_forward.6} parent=47 // pred_fallthru
        _
    $region48: #{inception_forward.6} parent=5 // pred_fallthru
      _
  $region6: #{inception_forward.6} parent=0 // loop_footer
    %s15 = sadd.s32 1, %s11
  $region7: #{inception_forward.6} parent=0 // loop_footer_branch
    %10 = sbr.rel target = $region3
  $region8: #{inception_forward.6} parent=0 // loop_exit
    _

// kernel: inception_forward.7
$region0: #{inception_forward.7}
  #allocation0 [shape = 'u32[]', space=smem, size = 0x4, offset = 0x4, fixed_abs, tag = 'smem constant byte address 0x4 - core index']
  #allocation1 [shape = 'u32[144,128]{1,0:T(1,128)}', space=vmem, size = 0x12000, scoped, tag = 'internal scratch']
  %s0 = inlined_call_operand.vmem [shape: bf16[2,352,4], index: 0, kind: input, shape index: {}]
  %s1 = inlined_call_operand.vmem [shape: bf16[7,4,8], index: 1, kind: input, shape index: {}]
  %s2 = inlined_call_operand.vmem [shape: f32[1,8], index: 2, kind: input, shape index: {}]
  %s3 = inlined_call_operand.vmem [shape: f32[1,8], index: 3, kind: input, shape index: {}]
  %s4 = inlined_call_operand.vmem [shape: f32[1,8], index: 4, kind: input, shape index: {}]
  %s5 = inlined_call_operand.vmem [shape: f32[2,256,8], index: 5, kind: output, shape index: {}]
  %s6 = sld [smem:[#allocation0]]
  $region53: #{inception_forward.7} parent=0
    _
  %s8 = ssub.s32 1, %s6
  %s9 = scalar_select 0, %s8, %s6
  loop: start=0, step=1, limit=6
  $region2: #{inception_forward.7} parent=0 // loop_pre_header
    _
  $region3: #{inception_forward.7} parent=0 // loop_header
    %s11 = sphi 0, %s15
    %p12 = scmp.ge.s32.totalorder %s11, 6
    %s18 = sphi 0, %s30
    %s19 = sphi 0, %s26
    %s20 = sphi 0, %s18
    %s21 = sphi 0, %s19
    %s22 = sphi 0, %s20
    %s23 = sphi 0, %s21
    %s33 = sphi 0, %s35
    %s36 = sphi 0, %s33
    %s37 = sphi 0, %s36
    %s53 = sphi 0, %s37
    %s57 = sphi 0, %s57
    %s59 = sphi 0, %s57
    %s60 = sphi 0, %s59
    %s74 = sphi 0, %s60
    %s78 = sphi 0, %s78
    %s80 = sphi 0, %s78
    %s81 = sphi 0, %s80
    %s95 = sphi 0, %s81
    %s99 = sphi 0, %s99
    %s101 = sphi 0, %s99
    %s102 = sphi 0, %s101
    %s116 = sphi 0, %s102
    %s120 = sphi 0, %s120
    %s122 = sphi 0, %s120
    %s123 = sphi 0, %s122
    %s137 = sphi 0, %s123
    %s145 = sphi 0, %s147
    %s148 = sphi 0, %s145
    %s149 = sphi 0, %s148
    %s165 = sphi 0, %s149
  $region4: #{inception_forward.7} parent=0 // loop_header_branch
    %14 = sbr.rel (%p12) target = $region8
  $region5: #{inception_forward.7} parent=0 // loop_body
    %s16 = ssub.s32 %s11, 1
    %s17 = ssub.s32 %s11, 2
    %s24 = sadd.s32 1, %s19
    %p25 = scmp.ge.s32.totalorder %s24, 2
    %s26 = scalar_select %p25, 0, %s24
    %s27 = sadd.s32 1, %s18
    %s28 = scalar_select %p25, %s27, %s18
    %p29 = scmp.ge.s32.totalorder %s28, 2
    %s30 = scalar_select %p29, 0, %s28
    %s31 = ssub.s32 %s18, %s30
    %p32 = scmp.eq.s32.totalorder %s31, 0
    %s34 = sadd.s32 %s33, 1
    %s35 = scalar_select %p32, %s33, %s34
    %p38 = pneg %p32
    %p39 = scmp.eq.s32.totalorder %s11, 3
    %p40 = por %p38, %p39
    %p41 = scmp.ne.s32.totalorder %s33, %s36
    %p42 = scmp.eq.s32.totalorder %s11, 0
    %p43 = por %p41, %p42
    %p44 = scmp.ne.s32.totalorder %s33, %s36
    %p45 = scmp.eq.s32.totalorder %s16, 3
    %p46 = por %p44, %p45
    %p47 = scmp.ne.s32.totalorder %s36, %s37
    %p48 = scmp.eq.s32.totalorder %s16, 0
    %p49 = por %p47, %p48
    %p50 = scmp.ne.s32.totalorder %s36, %s37
    %p51 = scmp.eq.s32.totalorder %s17, 3
    %p52 = por %p50, %p51
    %p54 = scmp.ne.s32.totalorder %s37, %s53
    %p55 = scmp.eq.s32.totalorder %s17, 0
    %p56 = por %p54, %p55
    %s58 = sadd.s32 %s57, 1
    %p61 = scmp.eq.s32.totalorder %s11, 3
    %p62 = scmp.ne.s32.totalorder %s57, %s59
    %p63 = scmp.eq.s32.totalorder %s11, 0
    %p64 = por %p62, %p63
    %p65 = scmp.ne.s32.totalorder %s57, %s59
    %p66 = scmp.eq.s32.totalorder %s16, 3
    %p67 = por %p65, %p66
    %p68 = scmp.ne.s32.totalorder %s59, %s60
    %p69 = scmp.eq.s32.totalorder %s16, 0
    %p70 = por %p68, %p69
    %p71 = scmp.ne.s32.totalorder %s59, %s60
    %p72 = scmp.eq.s32.totalorder %s17, 3
    %p73 = por %p71, %p72
    %p75 = scmp.ne.s32.totalorder %s60, %s74
    %p76 = scmp.eq.s32.totalorder %s17, 0
    %p77 = por %p75, %p76
    %s79 = sadd.s32 %s78, 1
    %p82 = scmp.eq.s32.totalorder %s11, 3
    %p83 = scmp.ne.s32.totalorder %s78, %s80
    %p84 = scmp.eq.s32.totalorder %s11, 0
    %p85 = por %p83, %p84
    %p86 = scmp.ne.s32.totalorder %s78, %s80
    %p87 = scmp.eq.s32.totalorder %s16, 3
    %p88 = por %p86, %p87
    %p89 = scmp.ne.s32.totalorder %s80, %s81
    %p90 = scmp.eq.s32.totalorder %s16, 0
    %p91 = por %p89, %p90
    %p92 = scmp.ne.s32.totalorder %s80, %s81
    %p93 = scmp.eq.s32.totalorder %s17, 3
    %p94 = por %p92, %p93
    %p96 = scmp.ne.s32.totalorder %s81, %s95
    %p97 = scmp.eq.s32.totalorder %s17, 0
    %p98 = por %p96, %p97
    %s100 = sadd.s32 %s99, 1
    %p103 = scmp.eq.s32.totalorder %s11, 3
    %p104 = scmp.ne.s32.totalorder %s99, %s101
    %p105 = scmp.eq.s32.totalorder %s11, 0
    %p106 = por %p104, %p105
    %p107 = scmp.ne.s32.totalorder %s99, %s101
    %p108 = scmp.eq.s32.totalorder %s16, 3
    %p109 = por %p107, %p108
    %p110 = scmp.ne.s32.totalorder %s101, %s102
    %p111 = scmp.eq.s32.totalorder %s16, 0
    %p112 = por %p110, %p111
    %p113 = scmp.ne.s32.totalorder %s101, %s102
    %p114 = scmp.eq.s32.totalorder %s17, 3
    %p115 = por %p113, %p114
    %p117 = scmp.ne.s32.totalorder %s102, %s116
    %p118 = scmp.eq.s32.totalorder %s17, 0
    %p119 = por %p117, %p118
    %s121 = sadd.s32 %s120, 1
    %p124 = scmp.eq.s32.totalorder %s11, 3
    %p125 = scmp.ne.s32.totalorder %s120, %s122
    %p126 = scmp.eq.s32.totalorder %s11, 0
    %p127 = por %p125, %p126
    %p128 = scmp.ne.s32.totalorder %s120, %s122
    %p129 = scmp.eq.s32.totalorder %s16, 3
    %p130 = por %p128, %p129
    %p131 = scmp.ne.s32.totalorder %s122, %s123
    %p132 = scmp.eq.s32.totalorder %s16, 0
    %p133 = por %p131, %p132
    %p134 = scmp.ne.s32.totalorder %s122, %s123
    %p135 = scmp.eq.s32.totalorder %s17, 3
    %p136 = por %p134, %p135
    %p138 = scmp.ne.s32.totalorder %s123, %s137
    %p139 = scmp.eq.s32.totalorder %s17, 0
    %p140 = por %p138, %p139
    %s141 = ssub.s32 %s18, %s30
    %s142 = ssub.s32 %s19, %s26
    %s143 = sor.u32 %s141, %s142
    %p144 = scmp.eq.s32.totalorder %s143, 0
    %s146 = sadd.s32 %s145, 1
    %s147 = scalar_select %p144, %s145, %s146
    %p150 = pneg %p144
    %p151 = scmp.eq.s32.totalorder %s11, 3
    %p152 = por %p150, %p151
    %p153 = scmp.ne.s32.totalorder %s145, %s148
    %p154 = scmp.eq.s32.totalorder %s11, 0
    %p155 = por %p153, %p154
    %p156 = scmp.ne.s32.totalorder %s145, %s148
    %p157 = scmp.eq.s32.totalorder %s16, 3
    %p158 = por %p156, %p157
    %p159 = scmp.ne.s32.totalorder %s148, %s149
    %p160 = scmp.eq.s32.totalorder %s16, 0
    %p161 = por %p159, %p160
    %p162 = scmp.ne.s32.totalorder %s148, %s149
    %p163 = scmp.eq.s32.totalorder %s17, 3
    %p164 = por %p162, %p163
    %p166 = scmp.ne.s32.totalorder %s149, %s165
    %p167 = scmp.eq.s32.totalorder %s17, 0
    %p168 = por %p166, %p167
    %p169 = scmp.le.s32.totalorder 1, %s11
    %p170 = scmp.lt.s32.totalorder %s11, 5
    %p171 = pnand %p169, %p170
    %p172 = pneg %p171
    // Predicated region
    $region9: #{inception_forward.7} parent=5 // pred_check
      _
    $region10: #{inception_forward.7} parent=5 // pred_check_branch
      %174 = sbr.rel (%p171) target = $region12
    $region11: #{inception_forward.7} parent=5 // pred_region
      %s175 = ssub.s32 %s11, 1
      // Predicated region
      $region13: #{inception_forward.7} parent=11 // pred_check
        %p176 = pneg %p70
      $region14: #{inception_forward.7} parent=11 // pred_check_branch
        %178 = sbr.rel (%p176) target = $region16
      $region15: #{inception_forward.7} parent=11 // pred_region
        _
      $region16: #{inception_forward.7} parent=11 // pred_fallthru
        _
      // Predicated region
      $region17: #{inception_forward.7} parent=11 // pred_check
        %p179 = pneg %p91
      $region18: #{inception_forward.7} parent=11 // pred_check_branch
        %181 = sbr.rel (%p179) target = $region20
      $region19: #{inception_forward.7} parent=11 // pred_region
        _
      $region20: #{inception_forward.7} parent=11 // pred_fallthru
        _
      // Predicated region
      $region21: #{inception_forward.7} parent=11 // pred_check
        %p182 = pneg %p112
      $region22: #{inception_forward.7} parent=11 // pred_check_branch
        %184 = sbr.rel (%p182) target = $region24
      $region23: #{inception_forward.7} parent=11 // pred_region
        _
      $region24: #{inception_forward.7} parent=11 // pred_fallthru
        _
      // Predicated region
      $region25: #{inception_forward.7} parent=11 // pred_check
        %p185 = pneg %p133
      $region26: #{inception_forward.7} parent=11 // pred_check_branch
        %187 = sbr.rel (%p185) target = $region28
      $region27: #{inception_forward.7} parent=11 // pred_region
        _
      $region28: #{inception_forward.7} parent=11 // pred_fallthru
        _
    $region12: #{inception_forward.7} parent=5 // pred_fallthru
      _
    %p188 = scmp.lt.s32.totalorder %s11, 4
    // Predicated region
    $region29: #{inception_forward.7} parent=5 // pred_check
      %p189 = pneg %p188
    $region30: #{inception_forward.7} parent=5 // pred_check_branch
      %191 = sbr.rel (%p189) target = $region32
    $region31: #{inception_forward.7} parent=5 // pred_region
      // Predicated region
      $region33: #{inception_forward.7} parent=31 // pred_check
        %p192 = pneg %p43
      $region34: #{inception_forward.7} parent=31 // pred_check_branch
        %194 = sbr.rel (%p192) target = $region36
      $region35: #{inception_forward.7} parent=31 // pred_region
        %p195 = scmp.lt.s32.totalorder %s18, 1
        %s196 = scalar_select %p195, %s18, 1
        %s197 = smul.addr %s196, 44
        %s198 = smul.addr %s197, 4
        %s199 = scalar_lea.vmem %s0, %s198
      $region36: #{inception_forward.7} parent=31 // pred_fallthru
        _
    $region32: #{inception_forward.7} parent=5 // pred_fallthru
      _
    %p200 = scmp.le.s32.totalorder 1, %s11
    %p201 = scmp.lt.s32.totalorder %s11, 5
    %p202 = pnand %p200, %p201
    %p203 = pneg %p202
    // Predicated region
    $region37: #{inception_forward.7} parent=5 // pred_check
      _
    $region38: #{inception_forward.7} parent=5 // pred_check_branch
      %205 = sbr.rel (%p202) target = $region40
    $region39: #{inception_forward.7} parent=5 // pred_region
      %s206 = ssub.s32 %s11, 1
      %p207 = scmp.lt.s32.totalorder %s20, 1
      %s208 = scalar_select %p207, %s20, 1
      %s209 = smul.addr %s208, 44
      %s210 = smul.addr %s209, 4
      %s211 = scalar_lea.vmem %s0, %s210
      %p212 = pneg %p49
      %p213 = pneg %p46
      %p214 = pneg %p70
      %p215 = pneg %p67
      %p216 = pneg %p91
      %p217 = pneg %p88
      %p218 = pneg %p112
      %p219 = pneg %p109
      %p220 = pneg %p133
      %p221 = pneg %p130
      %p222 = pneg %p161
      %p223 = pneg %p158
      %s224 = smul.u32 16, %s21
      %p225 = scmp.lt.s32.totalorder %s20, 1
      %s226 = scalar_select %p225, %s20, 1
      %p227 = scmp.lt.s32.totalorder %s224, 31
      %s228 = scalar_select %p227, %s224, 31
      %s229 = smul.addr %s226, 32
      %s230 = sadd.s32 %s228, %s229
      %s231 = smul.addr %s230, 8
      %s232 = scalar_lea.vmem %s5, %s231
      %p233 = scmp.lt.s32.totalorder %s20, 1
      %s234 = scalar_select %p233, %s20, 1
      %s235 = smul.addr %s234, 44
      %s236 = smul.addr %s235, 4
      %s237 = scalar_lea.vmem %s0, %s236
      %s238 = smul.u32 16, %s21
      %p239 = scmp.lt.s32.totalorder %s20, 1
      %s240 = scalar_select %p239, %s20, 1
      %p241 = scmp.lt.s32.totalorder %s238, 31
      %s242 = scalar_select %p241, %s238, 31
      %s243 = smul.addr %s240, 32
      %s244 = sadd.s32 %s242, %s243
      %s245 = smul.addr %s244, 8
      %s246 = scalar_lea.vmem %s5, %s245
      %s247 = smul.u32 16, %s21
      %s249 = smul.u32 %s21, 128
      %s250 = sshra.s32 %s249, 3
      %s251 = sand.u32 %s249, 7
      %s252 = smul.addr %s250, 4
      %s253 = scalar_lea.vmem %s237, %s252
      %v254 = vld [vmem:[%s253] sm:$0xf]
      %v255 = vld [vmem:[%s253 + $0x4] sm:$0xf]
      %v256 = vld [vmem:[%s253 + $0x8] sm:$0xf]
      %v257 = vld [vmem:[%s253 + $0xc] sm:$0xf]
      %v258 = vld [vmem:[%s253 + $0x10] sm:$0xf]
      %v259 = vld [vmem:[%s253 + $0x14] sm:$0xf]
      %v260 = vld [vmem:[%s253 + $0x18] sm:$0xf]
      %v261 = vld [vmem:[%s253 + $0x1c] sm:$0xf]
      %v262 = vld [vmem:[%s253 + $0x20] sm:$0xf]
      %v263 = vld [vmem:[%s253 + $0x24] sm:$0xf]
      %v264 = vld [vmem:[%s253 + $0x28] sm:$0xf]
      %v265 = vld [vmem:[%s253 + $0x2c] sm:$0xf]
      %v266 = vld [vmem:[%s253 + $0x30] sm:$0xf]
      %v267 = vld [vmem:[%s253 + $0x34] sm:$0xf]
      %v268 = vld [vmem:[%s253 + $0x38] sm:$0xf]
      %v269 = vld [vmem:[%s253 + $0x3c] sm:$0xf]
      %v270 = vld [vmem:[%s1] sm:$0x3]
      %s271 = sadd.s32 %s249, 16
      %s272 = sshra.s32 %s271, 3
      %s273 = sand.u32 %s271, 7
      %s274 = smul.addr %s272, 4
      %s275 = scalar_lea.vmem %s237, %s274
      %v276 = vld [vmem:[%s275] sm:$0xf]
      %v277 = vld [vmem:[%s275 + $0x4] sm:$0xf]
      %v278 = vld [vmem:[%s275 + $0x8] sm:$0xf]
      %v279 = vld [vmem:[%s275 + $0xc] sm:$0xf]
      %v280 = vld [vmem:[%s275 + $0x10] sm:$0xf]
      %v281 = vld [vmem:[%s275 + $0x14] sm:$0xf]
      %v282 = vld [vmem:[%s275 + $0x18] sm:$0xf]
      %v283 = vld [vmem:[%s275 + $0x1c] sm:$0xf]
      %v284 = vld [vmem:[%s275 + $0x20] sm:$0xf]
      %v285 = vld [vmem:[%s275 + $0x24] sm:$0xf]
      %v286 = vld [vmem:[%s275 + $0x28] sm:$0xf]
      %v287 = vld [vmem:[%s275 + $0x2c] sm:$0xf]
      %v288 = vld [vmem:[%s275 + $0x30] sm:$0xf]
      %v289 = vld [vmem:[%s275 + $0x34] sm:$0xf]
      %v290 = vld [vmem:[%s275 + $0x38] sm:$0xf]
      %v291 = vld [vmem:[%s275 + $0x3c] sm:$0xf]
      %s292 = scalar_lea.vmem %s1, 2
      %v293 = vld [vmem:[%s292] sm:$0x3]
      %v310 = vunpack.c.l.b16 %v276
      %v311 = vunpack.c.l.b16 %v277
      %v312 = vunpack.c.l.b16 %v278
      %v313 = vunpack.c.l.b16 %v279
      %v314 = vunpack.c.l.b16 %v280
      %v315 = vunpack.c.l.b16 %v281
      %v316 = vunpack.c.l.b16 %v282
      %v317 = vunpack.c.l.b16 %v283
      %v318 = vunpack.c.l.b16 %v284
      %v319 = vunpack.c.l.b16 %v285
      %v320 = vunpack.c.l.b16 %v286
      %v321 = vunpack.c.l.b16 %v287
      %v322 = vunpack.c.l.b16 %v288
      %v323 = vunpack.c.l.b16 %v289
      %v324 = vunpack.c.l.b16 %v290
      %v325 = vunpack.c.l.b16 %v291
      %v326 = vpack.c.b16 %v311, %v310
      %v327 = vpack.c.b16 %v313, %v312
      %v328 = vpack.c.b16 %v315, %v314
      %v329 = vpack.c.b16 %v317, %v316
      %v330 = vpack.c.b16 %v319, %v318
      %v331 = vpack.c.b16 %v321, %v320
      %v332 = vpack.c.b16 %v323, %v322
      %v333 = vpack.c.b16 %v325, %v324
      %vm334 = vcmask 31744
      %v336 = vsel %vm334, %v326, 0
      %v339 = vsel %vm334, %v327, 0
      %v342 = vsel %vm334, %v328, 0
      %v345 = vsel %vm334, %v329, 0
      %v348 = vsel %vm334, %v330, 0
      %v351 = vsel %vm334, %v331, 0
      %v354 = vsel %vm334, %v332, 0
      %v357 = vsel %vm334, %v333, 0
      %vm359 = vcmask 1041408
      %v361 = vsel %vm359, %v293, 0
      %363 = vmatprep.subr.bf16.mxu0 0
      %364 = vmatpush1.bf16.msra.mxu0 %v361
      %365 = vmatprep.subr.bf16.mxu0 0
      %366 = vmatpush1.bf16.msra.mxu0 0
      %367 = vmatprep.subr.bf16.mxu0 0
      %368 = vmatpush1.bf16.msra.mxu0 0
      %369 = vmatprep.subr.bf16.mxu0 0
      %370 = vmatpush1.bf16.msra.mxu0 0
      %371 = vmatprep.subr.bf16.mxu0 0
      %372 = vmatpush1.bf16.msra.mxu0 0
      %373 = vmatprep.subr.bf16.mxu0 0
      %374 = vmatpush1.bf16.msra.mxu0 0
      %375 = vmatprep.subr.bf16.mxu0 0
      %376 = vmatpush1.bf16.msra.mxu0 0
      %377 = vmatprep.subr.bf16.mxu0 0
      %378 = vmatpush1.bf16.msra.mxu0 0
      %379 = vmatprep.subr.bf16.mxu0 0
      %380 = vmatpush1.bf16.msra.mxu0 0
      %381 = vmatprep.subr.bf16.mxu0 0
      %382 = vmatpush1.bf16.msra.mxu0 0
      %383 = vmatprep.subr.bf16.mxu0 0
      %384 = vmatpush1.bf16.msra.mxu0 0
      %385 = vmatprep.subr.bf16.mxu0 0
      %386 = vmatpush1.bf16.msra.mxu0 0
      %387 = vmatprep.subr.bf16.mxu0 0
      %388 = vmatpush1.bf16.msra.mxu0 0
      %389 = vmatprep.subr.bf16.mxu0 0
      %390 = vmatpush1.bf16.msra.mxu0 0
      %391 = vmatprep.subr.bf16.mxu0 0
      %392 = vmatpush1.bf16.msra.mxu0 0
      %393 = vmatprep.subr.bf16.mxu0 0
      %394 = vmatpush1.bf16.msra.mxu0 0
      %395 = vmatprep.mubr.bf16.mxu0 0
      %396 = vmatmul.mubr.bf16.gmra.mrb[0].mxu0 %v336
      %v397 = vpop.f32.mrb[0].mxu0
      %v398 = vadd.f32 0.0, %v397
      %v399 = vpop.f32.mrb[0].mxu0
      %v400 = vpop.f32.mrb[0].mxu0
      %v401 = vadd.f32 0.0, %v400
      %v402 = vpop.f32.mrb[0].mxu0
      %403 = vmatprep.mubr.bf16.mxu0 0
      %404 = vmatmul.mubr.bf16.gmra.mrb[0].mxu0 %v339
      %v405 = vpop.f32.mrb[0].mxu0
      %v406 = vadd.f32 0.0, %v405
      %v407 = vpop.f32.mrb[0].mxu0
      %v408 = vpop.f32.mrb[0].mxu0
      %v409 = vadd.f32 0.0, %v408
      %v410 = vpop.f32.mrb[0].mxu0
      %411 = vmatprep.mubr.bf16.mxu0 0
      %412 = vmatmul.mubr.bf16.gmra.mrb[0].mxu0 %v342
      %v413 = vpop.f32.mrb[0].mxu0
      %v414 = vadd.f32 0.0, %v413
      %v415 = vpop.f32.mrb[0].mxu0
      %v416 = vpop.f32.mrb[0].mxu0
      %v417 = vadd.f32 0.0, %v416
      %v418 = vpop.f32.mrb[0].mxu0
      %419 = vmatprep.mubr.bf16.mxu0 0
      %420 = vmatmul.mubr.bf16.gmra.mrb[0].mxu0 %v345
      %v421 = vpop.f32.mrb[0].mxu0
      %v422 = vadd.f32 0.0, %v421
      %v423 = vpop.f32.mrb[0].mxu0
      %v424 = vpop.f32.mrb[0].mxu0
      %v425 = vadd.f32 0.0, %v424
      %v426 = vpop.f32.mrb[0].mxu0
      %427 = vmatprep.mubr.bf16.mxu0 0
      %428 = vmatmul.mubr.bf16.gmra.mrb[0].mxu0 %v348
      %v429 = vpop.f32.mrb[0].mxu0
      %v430 = vadd.f32 0.0, %v429
      %v431 = vpop.f32.mrb[0].mxu0
      %v432 = vpop.f32.mrb[0].mxu0
      %v433 = vadd.f32 0.0, %v432
      %v434 = vpop.f32.mrb[0].mxu0
      %435 = vmatprep.mubr.bf16.mxu0 0
      %436 = vmatmul.mubr.bf16.gmra.mrb[0].mxu0 %v351
      %v437 = vpop.f32.mrb[0].mxu0
      %v438 = vadd.f32 0.0, %v437
      %v439 = vpop.f32.mrb[0].mxu0
      %v440 = vpop.f32.mrb[0].mxu0
      %v441 = vadd.f32 0.0, %v440
      %v442 = vpop.f32.mrb[0].mxu0
      %443 = vmatprep.mubr.bf16.mxu0 0
      %444 = vmatmul.mubr.bf16.gmra.mrb[0].mxu0 %v354
      %v445 = vpop.f32.mrb[0].mxu0
      %v446 = vadd.f32 0.0, %v445
      %v447 = vpop.f32.mrb[0].mxu0
      %v448 = vpop.f32.mrb[0].mxu0
      %v449 = vadd.f32 0.0, %v448
      %v450 = vpop.f32.mrb[0].mxu0
      %451 = vmatprep.mubr.bf16.mxu0 0
      %452 = vmatmul.mubr.bf16.gmra.mrb[0].mxu0 %v357
      %v453 = vpop.f32.mrb[0].mxu0
      %v454 = vadd.f32 0.0, %v453
      %v455 = vpop.f32.mrb[0].mxu0
      %v456 = vpop.f32.mrb[0].mxu0
      %v457 = vadd.f32 0.0, %v456
      %v458 = vpop.f32.mrb[0].mxu0
      %459 = vdwg.mxu0
      %v476 = vunpack.c.l.b16 %v254
      %v477 = vunpack.c.l.b16 %v255
      %v478 = vunpack.c.l.b16 %v256
      %v479 = vunpack.c.l.b16 %v257
      %v480 = vunpack.c.l.b16 %v258
      %v481 = vunpack.c.l.b16 %v259
      %v482 = vunpack.c.l.b16 %v260
      %v483 = vunpack.c.l.b16 %v261
      %v484 = vunpack.c.l.b16 %v262
      %v485 = vunpack.c.l.b16 %v263
      %v486 = vunpack.c.l.b16 %v264
      %v487 = vunpack.c.l.b16 %v265
      %v488 = vunpack.c.l.b16 %v266
      %v489 = vunpack.c.l.b16 %v267
      %v490 = vunpack.c.l.b16 %v268
      %v491 = vunpack.c.l.b16 %v269
      %v492 = vpack.c.b16 %v477, %v476
      %v493 = vpack.c.b16 %v479, %v478
      %v494 = vpack.c.b16 %v481, %v480
      %v495 = vpack.c.b16 %v483, %v482
      %v496 = vpack.c.b16 %v485, %v484
      %v497 = vpack.c.b16 %v487, %v486
      %v498 = vpack.c.b16 %v489, %v488
      %v499 = vpack.c.b16 %v491, %v490
      %v501 = vsel %vm334, %v492, 0
      %v504 = vsel %vm334, %v493, 0
      %v507 = vsel %vm334, %v494, 0
      %v510 = vsel %vm334, %v495, 0
      %v513 = vsel %vm334, %v496, 0
      %v516 = vsel %vm334, %v497, 0
      %v519 = vsel %vm334, %v498, 0
      %v522 = vsel %vm334, %v499, 0
      %v525 = vsel %vm359, %v270, 0
      %527 = vmatprep.subr.bf16.mxu0 0
      %528 = vmatpush1.bf16.msra.mxu0 %v525
      %529 = vmatprep.subr.bf16.mxu0 0
      %530 = vmatpush1.bf16.msra.mxu0 0
      %531 = vmatprep.subr.bf16.mxu0 0
      %532 = vmatpush1.bf16.msra.mxu0 0
      %533 = vmatprep.subr.bf16.mxu0 0
      %534 = vmatpush1.bf16.msra.mxu0 0
      %535 = vmatprep.subr.bf16.mxu0 0
      %536 = vmatpush1.bf16.msra.mxu0 0
      %537 = vmatprep.subr.bf16.mxu0 0
      %538 = vmatpush1.bf16.msra.mxu0 0
      %539 = vmatprep.subr.bf16.mxu0 0
      %540 = vmatpush1.bf16.msra.mxu0 0
      %541 = vmatprep.subr.bf16.mxu0 0
      %542 = vmatpush1.bf16.msra.mxu0 0
      %543 = vmatprep.subr.bf16.mxu0 0
      %544 = vmatpush1.bf16.msra.mxu0 0
      %545 = vmatprep.subr.bf16.mxu0 0
      %546 = vmatpush1.bf16.msra.mxu0 0
      %547 = vmatprep.subr.bf16.mxu0 0
      %548 = vmatpush1.bf16.msra.mxu0 0
      %549 = vmatprep.subr.bf16.mxu0 0
      %550 = vmatpush1.bf16.msra.mxu0 0
      %551 = vmatprep.subr.bf16.mxu0 0
      %552 = vmatpush1.bf16.msra.mxu0 0
      %553 = vmatprep.subr.bf16.mxu0 0
      %554 = vmatpush1.bf16.msra.mxu0 0
      %555 = vmatprep.subr.bf16.mxu0 0
      %556 = vmatpush1.bf16.msra.mxu0 0
      %557 = vmatprep.subr.bf16.mxu0 0
      %558 = vmatpush1.bf16.msra.mxu0 0
      %559 = vmatprep.mubr.bf16.mxu0 0
      %560 = vmatmul.mubr.bf16.gmra.mrb[0].mxu0 %v501
      %v561 = vpop.f32.mrb[0].mxu0
      %v562 = vadd.f32 %v398, %v561
      %v563 = vpop.f32.mrb[0].mxu0
      %v564 = vpop.f32.mrb[0].mxu0
      %v565 = vadd.f32 %v401, %v564
      %v566 = vpop.f32.mrb[0].mxu0
      %567 = vmatprep.mubr.bf16.mxu0 0
      %568 = vmatmul.mubr.bf16.gmra.mrb[0].mxu0 %v504
      %v569 = vpop.f32.mrb[0].mxu0
      %v570 = vadd.f32 %v406, %v569
      %v571 = vpop.f32.mrb[0].mxu0
      %v572 = vpop.f32.mrb[0].mxu0
      %v573 = vadd.f32 %v409, %v572
      %v574 = vpop.f32.mrb[0].mxu0
      %575 = vmatprep.mubr.bf16.mxu0 0
      %576 = vmatmul.mubr.bf16.gmra.mrb[0].mxu0 %v507
      %v577 = vpop.f32.mrb[0].mxu0
      %v578 = vadd.f32 %v414, %v577
      %v579 = vpop.f32.mrb[0].mxu0
      %v580 = vpop.f32.mrb[0].mxu0
      %v581 = vadd.f32 %v417, %v580
      %v582 = vpop.f32.mrb[0].mxu0
      %583 = vmatprep.mubr.bf16.mxu0 0
      %584 = vmatmul.mubr.bf16.gmra.mrb[0].mxu0 %v510
      %v585 = vpop.f32.mrb[0].mxu0
      %v586 = vadd.f32 %v422, %v585
      %v587 = vpop.f32.mrb[0].mxu0
      %v588 = vpop.f32.mrb[0].mxu0
      %v589 = vadd.f32 %v425, %v588
      %v590 = vpop.f32.mrb[0].mxu0
      %591 = vmatprep.mubr.bf16.mxu0 0
      %592 = vmatmul.mubr.bf16.gmra.mrb[0].mxu0 %v513
      %v593 = vpop.f32.mrb[0].mxu0
      %v594 = vadd.f32 %v430, %v593
      %v595 = vpop.f32.mrb[0].mxu0
      %v596 = vpop.f32.mrb[0].mxu0
      %v597 = vadd.f32 %v433, %v596
      %v598 = vpop.f32.mrb[0].mxu0
      %599 = vmatprep.mubr.bf16.mxu0 0
      %600 = vmatmul.mubr.bf16.gmra.mrb[0].mxu0 %v516
      %v601 = vpop.f32.mrb[0].mxu0
      %v602 = vadd.f32 %v438, %v601
      %v603 = vpop.f32.mrb[0].mxu0
      %v604 = vpop.f32.mrb[0].mxu0
      %v605 = vadd.f32 %v441, %v604
      %v606 = vpop.f32.mrb[0].mxu0
      %607 = vmatprep.mubr.bf16.mxu0 0
      %608 = vmatmul.mubr.bf16.gmra.mrb[0].mxu0 %v519
      %v609 = vpop.f32.mrb[0].mxu0
      %v610 = vadd.f32 %v446, %v609
      %v611 = vpop.f32.mrb[0].mxu0
      %v612 = vpop.f32.mrb[0].mxu0
      %v613 = vadd.f32 %v449, %v612
      %v614 = vpop.f32.mrb[0].mxu0
      %615 = vmatprep.mubr.bf16.mxu0 0
      %616 = vmatmul.mubr.bf16.gmra.mrb[0].mxu0 %v522
      %v617 = vpop.f32.mrb[0].mxu0
      %v618 = vadd.f32 %v454, %v617
      %v619 = vpop.f32.mrb[0].mxu0
      %v620 = vpop.f32.mrb[0].mxu0
      %v621 = vadd.f32 %v457, %v620
      %v622 = vpop.f32.mrb[0].mxu0
      %623 = vdwg.mxu0
      %s624 = sadd.s32 %s249, 32
      %s625 = sshra.s32 %s624, 3
      %s626 = sand.u32 %s624, 7
      %s627 = smul.addr %s625, 4
      %s628 = scalar_lea.vmem %s237, %s627
      %v629 = vld [vmem:[%s628] sm:$0xf]
      %v630 = vld [vmem:[%s628 + $0x4] sm:$0xf]
      %v631 = vld [vmem:[%s628 + $0x8] sm:$0xf]
      %v632 = vld [vmem:[%s628 + $0xc] sm:$0xf]
      %v633 = vld [vmem:[%s628 + $0x10] sm:$0xf]
      %v634 = vld [vmem:[%s628 + $0x14] sm:$0xf]
      %v635 = vld [vmem:[%s628 + $0x18] sm:$0xf]
      %v636 = vld [vmem:[%s628 + $0x1c] sm:$0xf]
      %v637 = vld [vmem:[%s628 + $0x20] sm:$0xf]
      %v638 = vld [vmem:[%s628 + $0x24] sm:$0xf]
      %v639 = vld [vmem:[%s628 + $0x28] sm:$0xf]
      %v640 = vld [vmem:[%s628 + $0x2c] sm:$0xf]
      %v641 = vld [vmem:[%s628 + $0x30] sm:$0xf]
      %v642 = vld [vmem:[%s628 + $0x34] sm:$0xf]
      %v643 = vld [vmem:[%s628 + $0x38] sm:$0xf]
      %v644 = vld [vmem:[%s628 + $0x3c] sm:$0xf]
      %s645 = scalar_lea.vmem %s1, 4
      %v646 = vld [vmem:[%s645] sm:$0x3]
      %v663 = vunpack.c.l.b16 %v629
      %v664 = vunpack.c.l.b16 %v630
      %v665 = vunpack.c.l.b16 %v631
      %v666 = vunpack.c.l.b16 %v632
      %v667 = vunpack.c.l.b16 %v633
      %v668 = vunpack.c.l.b16 %v634
      %v669 = vunpack.c.l.b16 %v635
      %v670 = vunpack.c.l.b16 %v636
      %v671 = vunpack.c.l.b16 %v637
      %v672 = vunpack.c.l.b16 %v638
      %v673 = vunpack.c.l.b16 %v639
      %v674 = vunpack.c.l.b16 %v640
      %v675 = vunpack.c.l.b16 %v641
      %v676 = vunpack.c.l.b16 %v642
      %v677 = vunpack.c.l.b16 %v643
      %v678 = vunpack.c.l.b16 %v644
      %v679 = vpack.c.b16 %v664, %v663
      %v680 = vpack.c.b16 %v666, %v665
      %v681 = vpack.c.b16 %v668, %v667
      %v682 = vpack.c.b16 %v670, %v669
      %v683 = vpack.c.b16 %v672, %v671
      %v684 = vpack.c.b16 %v674, %v673
      %v685 = vpack.c.b16 %v676, %v675
      %v686 = vpack.c.b16 %v678, %v677
      %v688 = vsel %vm334, %v679, 0
      %v691 = vsel %vm334, %v680, 0
      %v694 = vsel %vm334, %v681, 0
      %v697 = vsel %vm334, %v682, 0
      %v700 = vsel %vm334, %v683, 0
      %v703 = vsel %vm334, %v684, 0
      %v706 = vsel %vm334, %v685, 0
      %v709 = vsel %vm334, %v686, 0
      %v712 = vsel %vm359, %v646, 0
      %714 = vmatprep.subr.bf16.mxu0 0
      %715 = vmatpush1.bf16.msra.mxu0 %v712
      %716 = vmatprep.subr.bf16.mxu0 0
      %717 = vmatpush1.bf16.msra.mxu0 0
      %718 = vmatprep.subr.bf16.mxu0 0
      %719 = vmatpush1.bf16.msra.mxu0 0
      %720 = vmatprep.subr.bf16.mxu0 0
      %721 = vmatpush1.bf16.msra.mxu0 0
      %722 = vmatprep.subr.bf16.mxu0 0
      %723 = vmatpush1.bf16.msra.mxu0 0
      %724 = vmatprep.subr.bf16.mxu0 0
      %725 = vmatpush1.bf16.msra.mxu0 0
      %726 = vmatprep.subr.bf16.mxu0 0
      %727 = vmatpush1.bf16.msra.mxu0 0
      %728 = vmatprep.subr.bf16.mxu0 0
      %729 = vmatpush1.bf16.msra.mxu0 0
      %730 = vmatprep.subr.bf16.mxu0 0
      %731 = vmatpush1.bf16.msra.mxu0 0
      %732 = vmatprep.subr.bf16.mxu0 0
      %733 = vmatpush1.bf16.msra.mxu0 0
      %734 = vmatprep.subr.bf16.mxu0 0
      %735 = vmatpush1.bf16.msra.mxu0 0
      %736 = vmatprep.subr.bf16.mxu0 0
      %737 = vmatpush1.bf16.msra.mxu0 0
      %738 = vmatprep.subr.bf16.mxu0 0
      %739 = vmatpush1.bf16.msra.mxu0 0
      %740 = vmatprep.subr.bf16.mxu0 0
      %741 = vmatpush1.bf16.msra.mxu0 0
      %742 = vmatprep.subr.bf16.mxu0 0
      %743 = vmatpush1.bf16.msra.mxu0 0
      %744 = vmatprep.subr.bf16.mxu0 0
      %745 = vmatpush1.bf16.msra.mxu0 0
      %746 = vmatprep.mubr.bf16.mxu0 0
      %747 = vmatmul.mubr.bf16.gmra.mrb[0].mxu0 %v688
      %v748 = vpop.f32.mrb[0].mxu0
      %v749 = vadd.f32 0.0, %v748
      %v750 = vpop.f32.mrb[0].mxu0
      %v751 = vpop.f32.mrb[0].mxu0
      %v752 = vadd.f32 0.0, %v751
      %v753 = vpop.f32.mrb[0].mxu0
      %754 = vmatprep.mubr.bf16.mxu0 0
      %755 = vmatmul.mubr.bf16.gmra.mrb[0].mxu0 %v691
      %v756 = vpop.f32.mrb[0].mxu0
      %v757 = vadd.f32 0.0, %v756
      %v758 = vpop.f32.mrb[0].mxu0
      %v759 = vpop.f32.mrb[0].mxu0
      %v760 = vadd.f32 0.0, %v759
      %v761 = vpop.f32.mrb[0].mxu0
      %762 = vmatprep.mubr.bf16.mxu0 0
      %763 = vmatmul.mubr.bf16.gmra.mrb[0].mxu0 %v694
      %v764 = vpop.f32.mrb[0].mxu0
      %v765 = vadd.f32 0.0, %v764
      %v766 = vpop.f32.mrb[0].mxu0
      %v767 = vpop.f32.mrb[0].mxu0
      %v768 = vadd.f32 0.0, %v767
      %v769 = vpop.f32.mrb[0].mxu0
      %770 = vmatprep.mubr.bf16.mxu0 0
      %771 = vmatmul.mubr.bf16.gmra.mrb[0].mxu0 %v697
      %v772 = vpop.f32.mrb[0].mxu0
      %v773 = vadd.f32 0.0, %v772
      %v774 = vpop.f32.mrb[0].mxu0
      %v775 = vpop.f32.mrb[0].mxu0
      %v776 = vadd.f32 0.0, %v775
      %v777 = vpop.f32.mrb[0].mxu0
      %778 = vmatprep.mubr.bf16.mxu0 0
      %779 = vmatmul.mubr.bf16.gmra.mrb[0].mxu0 %v700
      %v780 = vpop.f32.mrb[0].mxu0
      %v781 = vadd.f32 0.0, %v780
      %v782 = vpop.f32.mrb[0].mxu0
      %v783 = vpop.f32.mrb[0].mxu0
      %v784 = vadd.f32 0.0, %v783
      %v785 = vpop.f32.mrb[0].mxu0
      %786 = vmatprep.mubr.bf16.mxu0 0
      %787 = vmatmul.mubr.bf16.gmra.mrb[0].mxu0 %v703
      %v788 = vpop.f32.mrb[0].mxu0
      %v789 = vadd.f32 0.0, %v788
      %v790 = vpop.f32.mrb[0].mxu0
      %v791 = vpop.f32.mrb[0].mxu0
      %v792 = vadd.f32 0.0, %v791
      %v793 = vpop.f32.mrb[0].mxu0
      %794 = vmatprep.mubr.bf16.mxu0 0
      %795 = vmatmul.mubr.bf16.gmra.mrb[0].mxu0 %v706
      %v796 = vpop.f32.mrb[0].mxu0
      %v797 = vadd.f32 0.0, %v796
      %v798 = vpop.f32.mrb[0].mxu0
      %v799 = vpop.f32.mrb[0].mxu0
      %v800 = vadd.f32 0.0, %v799
      %v801 = vpop.f32.mrb[0].mxu0
      %802 = vmatprep.mubr.bf16.mxu0 0
      %803 = vmatmul.mubr.bf16.gmra.mrb[0].mxu0 %v709
      %v804 = vpop.f32.mrb[0].mxu0
      %v805 = vadd.f32 0.0, %v804
      %v806 = vpop.f32.mrb[0].mxu0
      %v807 = vpop.f32.mrb[0].mxu0
      %v808 = vadd.f32 0.0, %v807
      %v809 = vpop.f32.mrb[0].mxu0
      %810 = vdwg.mxu0
      %v811 = vadd.f32 %v562, %v749
      %v812 = vadd.f32 %v565, %v752
      %v813 = vadd.f32 %v570, %v757
      %v814 = vadd.f32 %v573, %v760
      %v815 = vadd.f32 %v578, %v765
      %v816 = vadd.f32 %v581, %v768
      %v817 = vadd.f32 %v586, %v773
      %v818 = vadd.f32 %v589, %v776
      %v819 = vadd.f32 %v594, %v781
      %v820 = vadd.f32 %v597, %v784
      %v821 = vadd.f32 %v602, %v789
      %v822 = vadd.f32 %v605, %v792
      %v823 = vadd.f32 %v610, %v797
      %v824 = vadd.f32 %v613, %v800
      %v825 = vadd.f32 %v618, %v805
      %v826 = vadd.f32 %v621, %v808
      %s827 = sadd.s32 %s249, 48
      %s828 = sshra.s32 %s827, 3
      %s829 = sand.u32 %s827, 7
      %s830 = smul.addr %s828, 4
      %s831 = scalar_lea.vmem %s237, %s830
      %v832 = vld [vmem:[%s831] sm:$0xf]
      %v833 = vld [vmem:[%s831 + $0x4] sm:$0xf]
      %v834 = vld [vmem:[%s831 + $0x8] sm:$0xf]
      %v835 = vld [vmem:[%s831 + $0xc] sm:$0xf]
      %v836 = vld [vmem:[%s831 + $0x10] sm:$0xf]
      %v837 = vld [vmem:[%s831 + $0x14] sm:$0xf]
      %v838 = vld [vmem:[%s831 + $0x18] sm:$0xf]
      %v839 = vld [vmem:[%s831 + $0x1c] sm:$0xf]
      %v840 = vld [vmem:[%s831 + $0x20] sm:$0xf]
      %v841 = vld [vmem:[%s831 + $0x24] sm:$0xf]
      %v842 = vld [vmem:[%s831 + $0x28] sm:$0xf]
      %v843 = vld [vmem:[%s831 + $0x2c] sm:$0xf]
      %v844 = vld [vmem:[%s831 + $0x30] sm:$0xf]
      %v845 = vld [vmem:[%s831 + $0x34] sm:$0xf]
      %v846 = vld [vmem:[%s831 + $0x38] sm:$0xf]
      %v847 = vld [vmem:[%s831 + $0x3c] sm:$0xf]
      %s848 = scalar_lea.vmem %s1, 6
      %v849 = vld [vmem:[%s848] sm:$0x3]
      %v866 = vunpack.c.l.b16 %v832
      %v867 = vunpack.c.l.b16 %v833
      %v868 = vunpack.c.l.b16 %v834
      %v869 = vunpack.c.l.b16 %v835
      %v870 = vunpack.c.l.b16 %v836
      %v871 = vunpack.c.l.b16 %v837
      %v872 = vunpack.c.l.b16 %v838
      %v873 = vunpack.c.l.b16 %v839
      %v874 = vunpack.c.l.b16 %v840
      %v875 = vunpack.c.l.b16 %v841
      %v876 = vunpack.c.l.b16 %v842
      %v877 = vunpack.c.l.b16 %v843
      %v878 = vunpack.c.l.b16 %v844
      %v879 = vunpack.c.l.b16 %v845
      %v880 = vunpack.c.l.b16 %v846
      %v881 = vunpack.c.l.b16 %v847
      %v882 = vpack.c.b16 %v867, %v866
      %v883 = vpack.c.b16 %v869, %v868
      %v884 = vpack.c.b16 %v871, %v870
      %v885 = vpack.c.b16 %v873, %v872
      %v886 = vpack.c.b16 %v875, %v874
      %v887 = vpack.c.b16 %v877, %v876
      %v888 = vpack.c.b16 %v879, %v878
      %v889 = vpack.c.b16 %v881, %v880
      %v891 = vsel %vm334, %v882, 0
      %v894 = vsel %vm334, %v883, 0
      %v897 = vsel %vm334, %v884, 0
      %v900 = vsel %vm334, %v885, 0
      %v903 = vsel %vm334, %v886, 0
      %v906 = vsel %vm334, %v887, 0
      %v909 = vsel %vm334, %v888, 0
      %v912 = vsel %vm334, %v889, 0
      %v915 = vsel %vm359, %v849, 0
      %917 = vmatprep.subr.bf16.mxu0 0
      %918 = vmatpush1.bf16.msra.mxu0 %v915
      %919 = vmatprep.subr.bf16.mxu0 0
      %920 = vmatpush1.bf16.msra.mxu0 0
      %921 = vmatprep.subr.bf16.mxu0 0
      %922 = vmatpush1.bf16.msra.mxu0 0
      %923 = vmatprep.subr.bf16.mxu0 0
      %924 = vmatpush1.bf16.msra.mxu0 0
      %925 = vmatprep.subr.bf16.mxu0 0
      %926 = vmatpush1.bf16.msra.mxu0 0
      %927 = vmatprep.subr.bf16.mxu0 0
      %928 = vmatpush1.bf16.msra.mxu0 0
      %929 = vmatprep.subr.bf16.mxu0 0
      %930 = vmatpush1.bf16.msra.mxu0 0
      %931 = vmatprep.subr.bf16.mxu0 0
      %932 = vmatpush1.bf16.msra.mxu0 0
      %933 = vmatprep.subr.bf16.mxu0 0
      %934 = vmatpush1.bf16.msra.mxu0 0
      %935 = vmatprep.subr.bf16.mxu0 0
      %936 = vmatpush1.bf16.msra.mxu0 0
      %937 = vmatprep.subr.bf16.mxu0 0
      %938 = vmatpush1.bf16.msra.mxu0 0
      %939 = vmatprep.subr.bf16.mxu0 0
      %940 = vmatpush1.bf16.msra.mxu0 0
      %941 = vmatprep.subr.bf16.mxu0 0
      %942 = vmatpush1.bf16.msra.mxu0 0
      %943 = vmatprep.subr.bf16.mxu0 0
      %944 = vmatpush1.bf16.msra.mxu0 0
      %945 = vmatprep.subr.bf16.mxu0 0
      %946 = vmatpush1.bf16.msra.mxu0 0
      %947 = vmatprep.subr.bf16.mxu0 0
      %948 = vmatpush1.bf16.msra.mxu0 0
      %949 = vmatprep.mubr.bf16.mxu0 0
      %950 = vmatmul.mubr.bf16.gmra.mrb[0].mxu0 %v891
      %v951 = vpop.f32.mrb[0].mxu0
      %v952 = vadd.f32 0.0, %v951
      %v953 = vpop.f32.mrb[0].mxu0
      %v954 = vpop.f32.mrb[0].mxu0
      %v955 = vadd.f32 0.0, %v954
      %v956 = vpop.f32.mrb[0].mxu0
      %957 = vmatprep.mubr.bf16.mxu0 0
      %958 = vmatmul.mubr.bf16.gmra.mrb[0].mxu0 %v894
      %v959 = vpop.f32.mrb[0].mxu0
      %v960 = vadd.f32 0.0, %v959
      %v961 = vpop.f32.mrb[0].mxu0
      %v962 = vpop.f32.mrb[0].mxu0
      %v963 = vadd.f32 0.0, %v962
      %v964 = vpop.f32.mrb[0].mxu0
      %965 = vmatprep.mubr.bf16.mxu0 0
      %966 = vmatmul.mubr.bf16.gmra.mrb[0].mxu0 %v897
      %v967 = vpop.f32.mrb[0].mxu0
      %v968 = vadd.f32 0.0, %v967
      %v969 = vpop.f32.mrb[0].mxu0
      %v970 = vpop.f32.mrb[0].mxu0
      %v971 = vadd.f32 0.0, %v970
      %v972 = vpop.f32.mrb[0].mxu0
      %973 = vmatprep.mubr.bf16.mxu0 0
      %974 = vmatmul.mubr.bf16.gmra.mrb[0].mxu0 %v900
      %v975 = vpop.f32.mrb[0].mxu0
      %v976 = vadd.f32 0.0, %v975
      %v977 = vpop.f32.mrb[0].mxu0
      %v978 = vpop.f32.mrb[0].mxu0
      %v979 = vadd.f32 0.0, %v978
      %v980 = vpop.f32.mrb[0].mxu0
      %981 = vmatprep.mubr.bf16.mxu0 0
      %982 = vmatmul.mubr.bf16.gmra.mrb[0].mxu0 %v903
      %v983 = vpop.f32.mrb[0].mxu0
      %v984 = vadd.f32 0.0, %v983
      %v985 = vpop.f32.mrb[0].mxu0
      %v986 = vpop.f32.mrb[0].mxu0
      %v987 = vadd.f32 0.0, %v986
      %v988 = vpop.f32.mrb[0].mxu0
      %989 = vmatprep.mubr.bf16.mxu0 0
      %990 = vmatmul.mubr.bf16.gmra.mrb[0].mxu0 %v906
      %v991 = vpop.f32.mrb[0].mxu0
      %v992 = vadd.f32 0.0, %v991
      %v993 = vpop.f32.mrb[0].mxu0
      %v994 = vpop.f32.mrb[0].mxu0
      %v995 = vadd.f32 0.0, %v994
      %v996 = vpop.f32.mrb[0].mxu0
      %997 = vmatprep.mubr.bf16.mxu0 0
      %998 = vmatmul.mubr.bf16.gmra.mrb[0].mxu0 %v909
      %v999 = vpop.f32.mrb[0].mxu0
      %v1000 = vadd.f32 0.0, %v999
      %v1001 = vpop.f32.mrb[0].mxu0
      %v1002 = vpop.f32.mrb[0].mxu0
      %v1003 = vadd.f32 0.0, %v1002
      %v1004 = vpop.f32.mrb[0].mxu0
      %1005 = vmatprep.mubr.bf16.mxu0 0
      %1006 = vmatmul.mubr.bf16.gmra.mrb[0].mxu0 %v912
      %v1007 = vpop.f32.mrb[0].mxu0
      %v1008 = vadd.f32 0.0, %v1007
      %v1009 = vpop.f32.mrb[0].mxu0
      %v1010 = vpop.f32.mrb[0].mxu0
      %v1011 = vadd.f32 0.0, %v1010
      %v1012 = vpop.f32.mrb[0].mxu0
      %1013 = vdwg.mxu0
      %v1014 = vadd.f32 %v811, %v952
      %v1015 = vadd.f32 %v812, %v955
      %v1016 = vadd.f32 %v813, %v960
      %v1017 = vadd.f32 %v814, %v963
      %v1018 = vadd.f32 %v815, %v968
      %v1019 = vadd.f32 %v816, %v971
      %v1020 = vadd.f32 %v817, %v976
      %v1021 = vadd.f32 %v818, %v979
      %v1022 = vadd.f32 %v819, %v984
      %v1023 = vadd.f32 %v820, %v987
      %v1024 = vadd.f32 %v821, %v992
      %v1025 = vadd.f32 %v822, %v995
      %v1026 = vadd.f32 %v823, %v1000
      %v1027 = vadd.f32 %v824, %v1003
      %v1028 = vadd.f32 %v825, %v1008
      %v1029 = vadd.f32 %v826, %v1011
      %s1030 = sadd.s32 %s249, 64
      %s1031 = sshra.s32 %s1030, 3
      %s1032 = sand.u32 %s1030, 7
      %s1033 = smul.addr %s1031, 4
      %s1034 = scalar_lea.vmem %s237, %s1033
      %v1035 = vld [vmem:[%s1034] sm:$0xf]
      %v1036 = vld [vmem:[%s1034 + $0x4] sm:$0xf]
      %v1037 = vld [vmem:[%s1034 + $0x8] sm:$0xf]
      %v1038 = vld [vmem:[%s1034 + $0xc] sm:$0xf]
      %v1039 = vld [vmem:[%s1034 + $0x10] sm:$0xf]
      %v1040 = vld [vmem:[%s1034 + $0x14] sm:$0xf]
      %v1041 = vld [vmem:[%s1034 + $0x18] sm:$0xf]
      %v1042 = vld [vmem:[%s1034 + $0x1c] sm:$0xf]
      %v1043 = vld [vmem:[%s1034 + $0x20] sm:$0xf]
      %v1044 = vld [vmem:[%s1034 + $0x24] sm:$0xf]
      %v1045 = vld [vmem:[%s1034 + $0x28] sm:$0xf]
      %v1046 = vld [vmem:[%s1034 + $0x2c] sm:$0xf]
      %v1047 = vld [vmem:[%s1034 + $0x30] sm:$0xf]
      %v1048 = vld [vmem:[%s1034 + $0x34] sm:$0xf]
      %v1049 = vld [vmem:[%s1034 + $0x38] sm:$0xf]
      %v1050 = vld [vmem:[%s1034 + $0x3c] sm:$0xf]
      %s1051 = scalar_lea.vmem %s1, 8
      %v1052 = vld [vmem:[%s1051] sm:$0x3]
      %v1069 = vunpack.c.l.b16 %v1035
      %v1070 = vunpack.c.l.b16 %v1036
      %v1071 = vunpack.c.l.b16 %v1037
      %v1072 = vunpack.c.l.b16 %v1038
      %v1073 = vunpack.c.l.b16 %v1039
      %v1074 = vunpack.c.l.b16 %v1040
      %v1075 = vunpack.c.l.b16 %v1041
      %v1076 = vunpack.c.l.b16 %v1042
      %v1077 = vunpack.c.l.b16 %v1043
      %v1078 = vunpack.c.l.b16 %v1044
      %v1079 = vunpack.c.l.b16 %v1045
      %v1080 = vunpack.c.l.b16 %v1046
      %v1081 = vunpack.c.l.b16 %v1047
      %v1082 = vunpack.c.l.b16 %v1048
      %v1083 = vunpack.c.l.b16 %v1049
      %v1084 = vunpack.c.l.b16 %v1050
      %v1085 = vpack.c.b16 %v1070, %v1069
      %v1086 = vpack.c.b16 %v1072, %v1071
      %v1087 = vpack.c.b16 %v1074, %v1073
      %v1088 = vpack.c.b16 %v1076, %v1075
      %v1089 = vpack.c.b16 %v1078, %v1077
      %v1090 = vpack.c.b16 %v1080, %v1079
      %v1091 = vpack.c.b16 %v1082, %v1081
      %v1092 = vpack.c.b16 %v1084, %v1083
      %v1094 = vsel %vm334, %v1085, 0
      %v1097 = vsel %vm334, %v1086, 0
      %v1100 = vsel %vm334, %v1087, 0
      %v1103 = vsel %vm334, %v1088, 0
      %v1106 = vsel %vm334, %v1089, 0
      %v1109 = vsel %vm334, %v1090, 0
      %v1112 = vsel %vm334, %v1091, 0
      %v1115 = vsel %vm334, %v1092, 0
      %v1118 = vsel %vm359, %v1052, 0
      %1120 = vmatprep.subr.bf16.mxu0 0
      %1121 = vmatpush1.bf16.msra.mxu0 %v1118
      %1122 = vmatprep.subr.bf16.mxu0 0
      %1123 = vmatpush1.bf16.msra.mxu0 0
      %1124 = vmatprep.subr.bf16.mxu0 0
      %1125 = vmatpush1.bf16.msra.mxu0 0
      %1126 = vmatprep.subr.bf16.mxu0 0
      %1127 = vmatpush1.bf16.msra.mxu0 0
      %1128 = vmatprep.subr.bf16.mxu0 0
      %1129 = vmatpush1.bf16.msra.mxu0 0
      %1130 = vmatprep.subr.bf16.mxu0 0
      %1131 = vmatpush1.bf16.msra.mxu0 0
      %1132 = vmatprep.subr.bf16.mxu0 0
      %1133 = vmatpush1.bf16.msra.mxu0 0
      %1134 = vmatprep.subr.bf16.mxu0 0
      %1135 = vmatpush1.bf16.msra.mxu0 0
      %1136 = vmatprep.subr.bf16.mxu0 0
      %1137 = vmatpush1.bf16.msra.mxu0 0
      %1138 = vmatprep.subr.bf16.mxu0 0
      %1139 = vmatpush1.bf16.msra.mxu0 0
      %1140 = vmatprep.subr.bf16.mxu0 0
      %1141 = vmatpush1.bf16.msra.mxu0 0
      %1142 = vmatprep.subr.bf16.mxu0 0
      %1143 = vmatpush1.bf16.msra.mxu0 0
      %1144 = vmatprep.subr.bf16.mxu0 0
      %1145 = vmatpush1.bf16.msra.mxu0 0
      %1146 = vmatprep.subr.bf16.mxu0 0
      %1147 = vmatpush1.bf16.msra.mxu0 0
      %1148 = vmatprep.subr.bf16.mxu0 0
      %1149 = vmatpush1.bf16.msra.mxu0 0
      %1150 = vmatprep.subr.bf16.mxu0 0
      %1151 = vmatpush1.bf16.msra.mxu0 0
      %1152 = vmatprep.mubr.bf16.mxu0 0
      %1153 = vmatmul.mubr.bf16.gmra.mrb[0].mxu0 %v1094
      %v1154 = vpop.f32.mrb[0].mxu0
      %v1155 = vadd.f32 0.0, %v1154
      %v1156 = vpop.f32.mrb[0].mxu0
      %v1157 = vpop.f32.mrb[0].mxu0
      %v1158 = vadd.f32 0.0, %v1157
      %v1159 = vpop.f32.mrb[0].mxu0
      %1160 = vmatprep.mubr.bf16.mxu0 0
      %1161 = vmatmul.mubr.bf16.gmra.mrb[0].mxu0 %v1097
      %v1162 = vpop.f32.mrb[0].mxu0
      %v1163 = vadd.f32 0.0, %v1162
      %v1164 = vpop.f32.mrb[0].mxu0
      %v1165 = vpop.f32.mrb[0].mxu0
      %v1166 = vadd.f32 0.0, %v1165
      %v1167 = vpop.f32.mrb[0].mxu0
      %1168 = vmatprep.mubr.bf16.mxu0 0
      %1169 = vmatmul.mubr.bf16.gmra.mrb[0].mxu0 %v1100
      %v1170 = vpop.f32.mrb[0].mxu0
      %v1171 = vadd.f32 0.0, %v1170
      %v1172 = vpop.f32.mrb[0].mxu0
      %v1173 = vpop.f32.mrb[0].mxu0
      %v1174 = vadd.f32 0.0, %v1173
      %v1175 = vpop.f32.mrb[0].mxu0
      %1176 = vmatprep.mubr.bf16.mxu0 0
      %1177 = vmatmul.mubr.bf16.gmra.mrb[0].mxu0 %v1103
      %v1178 = vpop.f32.mrb[0].mxu0
      %v1179 = vadd.f32 0.0, %v1178
      %v1180 = vpop.f32.mrb[0].mxu0
      %v1181 = vpop.f32.mrb[0].mxu0
      %v1182 = vadd.f32 0.0, %v1181
      %v1183 = vpop.f32.mrb[0].mxu0
      %1184 = vmatprep.mubr.bf16.mxu0 0
      %1185 = vmatmul.mubr.bf16.gmra.mrb[0].mxu0 %v1106
      %v1186 = vpop.f32.mrb[0].mxu0
      %v1187 = vadd.f32 0.0, %v1186
      %v1188 = vpop.f32.mrb[0].mxu0
      %v1189 = vpop.f32.mrb[0].mxu0
      %v1190 = vadd.f32 0.0, %v1189
      %v1191 = vpop.f32.mrb[0].mxu0
      %1192 = vmatprep.mubr.bf16.mxu0 0
      %1193 = vmatmul.mubr.bf16.gmra.mrb[0].mxu0 %v1109
      %v1194 = vpop.f32.mrb[0].mxu0
      %v1195 = vadd.f32 0.0, %v1194
      %v1196 = vpop.f32.mrb[0].mxu0
      %v1197 = vpop.f32.mrb[0].mxu0
      %v1198 = vadd.f32 0.0, %v1197
      %v1199 = vpop.f32.mrb[0].mxu0
      %1200 = vmatprep.mubr.bf16.mxu0 0
      %1201 = vmatmul.mubr.bf16.gmra.mrb[0].mxu0 %v1112
      %v1202 = vpop.f32.mrb[0].mxu0
      %v1203 = vadd.f32 0.0, %v1202
      %v1204 = vpop.f32.mrb[0].mxu0
      %v1205 = vpop.f32.mrb[0].mxu0
      %v1206 = vadd.f32 0.0, %v1205
      %v1207 = vpop.f32.mrb[0].mxu0
      %1208 = vmatprep.mubr.bf16.mxu0 0
      %1209 = vmatmul.mubr.bf16.gmra.mrb[0].mxu0 %v1115
      %v1210 = vpop.f32.mrb[0].mxu0
      %v1211 = vadd.f32 0.0, %v1210
      %v1212 = vpop.f32.mrb[0].mxu0
      %v1213 = vpop.f32.mrb[0].mxu0
      %v1214 = vadd.f32 0.0, %v1213
      %v1215 = vpop.f32.mrb[0].mxu0
      %1216 = vdwg.mxu0
      %v1217 = vadd.f32 %v1014, %v1155
      %v1218 = vadd.f32 %v1015, %v1158
      %v1219 = vadd.f32 %v1016, %v1163
      %v1220 = vadd.f32 %v1017, %v1166
      %v1221 = vadd.f32 %v1018, %v1171
      %v1222 = vadd.f32 %v1019, %v1174
      %v1223 = vadd.f32 %v1020, %v1179
      %v1224 = vadd.f32 %v1021, %v1182
      %v1225 = vadd.f32 %v1022, %v1187
      %v1226 = vadd.f32 %v1023, %v1190
      %v1227 = vadd.f32 %v1024, %v1195
      %v1228 = vadd.f32 %v1025, %v1198
      %v1229 = vadd.f32 %v1026, %v1203
      %v1230 = vadd.f32 %v1027, %v1206
      %v1231 = vadd.f32 %v1028, %v1211
      %v1232 = vadd.f32 %v1029, %v1214
      %s1233 = sadd.s32 %s249, 80
      %s1234 = sshra.s32 %s1233, 3
      %s1235 = sand.u32 %s1233, 7
      %s1236 = smul.addr %s1234, 4
      %s1237 = scalar_lea.vmem %s237, %s1236
      %v1238 = vld [vmem:[%s1237] sm:$0xf]
      %v1239 = vld [vmem:[%s1237 + $0x4] sm:$0xf]
      %v1240 = vld [vmem:[%s1237 + $0x8] sm:$0xf]
      %v1241 = vld [vmem:[%s1237 + $0xc] sm:$0xf]
      %v1242 = vld [vmem:[%s1237 + $0x10] sm:$0xf]
      %v1243 = vld [vmem:[%s1237 + $0x14] sm:$0xf]
      %v1244 = vld [vmem:[%s1237 + $0x18] sm:$0xf]
      %v1245 = vld [vmem:[%s1237 + $0x1c] sm:$0xf]
      %v1246 = vld [vmem:[%s1237 + $0x20] sm:$0xf]
      %v1247 = vld [vmem:[%s1237 + $0x24] sm:$0xf]
      %v1248 = vld [vmem:[%s1237 + $0x28] sm:$0xf]
      %v1249 = vld [vmem:[%s1237 + $0x2c] sm:$0xf]
      %v1250 = vld [vmem:[%s1237 + $0x30] sm:$0xf]
      %v1251 = vld [vmem:[%s1237 + $0x34] sm:$0xf]
      %v1252 = vld [vmem:[%s1237 + $0x38] sm:$0xf]
      %v1253 = vld [vmem:[%s1237 + $0x3c] sm:$0xf]
      %s1254 = scalar_lea.vmem %s1, 10
      %v1255 = vld [vmem:[%s1254] sm:$0x3]
      %v1272 = vunpack.c.l.b16 %v1238
      %v1273 = vunpack.c.l.b16 %v1239
      %v1274 = vunpack.c.l.b16 %v1240
      %v1275 = vunpack.c.l.b16 %v1241
      %v1276 = vunpack.c.l.b16 %v1242
      %v1277 = vunpack.c.l.b16 %v1243
      %v1278 = vunpack.c.l.b16 %v1244
      %v1279 = vunpack.c.l.b16 %v1245
      %v1280 = vunpack.c.l.b16 %v1246
      %v1281 = vunpack.c.l.b16 %v1247
      %v1282 = vunpack.c.l.b16 %v1248
      %v1283 = vunpack.c.l.b16 %v1249
      %v1284 = vunpack.c.l.b16 %v1250
      %v1285 = vunpack.c.l.b16 %v1251
      %v1286 = vunpack.c.l.b16 %v1252
      %v1287 = vunpack.c.l.b16 %v1253
      %v1288 = vpack.c.b16 %v1273, %v1272
      %v1289 = vpack.c.b16 %v1275, %v1274
      %v1290 = vpack.c.b16 %v1277, %v1276
      %v1291 = vpack.c.b16 %v1279, %v1278
      %v1292 = vpack.c.b16 %v1281, %v1280
      %v1293 = vpack.c.b16 %v1283, %v1282
      %v1294 = vpack.c.b16 %v1285, %v1284
      %v1295 = vpack.c.b16 %v1287, %v1286
      %v1297 = vsel %vm334, %v1288, 0
      %v1300 = vsel %vm334, %v1289, 0
      %v1303 = vsel %vm334, %v1290, 0
      %v1306 = vsel %vm334, %v1291, 0
      %v1309 = vsel %vm334, %v1292, 0
      %v1312 = vsel %vm334, %v1293, 0
      %v1315 = vsel %vm334, %v1294, 0
      %v1318 = vsel %vm334, %v1295, 0
      %v1321 = vsel %vm359, %v1255, 0
      %1323 = vmatprep.subr.bf16.mxu0 0
      %1324 = vmatpush1.bf16.msra.mxu0 %v1321
      %1325 = vmatprep.subr.bf16.mxu0 0
      %1326 = vmatpush1.bf16.msra.mxu0 0
      %1327 = vmatprep.subr.bf16.mxu0 0
      %1328 = vmatpush1.bf16.msra.mxu0 0
      %1329 = vmatprep.subr.bf16.mxu0 0
      %1330 = vmatpush1.bf16.msra.mxu0 0
      %1331 = vmatprep.subr.bf16.mxu0 0
      %1332 = vmatpush1.bf16.msra.mxu0 0
      %1333 = vmatprep.subr.bf16.mxu0 0
      %1334 = vmatpush1.bf16.msra.mxu0 0
      %1335 = vmatprep.subr.bf16.mxu0 0
      %1336 = vmatpush1.bf16.msra.mxu0 0
      %1337 = vmatprep.subr.bf16.mxu0 0
      %1338 = vmatpush1.bf16.msra.mxu0 0
      %1339 = vmatprep.subr.bf16.mxu0 0
      %1340 = vmatpush1.bf16.msra.mxu0 0
      %1341 = vmatprep.subr.bf16.mxu0 0
      %1342 = vmatpush1.bf16.msra.mxu0 0
      %1343 = vmatprep.subr.bf16.mxu0 0
      %1344 = vmatpush1.bf16.msra.mxu0 0
      %1345 = vmatprep.subr.bf16.mxu0 0
      %1346 = vmatpush1.bf16.msra.mxu0 0
      %1347 = vmatprep.subr.bf16.mxu0 0
      %1348 = vmatpush1.bf16.msra.mxu0 0
      %1349 = vmatprep.subr.bf16.mxu0 0
      %1350 = vmatpush1.bf16.msra.mxu0 0
      %1351 = vmatprep.subr.bf16.mxu0 0
      %1352 = vmatpush1.bf16.msra.mxu0 0
      %1353 = vmatprep.subr.bf16.mxu0 0
      %1354 = vmatpush1.bf16.msra.mxu0 0
      %1355 = vmatprep.mubr.bf16.mxu0 0
      %1356 = vmatmul.mubr.bf16.gmra.mrb[0].mxu0 %v1297
      %v1357 = vpop.f32.mrb[0].mxu0
      %v1358 = vadd.f32 0.0, %v1357
      %v1359 = vpop.f32.mrb[0].mxu0
      %v1360 = vpop.f32.mrb[0].mxu0
      %v1361 = vadd.f32 0.0, %v1360
      %v1362 = vpop.f32.mrb[0].mxu0
      %1363 = vmatprep.mubr.bf16.mxu0 0
      %1364 = vmatmul.mubr.bf16.gmra.mrb[0].mxu0 %v1300
      %v1365 = vpop.f32.mrb[0].mxu0
      %v1366 = vadd.f32 0.0, %v1365
      %v1367 = vpop.f32.mrb[0].mxu0
      %v1368 = vpop.f32.mrb[0].mxu0
      %v1369 = vadd.f32 0.0, %v1368
      %v1370 = vpop.f32.mrb[0].mxu0
      %1371 = vmatprep.mubr.bf16.mxu0 0
      %1372 = vmatmul.mubr.bf16.gmra.mrb[0].mxu0 %v1303
      %v1373 = vpop.f32.mrb[0].mxu0
      %v1374 = vadd.f32 0.0, %v1373
      %v1375 = vpop.f32.mrb[0].mxu0
      %v1376 = vpop.f32.mrb[0].mxu0
      %v1377 = vadd.f32 0.0, %v1376
      %v1378 = vpop.f32.mrb[0].mxu0
      %1379 = vmatprep.mubr.bf16.mxu0 0
      %1380 = vmatmul.mubr.bf16.gmra.mrb[0].mxu0 %v1306
      %v1381 = vpop.f32.mrb[0].mxu0
      %v1382 = vadd.f32 0.0, %v1381
      %v1383 = vpop.f32.mrb[0].mxu0
      %v1384 = vpop.f32.mrb[0].mxu0
      %v1385 = vadd.f32 0.0, %v1384
      %v1386 = vpop.f32.mrb[0].mxu0
      %1387 = vmatprep.mubr.bf16.mxu0 0
      %1388 = vmatmul.mubr.bf16.gmra.mrb[0].mxu0 %v1309
      %v1389 = vpop.f32.mrb[0].mxu0
      %v1390 = vadd.f32 0.0, %v1389
      %v1391 = vpop.f32.mrb[0].mxu0
      %v1392 = vpop.f32.mrb[0].mxu0
      %v1393 = vadd.f32 0.0, %v1392
      %v1394 = vpop.f32.mrb[0].mxu0
      %1395 = vmatprep.mubr.bf16.mxu0 0
      %1396 = vmatmul.mubr.bf16.gmra.mrb[0].mxu0 %v1312
      %v1397 = vpop.f32.mrb[0].mxu0
      %v1398 = vadd.f32 0.0, %v1397
      %v1399 = vpop.f32.mrb[0].mxu0
      %v1400 = vpop.f32.mrb[0].mxu0
      %v1401 = vadd.f32 0.0, %v1400
      %v1402 = vpop.f32.mrb[0].mxu0
      %1403 = vmatprep.mubr.bf16.mxu0 0
      %1404 = vmatmul.mubr.bf16.gmra.mrb[0].mxu0 %v1315
      %v1405 = vpop.f32.mrb[0].mxu0
      %v1406 = vadd.f32 0.0, %v1405
      %v1407 = vpop.f32.mrb[0].mxu0
      %v1408 = vpop.f32.mrb[0].mxu0
      %v1409 = vadd.f32 0.0, %v1408
      %v1410 = vpop.f32.mrb[0].mxu0
      %1411 = vmatprep.mubr.bf16.mxu0 0
      %1412 = vmatmul.mubr.bf16.gmra.mrb[0].mxu0 %v1318
      %v1413 = vpop.f32.mrb[0].mxu0
      %v1414 = vadd.f32 0.0, %v1413
      %v1415 = vpop.f32.mrb[0].mxu0
      %v1416 = vpop.f32.mrb[0].mxu0
      %v1417 = vadd.f32 0.0, %v1416
      %v1418 = vpop.f32.mrb[0].mxu0
      %1419 = vdwg.mxu0
      %v1420 = vadd.f32 %v1217, %v1358
      %v1421 = vadd.f32 %v1218, %v1361
      %v1422 = vadd.f32 %v1219, %v1366
      %v1423 = vadd.f32 %v1220, %v1369
      %v1424 = vadd.f32 %v1221, %v1374
      %v1425 = vadd.f32 %v1222, %v1377
      %v1426 = vadd.f32 %v1223, %v1382
      %v1427 = vadd.f32 %v1224, %v1385
      %v1428 = vadd.f32 %v1225, %v1390
      %v1429 = vadd.f32 %v1226, %v1393
      %v1430 = vadd.f32 %v1227, %v1398
      %v1431 = vadd.f32 %v1228, %v1401
      %v1432 = vadd.f32 %v1229, %v1406
      %v1433 = vadd.f32 %v1230, %v1409
      %v1434 = vadd.f32 %v1231, %v1414
      %v1435 = vadd.f32 %v1232, %v1417
      %s1436 = sadd.s32 %s249, 96
      %s1437 = sshra.s32 %s1436, 3
      %s1438 = sand.u32 %s1436, 7
      %s1439 = smul.addr %s1437, 4
      %s1440 = scalar_lea.vmem %s237, %s1439
      %v1441 = vld [vmem:[%s1440] sm:$0xf]
      %v1442 = vld [vmem:[%s1440 + $0x4] sm:$0xf]
      %v1443 = vld [vmem:[%s1440 + $0x8] sm:$0xf]
      %v1444 = vld [vmem:[%s1440 + $0xc] sm:$0xf]
      %v1445 = vld [vmem:[%s1440 + $0x10] sm:$0xf]
      %v1446 = vld [vmem:[%s1440 + $0x14] sm:$0xf]
      %v1447 = vld [vmem:[%s1440 + $0x18] sm:$0xf]
      %v1448 = vld [vmem:[%s1440 + $0x1c] sm:$0xf]
      %v1449 = vld [vmem:[%s1440 + $0x20] sm:$0xf]
      %v1450 = vld [vmem:[%s1440 + $0x24] sm:$0xf]
      %v1451 = vld [vmem:[%s1440 + $0x28] sm:$0xf]
      %v1452 = vld [vmem:[%s1440 + $0x2c] sm:$0xf]
      %v1453 = vld [vmem:[%s1440 + $0x30] sm:$0xf]
      %v1454 = vld [vmem:[%s1440 + $0x34] sm:$0xf]
      %v1455 = vld [vmem:[%s1440 + $0x38] sm:$0xf]
      %v1456 = vld [vmem:[%s1440 + $0x3c] sm:$0xf]
      %s1457 = scalar_lea.vmem %s1, 12
      %v1458 = vld [vmem:[%s1457] sm:$0x3]
      %v1475 = vunpack.c.l.b16 %v1441
      %v1476 = vunpack.c.l.b16 %v1442
      %v1477 = vunpack.c.l.b16 %v1443
      %v1478 = vunpack.c.l.b16 %v1444
      %v1479 = vunpack.c.l.b16 %v1445
      %v1480 = vunpack.c.l.b16 %v1446
      %v1481 = vunpack.c.l.b16 %v1447
      %v1482 = vunpack.c.l.b16 %v1448
      %v1483 = vunpack.c.l.b16 %v1449
      %v1484 = vunpack.c.l.b16 %v1450
      %v1485 = vunpack.c.l.b16 %v1451
      %v1486 = vunpack.c.l.b16 %v1452
      %v1487 = vunpack.c.l.b16 %v1453
      %v1488 = vunpack.c.l.b16 %v1454
      %v1489 = vunpack.c.l.b16 %v1455
      %v1490 = vunpack.c.l.b16 %v1456
      %v1491 = vpack.c.b16 %v1476, %v1475
      %v1492 = vpack.c.b16 %v1478, %v1477
      %v1493 = vpack.c.b16 %v1480, %v1479
      %v1494 = vpack.c.b16 %v1482, %v1481
      %v1495 = vpack.c.b16 %v1484, %v1483
      %v1496 = vpack.c.b16 %v1486, %v1485
      %v1497 = vpack.c.b16 %v1488, %v1487
      %v1498 = vpack.c.b16 %v1490, %v1489
      %v1500 = vsel %vm334, %v1491, 0
      %v1503 = vsel %vm334, %v1492, 0
      %v1506 = vsel %vm334, %v1493, 0
      %v1509 = vsel %vm334, %v1494, 0
      %v1512 = vsel %vm334, %v1495, 0
      %v1515 = vsel %vm334, %v1496, 0
      %v1518 = vsel %vm334, %v1497, 0
      %v1521 = vsel %vm334, %v1498, 0
      %v1524 = vsel %vm359, %v1458, 0
      %1526 = vmatprep.subr.bf16.mxu0 0
      %1527 = vmatpush1.bf16.msra.mxu0 %v1524
      %1528 = vmatprep.subr.bf16.mxu0 0
      %1529 = vmatpush1.bf16.msra.mxu0 0
      %1530 = vmatprep.subr.bf16.mxu0 0
      %1531 = vmatpush1.bf16.msra.mxu0 0
      %1532 = vmatprep.subr.bf16.mxu0 0
      %1533 = vmatpush1.bf16.msra.mxu0 0
      %1534 = vmatprep.subr.bf16.mxu0 0
      %1535 = vmatpush1.bf16.msra.mxu0 0
      %1536 = vmatprep.subr.bf16.mxu0 0
      %1537 = vmatpush1.bf16.msra.mxu0 0
      %1538 = vmatprep.subr.bf16.mxu0 0
      %1539 = vmatpush1.bf16.msra.mxu0 0
      %1540 = vmatprep.subr.bf16.mxu0 0
      %1541 = vmatpush1.bf16.msra.mxu0 0
      %1542 = vmatprep.subr.bf16.mxu0 0
      %1543 = vmatpush1.bf16.msra.mxu0 0
      %1544 = vmatprep.subr.bf16.mxu0 0
      %1545 = vmatpush1.bf16.msra.mxu0 0
      %1546 = vmatprep.subr.bf16.mxu0 0
      %1547 = vmatpush1.bf16.msra.mxu0 0
      %1548 = vmatprep.subr.bf16.mxu0 0
      %1549 = vmatpush1.bf16.msra.mxu0 0
      %1550 = vmatprep.subr.bf16.mxu0 0
      %1551 = vmatpush1.bf16.msra.mxu0 0
      %1552 = vmatprep.subr.bf16.mxu0 0
      %1553 = vmatpush1.bf16.msra.mxu0 0
      %1554 = vmatprep.subr.bf16.mxu0 0
      %1555 = vmatpush1.bf16.msra.mxu0 0
      %1556 = vmatprep.subr.bf16.mxu0 0
      %1557 = vmatpush1.bf16.msra.mxu0 0
      %1558 = vmatprep.mubr.bf16.mxu0 0
      %1559 = vmatmul.mubr.bf16.gmra.mrb[0].mxu0 %v1500
      %v1560 = vpop.f32.mrb[0].mxu0
      %v1561 = vadd.f32 0.0, %v1560
      %v1562 = vpop.f32.mrb[0].mxu0
      %v1563 = vpop.f32.mrb[0].mxu0
      %v1564 = vadd.f32 0.0, %v1563
      %v1565 = vpop.f32.mrb[0].mxu0
      %1566 = vmatprep.mubr.bf16.mxu0 0
      %1567 = vmatmul.mubr.bf16.gmra.mrb[0].mxu0 %v1503
      %v1568 = vpop.f32.mrb[0].mxu0
      %v1569 = vadd.f32 0.0, %v1568
      %v1570 = vpop.f32.mrb[0].mxu0
      %v1571 = vpop.f32.mrb[0].mxu0
      %v1572 = vadd.f32 0.0, %v1571
      %v1573 = vpop.f32.mrb[0].mxu0
      %1574 = vmatprep.mubr.bf16.mxu0 0
      %1575 = vmatmul.mubr.bf16.gmra.mrb[0].mxu0 %v1506
      %v1576 = vpop.f32.mrb[0].mxu0
      %v1577 = vadd.f32 0.0, %v1576
      %v1578 = vpop.f32.mrb[0].mxu0
      %v1579 = vpop.f32.mrb[0].mxu0
      %v1580 = vadd.f32 0.0, %v1579
      %v1581 = vpop.f32.mrb[0].mxu0
      %1582 = vmatprep.mubr.bf16.mxu0 0
      %1583 = vmatmul.mubr.bf16.gmra.mrb[0].mxu0 %v1509
      %v1584 = vpop.f32.mrb[0].mxu0
      %v1585 = vadd.f32 0.0, %v1584
      %v1586 = vpop.f32.mrb[0].mxu0
      %v1587 = vpop.f32.mrb[0].mxu0
      %v1588 = vadd.f32 0.0, %v1587
      %v1589 = vpop.f32.mrb[0].mxu0
      %1590 = vmatprep.mubr.bf16.mxu0 0
      %1591 = vmatmul.mubr.bf16.gmra.mrb[0].mxu0 %v1512
      %v1592 = vpop.f32.mrb[0].mxu0
      %v1593 = vadd.f32 0.0, %v1592
      %v1594 = vpop.f32.mrb[0].mxu0
      %v1595 = vpop.f32.mrb[0].mxu0
      %v1596 = vadd.f32 0.0, %v1595
      %v1597 = vpop.f32.mrb[0].mxu0
      %1598 = vmatprep.mubr.bf16.mxu0 0
      %1599 = vmatmul.mubr.bf16.gmra.mrb[0].mxu0 %v1515
      %v1600 = vpop.f32.mrb[0].mxu0
      %v1601 = vadd.f32 0.0, %v1600
      %v1602 = vpop.f32.mrb[0].mxu0
      %v1603 = vpop.f32.mrb[0].mxu0
      %v1604 = vadd.f32 0.0, %v1603
      %v1605 = vpop.f32.mrb[0].mxu0
      %1606 = vmatprep.mubr.bf16.mxu0 0
      %1607 = vmatmul.mubr.bf16.gmra.mrb[0].mxu0 %v1518
      %v1608 = vpop.f32.mrb[0].mxu0
      %v1609 = vadd.f32 0.0, %v1608
      %v1610 = vpop.f32.mrb[0].mxu0
      %v1611 = vpop.f32.mrb[0].mxu0
      %v1612 = vadd.f32 0.0, %v1611
      %v1613 = vpop.f32.mrb[0].mxu0
      %1614 = vmatprep.mubr.bf16.mxu0 0
      %1615 = vmatmul.mubr.bf16.gmra.mrb[0].mxu0 %v1521
      %v1616 = vpop.f32.mrb[0].mxu0
      %v1617 = vadd.f32 0.0, %v1616
      %v1618 = vpop.f32.mrb[0].mxu0
      %v1619 = vpop.f32.mrb[0].mxu0
      %v1620 = vadd.f32 0.0, %v1619
      %v1621 = vpop.f32.mrb[0].mxu0
      %1622 = vdwg.mxu0
      %v1623 = vadd.f32 %v1420, %v1561
      %v1624 = vadd.f32 %v1421, %v1564
      %v1625 = vadd.f32 %v1422, %v1569
      %v1626 = vadd.f32 %v1423, %v1572
      %v1627 = vadd.f32 %v1424, %v1577
      %v1628 = vadd.f32 %v1425, %v1580
      %v1629 = vadd.f32 %v1426, %v1585
      %v1630 = vadd.f32 %v1427, %v1588
      %v1631 = vadd.f32 %v1428, %v1593
      %v1632 = vadd.f32 %v1429, %v1596
      %v1633 = vadd.f32 %v1430, %v1601
      %v1634 = vadd.f32 %v1431, %v1604
      %v1635 = vadd.f32 %v1432, %v1609
      %v1636 = vadd.f32 %v1433, %v1612
      %v1637 = vadd.f32 %v1434, %v1617
      %v1638 = vadd.f32 %v1435, %v1620
      %v1639 = vld [vmem:[%s2] sm:$0x1]
      %v1641 = vlaneseq
      %v1642 = vshrl.u32 %v1641, 7
      %v1643 = vsub.s32 0, %v1642
      %v1644 = vrot.slane %v1639, %v1643
      %v1646 = vadd.f32 %v1623, %v1644
      %v1647 = vadd.f32 %v1624, %v1644
      %v1648 = vadd.f32 %v1625, %v1644
      %v1649 = vadd.f32 %v1626, %v1644
      %v1650 = vadd.f32 %v1627, %v1644
      %v1651 = vadd.f32 %v1628, %v1644
      %v1652 = vadd.f32 %v1629, %v1644
      %v1653 = vadd.f32 %v1630, %v1644
      %v1654 = vadd.f32 %v1631, %v1644
      %v1655 = vadd.f32 %v1632, %v1644
      %v1656 = vadd.f32 %v1633, %v1644
      %v1657 = vadd.f32 %v1634, %v1644
      %v1658 = vadd.f32 %v1635, %v1644
      %v1659 = vadd.f32 %v1636, %v1644
      %v1660 = vadd.f32 %v1637, %v1644
      %v1661 = vadd.f32 %v1638, %v1644
      %v1662 = vmax.f32 %v1646, 0.0
      %v1663 = vmax.f32 %v1647, 0.0
      %v1664 = vmax.f32 %v1648, 0.0
      %v1665 = vmax.f32 %v1649, 0.0
      %v1666 = vmax.f32 %v1650, 0.0
      %v1667 = vmax.f32 %v1651, 0.0
      %v1668 = vmax.f32 %v1652, 0.0
      %v1669 = vmax.f32 %v1653, 0.0
      %v1670 = vmax.f32 %v1654, 0.0
      %v1671 = vmax.f32 %v1655, 0.0
      %v1672 = vmax.f32 %v1656, 0.0
      %v1673 = vmax.f32 %v1657, 0.0
      %v1674 = vmax.f32 %v1658, 0.0
      %v1675 = vmax.f32 %v1659, 0.0
      %v1676 = vmax.f32 %v1660, 0.0
      %v1677 = vmax.f32 %v1661, 0.0
      %v1678 = vld [vmem:[%s3] sm:$0x1]
      %v1680 = vlaneseq
      %v1681 = vshrl.u32 %v1680, 7
      %v1682 = vsub.s32 0, %v1681
      %v1683 = vrot.slane %v1678, %v1682
      %v1685 = vmul.f32 %v1662, %v1683
      %v1686 = vmul.f32 %v1663, %v1683
      %v1687 = vmul.f32 %v1664, %v1683
      %v1688 = vmul.f32 %v1665, %v1683
      %v1689 = vmul.f32 %v1666, %v1683
      %v1690 = vmul.f32 %v1667, %v1683
      %v1691 = vmul.f32 %v1668, %v1683
      %v1692 = vmul.f32 %v1669, %v1683
      %v1693 = vmul.f32 %v1670, %v1683
      %v1694 = vmul.f32 %v1671, %v1683
      %v1695 = vmul.f32 %v1672, %v1683
      %v1696 = vmul.f32 %v1673, %v1683
      %v1697 = vmul.f32 %v1674, %v1683
      %v1698 = vmul.f32 %v1675, %v1683
      %v1699 = vmul.f32 %v1676, %v1683
      %v1700 = vmul.f32 %v1677, %v1683
      %v1701 = vld [vmem:[%s4] sm:$0x1]
      %v1703 = vlaneseq
      %v1704 = vshrl.u32 %v1703, 7
      %v1705 = vsub.s32 0, %v1704
      %v1706 = vrot.slane %v1701, %v1705
      %v1708 = vadd.f32 %v1685, %v1706
      %v1709 = vadd.f32 %v1686, %v1706
      %v1710 = vadd.f32 %v1687, %v1706
      %v1711 = vadd.f32 %v1688, %v1706
      %v1712 = vadd.f32 %v1689, %v1706
      %v1713 = vadd.f32 %v1690, %v1706
      %v1714 = vadd.f32 %v1691, %v1706
      %v1715 = vadd.f32 %v1692, %v1706
      %v1716 = vadd.f32 %v1693, %v1706
      %v1717 = vadd.f32 %v1694, %v1706
      %v1718 = vadd.f32 %v1695, %v1706
      %v1719 = vadd.f32 %v1696, %v1706
      %v1720 = vadd.f32 %v1697, %v1706
      %v1721 = vadd.f32 %v1698, %v1706
      %v1722 = vadd.f32 %v1699, %v1706
      %v1723 = vadd.f32 %v1700, %v1706
      %vm1724 = vcmask 64512
      %1725 = vst.msk [vmem:[%s246] sm:$0xff] %vm1724, %v1708
      %1726 = vst.msk [vmem:[%s246 + $0x8] sm:$0xff] %vm1724, %v1709
      %1727 = vst.msk [vmem:[%s246 + $0x10] sm:$0xff] %vm1724, %v1710
      %1728 = vst.msk [vmem:[%s246 + $0x18] sm:$0xff] %vm1724, %v1711
      %1729 = vst.msk [vmem:[%s246 + $0x20] sm:$0xff] %vm1724, %v1712
      %1730 = vst.msk [vmem:[%s246 + $0x28] sm:$0xff] %vm1724, %v1713
      %1731 = vst.msk [vmem:[%s246 + $0x30] sm:$0xff] %vm1724, %v1714
      %1732 = vst.msk [vmem:[%s246 + $0x38] sm:$0xff] %vm1724, %v1715
      %1733 = vst.msk [vmem:[%s246 + $0x40] sm:$0xff] %vm1724, %v1716
      %1734 = vst.msk [vmem:[%s246 + $0x48] sm:$0xff] %vm1724, %v1717
      %1735 = vst.msk [vmem:[%s246 + $0x50] sm:$0xff] %vm1724, %v1718
      %1736 = vst.msk [vmem:[%s246 + $0x58] sm:$0xff] %vm1724, %v1719
      %1737 = vst.msk [vmem:[%s246 + $0x60] sm:$0xff] %vm1724, %v1720
      %1738 = vst.msk [vmem:[%s246 + $0x68] sm:$0xff] %vm1724, %v1721
      %1739 = vst.msk [vmem:[%s246 + $0x70] sm:$0xff] %vm1724, %v1722
      %1740 = vst.msk [vmem:[%s246 + $0x78] sm:$0xff] %vm1724, %v1723
      %s1741 = smul.u32 16, %s21
      %p1742 = scmp.lt.s32.totalorder %s20, 1
      %s1743 = scalar_select %p1742, %s20, 1
      %p1744 = scmp.lt.s32.totalorder %s1741, 31
      %s1745 = scalar_select %p1744, %s1741, 31
      %s1746 = smul.addr %s1743, 32
      %s1747 = sadd.s32 %s1745, %s1746
      %s1748 = smul.addr %s1747, 8
      %s1749 = scalar_lea.vmem %s5, %s1748
      // Predicated region
      $region41: #{inception_forward.7} parent=39 // pred_check
        %p1750 = pneg %p158
      $region42: #{inception_forward.7} parent=39 // pred_check_branch
        %1752 = sbr.rel (%p1750) target = $region44
      $region43: #{inception_forward.7} parent=39 // pred_region
        %s1753 = smul.u32 16, %s21
      $region44: #{inception_forward.7} parent=39 // pred_fallthru
        _
    $region40: #{inception_forward.7} parent=5 // pred_fallthru
      _
    %p1754 = scmp.le.s32.totalorder 2, %s11
    // Predicated region
    $region45: #{inception_forward.7} parent=5 // pred_check
      %p1755 = pneg %p1754
    $region46: #{inception_forward.7} parent=5 // pred_check_branch
      %1757 = sbr.rel (%p1755) target = $region48
    $region47: #{inception_forward.7} parent=5 // pred_region
      %s1758 = ssub.s32 %s11, 2
      // Predicated region
      $region49: #{inception_forward.7} parent=47 // pred_check
        %p1759 = pneg %p164
      $region50: #{inception_forward.7} parent=47 // pred_check_branch
        %1761 = sbr.rel (%p1759) target = $region52
      $region51: #{inception_forward.7} parent=47 // pred_region
        %s1762 = smul.u32 16, %s23
        %p1763 = scmp.lt.s32.totalorder %s22, 1
        %s1764 = scalar_select %p1763, %s22, 1
        %p1765 = scmp.lt.s32.totalorder %s1762, 31
        %s1766 = scalar_select %p1765, %s1762, 31
        %s1767 = smul.addr %s1764, 32
        %s1768 = sadd.s32 %s1766, %s1767
        %s1769 = smul.addr %s1768, 8
        %s1770 = scalar_lea.vmem %s5, %s1769
      $region52: #{inception_forward.7} parent=47 // pred_fallthru
        _
    $region48: #{inception_forward.7} parent=5 // pred_fallthru
      _
  $region6: #{inception_forward.7} parent=0 // loop_footer
    %s15 = sadd.s32 1, %s11
  $region7: #{inception_forward.7} parent=0 // loop_footer_branch
    %10 = sbr.rel target = $region3
  $region8: #{inception_forward.7} parent=0 // loop_exit
    _

</llo_original>
